<compile_context>
chip_gen: v5e
topology: v5e:2x2
jax: 0.10.0
libtpu: 0.0.40
codegen_flags: <defaults>
</compile_context>

<pallas_src>
import numpy as np
import jax
import jax.numpy as jnp
from jax.experimental import pallas as pl
from jax.experimental.pallas import tpu as pltpu

# ---------------- static configuration ----------------
B = 2            # batch
C = 8            # in_channels (= FourierBlock hidden_size)
COND = 4         # cond_channels
H = W = 16       # spatial size
HW = H * W
NB = 2           # num_blocks
C2 = C // 2      # channels per half (xx / xy chunks)
BLK = C2 // NB   # block size of the block-diagonal spectral weights
M1 = 5           # n_mode_1  (< H//2+1 -> zero-padded branch, as in the torch code)
M2 = 5           # n_mode_2  (< W//2+1)
EXPAND = 2
HID = int(C * EXPAND)
LAM = 0.01       # Softshrink lambda (sparsity_threshold)

HP = jax.lax.Precision.HIGHEST

# dynamic-slab row offsets (all multiples of 8)
_D_XX, _D_XY, _D_RES = 0, 32, 96
_D_SAXX, _D_SBXX, _D_SAXY, _D_SBXY, _D_END = 128, 160, 192, 232, 272
# static-slab-A row offsets
_A_WINVXX, _A_WFWDXY, _A_WFWDXX, _A_WINVXY, _A_CONV2, _A_B2, _A_END = 0, 40, 80, 144, 208, 464, 465


# ---------------- real DFT helper matrices (built once in numpy, float64) ----------------
def _rdft_mats(N, modes):
    """x (.., N) real -> Xr = x @ Fr, Xi = x @ Fi  == rfft(x, norm='ortho')[..., :modes]."""
    n = np.arange(N)[:, None].astype(np.float64)
    k = np.arange(modes)[None, :].astype(np.float64)
    ang = 2.0 * np.pi * n * k / N
    return np.cos(ang) / np.sqrt(N), -np.sin(ang) / np.sqrt(N)


def _irdft_mats(N, modes):
    """irfft(X, n=N, norm='ortho') with X zero beyond `modes`:  x = Xr @ Gr + Xi @ Gi."""
    k = np.arange(modes)[:, None].astype(np.float64)
    n = np.arange(N)[None, :].astype(np.float64)
    ang = 2.0 * np.pi * k * n / N
    c = np.where((k == 0) | (k == N // 2), 1.0, 2.0)
    Gr = c * np.cos(ang) / np.sqrt(N)
    Gi = -c * np.sin(ang) / np.sqrt(N)   # k=0 row is zero -> imag of DC dropped, like irfft
    return Gr, Gi


def _softshrink(v):
    return jnp.where(v > LAM, v - LAM, jnp.where(v < -LAM, v + LAM, 0.0))


# ---------------- fused kernel: FourierBlock + ChannelProcessBlock + residual ----------------
def fused_kernel(dyn_ref, statA_ref, statB_ref, out_ref):
    # dynamic slab (per-call data), all row slices 8-aligned, lane slices start at 0
    xin_xx = dyn_ref[_D_XX:_D_XX + 32, 0:C2 * W]       # (32, 64)  rows (b,h), lanes (c,w)
    xin_xy = dyn_ref[_D_XY:_D_XY + 64, 0:B * W]        # (64, 32)  rows (c,h), lanes (b,w)
    res = dyn_ref[_D_RES:_D_RES + 32, :]               # (32, 128) rows (b,h), lanes (c,w)
    sa_xx = dyn_ref[_D_SAXX:_D_SBXX, 0:4 * M2 * 2]     # (32, 40)
    sb_xx = dyn_ref[_D_SBXX:_D_SAXY, 0:4 * M2 * 2]     # (32, 40)
    sa_xy = dyn_ref[_D_SAXY:_D_SBXY, 0:B * W]          # (40, 32)
    sb_xy = dyn_ref[_D_SBXY:_D_END, 0:B * W]           # (40, 32)

    # static slabs (composed DFT+mix matrices, composed 1x1-conv matrices, biases)
    winv_xx = statA_ref[_A_WINVXX:_A_WFWDXY, 0:C2 * W]   # (40, 64)
    wfwdL_xy = statA_ref[_A_WFWDXY:_A_WFWDXX, 0:C2 * H]  # (40, 64)
    wfwd_xx = statA_ref[_A_WFWDXX:_A_WINVXY, 0:40]       # (64, 40)
    winvL_xy = statA_ref[_A_WINVXY:_A_CONV2, 0:40]       # (64, 40)
    conv2c = statA_ref[_A_CONV2:_A_B2, :]                # (256, 128)
    b2 = statA_ref[_A_B2:_A_END, :]                      # (1, 128)
    conv1c = statB_ref[0:C * W, :]                       # (128, 256)
    b1 = statB_ref[C * W:C * W + 1, :]                   # (1, 256)

    # ---- xx half (rfft along W): rows (b,h); columns [re(c,k) | im(c,k)] ----
    t_xx = jnp.dot(xin_xx, wfwd_xx, preferred_element_type=jnp.float32, precision=HP)   # (32, 40)
    t_xx_sw = jnp.concatenate([t_xx[:, 20:40], t_xx[:, 0:20]], axis=1)                  # re<->im swap
    s_xx = _softshrink(t_xx * sa_xx + t_xx_sw * sb_xx)                                  # emb scale + shrink
    y_xx = jnp.dot(s_xx, winv_xx, preferred_element_type=jnp.float32, precision=HP)     # (32, 64) (b,h)x(c,w)

    # ---- xy half (rfft along H), left-dot chain: lanes (b,w); rows [re(c,k) | im(c,k)] ----
    t_xy = jnp.dot(wfwdL_xy, xin_xy, preferred_element_type=jnp.float32, precision=HP)  # (40, 32)
    t_xy_sw = jnp.concatenate([t_xy[20:40, :], t_xy[0:20, :]], axis=0)
    s_xy = _softshrink(t_xy * sa_xy + t_xy_sw * sb_xy)
    y_xyL = jnp.dot(winvL_xy, s_xy, preferred_element_type=jnp.float32, precision=HP)   # (64, 32) (c,h)x(b,w)

    # relayout xy half to rows (b,h), lanes (c,w): 8 static (16,16) block slices + 3 concats
    parts = []
    for b in range(B):
        blocks = [y_xyL[c * H:(c + 1) * H, b * W:(b + 1) * W] for c in range(C2)]
        parts.append(jnp.concatenate(blocks, axis=1))       # (16, 64)
    y_xy = jnp.concatenate(parts, axis=0)                   # (32, 64)

    fno = jnp.concatenate([y_xx, y_xy], axis=1)              # (32, 128) rows (b,h), lanes (c,w)

    # ---- ChannelProcessBlock: 1x1 conv -> SiLU -> 1x1 conv (convs composed with delta(w,w')),
    #      batch folded into rows, plus residual (bn1/dropout/drop_path are identities) ----
    hmid = jnp.dot(fno, conv1c, preferred_element_type=jnp.float32, precision=HP) + b1   # (32, 256)
    hmid = hmid * jax.nn.sigmoid(hmid)                                                   # SiLU (EUP)
    o = jnp.dot(hmid, conv2c, preferred_element_type=jnp.float32, precision=HP) + b2     # (32, 128)
    out_ref[...] = (o + res).astype(out_ref.dtype)


# ---------------- pallas_call wrapper (single grid step, full-array blocks) ----------------
def _full_spec(shape):
    nd = len(shape)
    return pl.BlockSpec(tuple(shape), lambda i, _nd=nd: (0,) * _nd)


def fused_pallas(dyn, statA, statB):
    return pl.pallas_call(
        fused_kernel,
        out_shape=jax.ShapeDtypeStruct((B * H, C * W), jnp.float32),
        grid=(1,),
        in_specs=[_full_spec(dyn.shape), _full_spec(statA.shape), _full_spec(statB.shape)],
        out_specs=_full_spec((B * H, C * W)),
        compiler_params=pltpu.CompilerParams(dimension_semantics=("arbitrary",)),
    )(dyn, statA, statB)


# ---------------- full forward ----------------
def spectral_channel_block(x, emb, params):
    # TODO(synk): FreqLinear conditioning ((B,4)x(4,10) matmul) kept in plain JAX — too tiny to kernel.
    h1 = emb @ params["fl_w1"] + params["fl_b1"]            # (B, 2*M1)
    h2 = emb @ params["fl_w2"] + params["fl_b2"]            # (B, 2*M2)
    e1r, e1i = h1[:, 0::2], h1[:, 1::2]                     # (B, M1)
    e2r, e2i = h2[:, 0::2], h2[:, 1::2]                     # (B, M2)

    # broadcast-ready per-(b, mode) complex scales in the kernel's layouts
    e2r_t = jnp.tile(e2r, (1, C2))                          # (B, 20) (c-major, k-minor)
    e2i_t = jnp.tile(e2i, (1, C2))
    sa_xx = jnp.repeat(jnp.concatenate([e2r_t, e2r_t], axis=1), H, axis=0)      # (32, 40)
    sb_xx = jnp.repeat(jnp.concatenate([-e2i_t, e2i_t], axis=1), H, axis=0)     # (32, 40)
    base_r = jnp.repeat(e1r.T, W, axis=1)                   # (M1, B*W)
    base_i = jnp.repeat(e1i.T, W, axis=1)
    sa_xy = jnp.tile(base_r, (2 * C2, 1))                                       # (40, 32)
    sb_xy = jnp.concatenate([jnp.tile(-base_i, (C2, 1)), jnp.tile(base_i, (C2, 1))], axis=0)

    # input / residual relayout (lane-dense slabs) done by XLA in the wrapper
    xin_xx = x[:, :C2].transpose(0, 2, 1, 3).reshape(B * H, C2 * W)    # (32, 64)
    xin_xy = x[:, C2:].transpose(1, 2, 0, 3).reshape(C2 * H, B * W)    # (64, 32)
    res = x.transpose(0, 2, 1, 3).reshape(B * H, C * W)                # (32, 128)

    def padw(a):
        return jnp.pad(a, ((0, 0), (0, 128 - a.shape[1])))

    dyn = jnp.concatenate(
        [padw(xin_xx), padw(xin_xy), res,
         padw(sa_xx), padw(sb_xx), padw(sa_xy), padw(sb_xy)], axis=0)  # (272, 128)

    out = fused_pallas(dyn, params["statA"], params["statB"])          # (32, 128)
    return out.reshape(B, H, C, W).transpose(0, 2, 1, 3)


# ---------------- deterministic synthetic parameters + composed static matrices ----------------
def init_params(key):
    ks = jax.random.split(key, 8)
    fl_w1 = (1.0 / (COND + 2 * M1)) * jax.random.normal(ks[0], (COND, 2 * M1), jnp.float32)
    fl_w2 = (1.0 / (COND + 2 * M2)) * jax.random.normal(ks[1], (COND, 2 * M2), jnp.float32)
    fl_b1 = jnp.zeros((1, 2 * M1), jnp.float32)
    fl_b2 = jnp.zeros((1, 2 * M2), jnp.float32)

    # Block-diagonal complex spectral weights (stored re/im; synthetic init).
    w1 = 0.4 * jax.random.normal(ks[2], (NB, BLK, BLK, M1, 2), jnp.float32)
    w2 = 0.4 * jax.random.normal(ks[3], (NB, BLK, BLK, M2, 2), jnp.float32)

    conv1_w = (1.0 / np.sqrt(C)) * jax.random.normal(ks[4], (HID, C), jnp.float32)
    conv1_b = 0.05 * jax.random.normal(ks[5], (HID,), jnp.float32)
    conv2_w = (1.0 / np.sqrt(HID)) * jax.random.normal(ks[6], (C, HID), jnp.float32)
    conv2_b = 0.05 * jax.random.normal(ks[7], (C,), jnp.float32)

    # ------ compose static matrices in float64 numpy ------
    w1r, w1i = np.asarray(w1[..., 0], np.float64), np.asarray(w1[..., 1], np.float64)
    w2r, w2i = np.asarray(w2[..., 0], np.float64), np.asarray(w2[..., 1], np.float64)
    Frw, Fiw = _rdft_mats(W, M2)
    Grw, Giw = _irdft_mats(W, M2)
    Frh, Fih = _rdft_mats(H, M1)
    Grh, Gih = _irdft_mats(H, M1)
    eyeC2 = np.eye(C2)
    eyeW = np.eye(W)

    # xx forward (right matrix): rows (c_in, w) -> cols [re | im] of (c_out, k), block-diag in channel
    re_xx = np.einsum('wk,niok->niwok', Frw, w2r) - np.einsum('wk,niok->niwok', Fiw, w2i)
    im_xx = np.einsum('wk,niok->niwok', Frw, w2i) + np.einsum('wk,niok->niwok', Fiw, w2r)

    def bdiag_xx(m):                                   # (NB,BLK,W,BLK,M2) -> (C2*W, C2*M2)
        full = np.zeros((NB, BLK, W, NB, BLK, M2))
        for n in range(NB):
            full[n, :, :, n, :, :] = m[n]
        return full.reshape(C2 * W, C2 * M2)

    wfwd_xx = np.concatenate([bdiag_xx(re_xx), bdiag_xx(im_xx)], axis=1)        # (64, 40)

    # xx inverse (right matrix): rows [re | im] of (c, k) -> cols (c, w)
    winv_xx = np.concatenate([
        np.einsum('cd,kw->ckdw', eyeC2, Grw).reshape(C2 * M2, C2 * W),
        np.einsum('cd,kw->ckdw', eyeC2, Giw).reshape(C2 * M2, C2 * W)], axis=0)  # (40, 64)

    # xy forward (LEFT matrix): rows [re | im] of (c_out, k) -> cols (c_in, h), block-diag in channel
    re_xy = np.einsum('hk,niok->nokih', Frh, w1r) - np.einsum('hk,niok->nokih', Fih, w1i)
    im_xy = np.einsum('hk,niok->nokih', Frh, w1i) + np.einsum('hk,niok->nokih', Fih, w1r)

    def bdiag_xy(m):                                   # (NB,BLK,M1,BLK,H) -> (C2*M1, C2*H)
        full = np.zeros((NB, BLK, M1, NB, BLK, H))
        for n in range(NB):
            full[n, :, :, n, :, :] = m[n]
        return full.reshape(C2 * M1, C2 * H)

    wfwdL_xy = np.concatenate([bdiag_xy(re_xy), bdiag_xy(im_xy)], axis=0)       # (40, 64)

    # xy inverse (LEFT matrix): rows (c, h) -> cols [re | im] of (c, k)
    winvL_xy = np.concatenate([
        np.einsum('cd,kh->chdk', eyeC2, Grh).reshape(C2 * H, C2 * M1),
        np.einsum('cd,kh->chdk', eyeC2, Gih).reshape(C2 * H, C2 * M1)], axis=1)  # (64, 40)

    # 1x1 convs composed with delta(w, w') so the FFN runs on (rows=(b,h), lanes=(c,w)) slabs
    Wa = np.asarray(conv1_w, np.float64)
    Wb = np.asarray(conv2_w, np.float64)
    conv1c = np.einsum('oc,vw->cvow', Wa, eyeW).reshape(C * W, HID * W)          # (128, 256)
    conv2c = np.einsum('co,vw->ovcw', Wb, eyeW).reshape(HID * W, C * W)          # (256, 128)
    b1vec = np.repeat(np.asarray(conv1_b, np.float64), W)[None, :]               # (1, 256)
    b2vec = np.repeat(np.asarray(conv2_b, np.float64), W)[None, :]               # (1, 128)

    def padw128(a):
        return np.pad(a, ((0, 0), (0, 128 - a.shape[1])))

    statA = np.concatenate([padw128(winv_xx), padw128(wfwdL_xy),
                            padw128(wfwd_xx), padw128(winvL_xy),
                            conv2c, b2vec], axis=0)                              # (465, 128)
    statA = np.pad(statA, ((0, (-statA.shape[0]) % 8), (0, 0)))                  # (472, 128)
    statB = np.concatenate([conv1c, b1vec], axis=0)                              # (129, 256)
    statB = np.pad(statB, ((0, (-statB.shape[0]) % 8), (0, 0)))                  # (136, 256)

    return dict(
        fl_w1=fl_w1, fl_w2=fl_w2, fl_b1=fl_b1, fl_b2=fl_b2,
        w1c=jnp.asarray(w1[..., 0] + 1j * w1[..., 1]),
        w2c=jnp.asarray(w2[..., 0] + 1j * w2[..., 1]),
        conv1_w=conv1_w, conv1_b=conv1_b, conv2_w=conv2_w, conv2_b=conv2_b,
        statA=jnp.asarray(statA, jnp.float32),
        statB=jnp.asarray(statB, jnp.float32),
    )


# ---------------- pure-JAX reference (mirrors the PyTorch forward) ----------------
def reference_forward(x, emb, params):
    h1 = emb @ params["fl_w1"] + params["fl_b1"]
    h2 = emb @ params["fl_w2"] + params["fl_b2"]
    e1 = h1.reshape(B, M1, 2); e1 = e1[..., 0] + 1j * e1[..., 1]
    e2 = h2.reshape(B, M2, 2); e2 = e2[..., 0] + 1j * e2[..., 1]

    xx, xy = x[:, :C2], x[:, C2:]

    xf = jnp.fft.rfft(xx, norm="ortho", axis=-1)
    Wf = xf.shape[-1]
    xf = xf.reshape(B, NB, BLK, H, Wf)
    t = xf[..., :M2] * e2[:, None, None, None, :]
    o = jnp.einsum("bnixy,nioy->bnoxy", t, params["w2c"])
    out = jnp.zeros((B, NB, BLK, H, Wf), jnp.complex64).at[..., :M2].set(o)
    out = out.reshape(B, C2, H, Wf)
    out = _softshrink(out.real) + 1j * _softshrink(out.imag)
    xx_o = jnp.fft.irfft(out, n=W, axis=-1, norm="ortho")

    yf = jnp.fft.rfft(xy, norm="ortho", axis=-2)
    Hf = yf.shape[-2]
    yf = yf.reshape(B, NB, BLK, Hf, W)
    t = yf[..., :M1, :] * e1[:, None, None, :, None]
    o = jnp.einsum("bnixy,niox->bnoxy", t, params["w1c"])
    out = jnp.zeros((B, NB, BLK, Hf, W), jnp.complex64).at[..., :M1, :].set(o)
    out = out.reshape(B, C2, Hf, W)
    out = _softshrink(out.real) + 1j * _softshrink(out.imag)
    xy_o = jnp.fft.irfft(out, n=H, axis=-2, norm="ortho")

    fno = jnp.concatenate([xx_o, xy_o], axis=1)

    hmid = jnp.einsum("oc,bchw->bohw", params["conv1_w"], fno,
                      precision=jax.lax.Precision.HIGHEST) + params["conv1_b"][None, :, None, None]
    hmid = hmid * jax.nn.sigmoid(hmid)
    out2 = jnp.einsum("oc,bchw->bohw", params["conv2_w"], hmid,
                      precision=jax.lax.Precision.HIGHEST) + params["conv2_b"][None, :, None, None]
    return out2 + x


if __name__ == "__main__":
    key = jax.random.PRNGKey(0)
    kx, ke, kp = jax.random.split(key, 3)
    x = jax.random.normal(kx, (B, C, H, W), jnp.float32)
    emb = jax.random.normal(ke, (B, COND), jnp.float32)
    params = init_params(kp)

    fwd = jax.jit(lambda x_, e_: spectral_channel_block(x_, e_, params))
    out = jax.block_until_ready(fwd(x, emb))
    assert out.shape == (B, C, H, W) and out.dtype == jnp.float32

    ref = reference_forward(x, emb, params)
    err = float(jnp.max(jnp.abs(out - ref)))
    scale = float(jnp.max(jnp.abs(ref))) + 1e-6
    assert err / scale < 2e-2, f"kernel/reference mismatch: max abs err {err}, ref scale {scale}"

    print("KERNEL_OK")
</pallas_src>

<mosaic_0001>
module attributes {stable_mosaic.version = 11 : i64} {
  func.func @fused_kernel(%arg0: i32, %arg1: memref<272x128xf32, #tpu.memory_space<vmem>>, %arg2: memref<472x128xf32, #tpu.memory_space<vmem>>, %arg3: memref<136x256xf32, #tpu.memory_space<vmem>>, %arg4: memref<32x128xf32, #tpu.memory_space<vmem>>) attributes {dimension_semantics = [#tpu.dimension_semantics<arbitrary>], iteration_bounds = array<i64: 1>, scalar_prefetch = 0 : i64, scratch_operands = 0 : i64, tpu.core_type = #tpu.core_type<tc>, window_params = [{pipeline_mode = #tpu.pipeline_mode<synchronous>, transform_indices = @transform_0, window_bounds = array<i64: 272, 128>}, {pipeline_mode = #tpu.pipeline_mode<synchronous>, transform_indices = @transform_1, window_bounds = array<i64: 472, 128>}, {pipeline_mode = #tpu.pipeline_mode<synchronous>, transform_indices = @transform_2, window_bounds = array<i64: 136, 256>}, {pipeline_mode = #tpu.pipeline_mode<synchronous>, transform_indices = @transform_3, window_bounds = array<i64: 32, 128>}]} {
    %c0 = arith.constant 0 : index
    %c0_0 = arith.constant 0 : index
    %0 = vector.load %arg1[%c0, %c0_0] : memref<272x128xf32, #tpu.memory_space<vmem>>, vector<32x64xf32>
    %c32 = arith.constant 32 : index
    %c0_1 = arith.constant 0 : index
    %1 = vector.load %arg1[%c32, %c0_1] : memref<272x128xf32, #tpu.memory_space<vmem>>, vector<64x32xf32>
    %c96 = arith.constant 96 : index
    %c0_2 = arith.constant 0 : index
    %2 = vector.load %arg1[%c96, %c0_2] : memref<272x128xf32, #tpu.memory_space<vmem>>, vector<32x128xf32>
    %c128 = arith.constant 128 : index
    %c0_3 = arith.constant 0 : index
    %3 = vector.load %arg1[%c128, %c0_3] : memref<272x128xf32, #tpu.memory_space<vmem>>, vector<32x40xf32>
    %c160 = arith.constant 160 : index
    %c0_4 = arith.constant 0 : index
    %4 = vector.load %arg1[%c160, %c0_4] : memref<272x128xf32, #tpu.memory_space<vmem>>, vector<32x40xf32>
    %c192 = arith.constant 192 : index
    %c0_5 = arith.constant 0 : index
    %5 = vector.load %arg1[%c192, %c0_5] : memref<272x128xf32, #tpu.memory_space<vmem>>, vector<40x32xf32>
    %c232 = arith.constant 232 : index
    %c0_6 = arith.constant 0 : index
    %6 = vector.load %arg1[%c232, %c0_6] : memref<272x128xf32, #tpu.memory_space<vmem>>, vector<40x32xf32>
    %c0_7 = arith.constant 0 : index
    %c0_8 = arith.constant 0 : index
    %7 = vector.load %arg2[%c0_7, %c0_8] : memref<472x128xf32, #tpu.memory_space<vmem>>, vector<40x64xf32>
    %c40 = arith.constant 40 : index
    %c0_9 = arith.constant 0 : index
    %8 = vector.load %arg2[%c40, %c0_9] : memref<472x128xf32, #tpu.memory_space<vmem>>, vector<40x64xf32>
    %c80 = arith.constant 80 : index
    %c0_10 = arith.constant 0 : index
    %9 = vector.load %arg2[%c80, %c0_10] : memref<472x128xf32, #tpu.memory_space<vmem>>, vector<64x40xf32>
    %c144 = arith.constant 144 : index
    %c0_11 = arith.constant 0 : index
    %10 = vector.load %arg2[%c144, %c0_11] : memref<472x128xf32, #tpu.memory_space<vmem>>, vector<64x40xf32>
    %c208 = arith.constant 208 : index
    %c0_12 = arith.constant 0 : index
    %11 = vector.load %arg2[%c208, %c0_12] : memref<472x128xf32, #tpu.memory_space<vmem>>, vector<256x128xf32>
    %c464 = arith.constant 464 : index
    %c0_13 = arith.constant 0 : index
    %12 = vector.load %arg2[%c464, %c0_13] : memref<472x128xf32, #tpu.memory_space<vmem>>, vector<1x128xf32>
    %c0_14 = arith.constant 0 : index
    %c0_15 = arith.constant 0 : index
    %13 = vector.load %arg3[%c0_14, %c0_15] : memref<136x256xf32, #tpu.memory_space<vmem>>, vector<128x256xf32>
    %c128_16 = arith.constant 128 : index
    %c0_17 = arith.constant 0 : index
    %14 = vector.load %arg3[%c128_16, %c0_17] : memref<136x256xf32, #tpu.memory_space<vmem>>, vector<1x256xf32>
    %cst = arith.constant dense<0.000000e+00> : vector<32x40xf32>
    %15 = tpu.matmul %0, %9, %cst {dimension_numbers = #tpu.dot_dimension_numbers<[1], [0], [0], [1], [0, 0, 1, 1], [], []>, precision = #tpu.contract_precision<fp32>} : vector<32x64xf32>, vector<64x40xf32>, vector<32x40xf32> -> vector<32x40xf32>
    %16 = vector.extract_strided_slice %15 {offsets = [0, 20], sizes = [32, 20], strides = [1, 1]} : vector<32x40xf32> to vector<32x20xf32>
    %17 = vector.extract_strided_slice %15 {offsets = [0, 0], sizes = [32, 20], strides = [1, 1]} : vector<32x40xf32> to vector<32x20xf32>
    %18 = tpu.concatenate %16, %17 in 1 : vector<32x20xf32>, vector<32x20xf32> -> vector<32x40xf32>
    %19 = arith.mulf %15, %3 : vector<32x40xf32>
    %20 = arith.mulf %18, %4 : vector<32x40xf32>
    %21 = arith.addf %19, %20 : vector<32x40xf32>
    %cst_18 = arith.constant 0.00999999977 : f32
    %22 = vector.broadcast %cst_18 : f32 to vector<32x40xf32>
    %23 = arith.cmpf ogt, %21, %22 : vector<32x40xf32>
    %cst_19 = arith.constant 0.00999999977 : f32
    %24 = vector.broadcast %cst_19 : f32 to vector<32x40xf32>
    %25 = arith.subf %21, %24 : vector<32x40xf32>
    %cst_20 = arith.constant -0.00999999977 : f32
    %26 = vector.broadcast %cst_20 : f32 to vector<32x40xf32>
    %27 = arith.cmpf olt, %21, %26 : vector<32x40xf32>
    %cst_21 = arith.constant 0.00999999977 : f32
    %28 = vector.broadcast %cst_21 : f32 to vector<32x40xf32>
    %29 = arith.addf %21, %28 : vector<32x40xf32>
    %cst_22 = arith.constant 0.000000e+00 : f32
    %30 = vector.broadcast %cst_22 : f32 to vector<32x40xf32>
    %31 = arith.select %27, %29, %30 : vector<32x40xi1>, vector<32x40xf32>
    %32 = arith.select %23, %25, %31 : vector<32x40xi1>, vector<32x40xf32>
    %cst_23 = arith.constant dense<0.000000e+00> : vector<32x64xf32>
    %33 = tpu.matmul %32, %7, %cst_23 {dimension_numbers = #tpu.dot_dimension_numbers<[1], [0], [0], [1], [0, 0, 1, 1], [], []>, precision = #tpu.contract_precision<fp32>} : vector<32x40xf32>, vector<40x64xf32>, vector<32x64xf32> -> vector<32x64xf32>
    %cst_24 = arith.constant dense<0.000000e+00> : vector<40x32xf32>
    %34 = tpu.matmul %8, %1, %cst_24 {dimension_numbers = #tpu.dot_dimension_numbers<[1], [0], [0], [1], [0, 0, 1, 1], [], []>, precision = #tpu.contract_precision<fp32>} : vector<40x64xf32>, vector<64x32xf32>, vector<40x32xf32> -> vector<40x32xf32>
    %35 = vector.extract_strided_slice %34 {offsets = [20, 0], sizes = [20, 32], strides = [1, 1]} : vector<40x32xf32> to vector<20x32xf32>
    %36 = vector.extract_strided_slice %34 {offsets = [0, 0], sizes = [20, 32], strides = [1, 1]} : vector<40x32xf32> to vector<20x32xf32>
    %37 = tpu.concatenate %35, %36 in 0 : vector<20x32xf32>, vector<20x32xf32> -> vector<40x32xf32>
    %38 = arith.mulf %34, %5 : vector<40x32xf32>
    %39 = arith.mulf %37, %6 : vector<40x32xf32>
    %40 = arith.addf %38, %39 : vector<40x32xf32>
    %cst_25 = arith.constant 0.00999999977 : f32
    %41 = vector.broadcast %cst_25 : f32 to vector<40x32xf32>
    %42 = arith.cmpf ogt, %40, %41 : vector<40x32xf32>
    %cst_26 = arith.constant 0.00999999977 : f32
    %43 = vector.broadcast %cst_26 : f32 to vector<40x32xf32>
    %44 = arith.subf %40, %43 : vector<40x32xf32>
    %cst_27 = arith.constant -0.00999999977 : f32
    %45 = vector.broadcast %cst_27 : f32 to vector<40x32xf32>
    %46 = arith.cmpf olt, %40, %45 : vector<40x32xf32>
    %cst_28 = arith.constant 0.00999999977 : f32
    %47 = vector.broadcast %cst_28 : f32 to vector<40x32xf32>
    %48 = arith.addf %40, %47 : vector<40x32xf32>
    %cst_29 = arith.constant 0.000000e+00 : f32
    %49 = vector.broadcast %cst_29 : f32 to vector<40x32xf32>
    %50 = arith.select %46, %48, %49 : vector<40x32xi1>, vector<40x32xf32>
    %51 = arith.select %42, %44, %50 : vector<40x32xi1>, vector<40x32xf32>
    %cst_30 = arith.constant dense<0.000000e+00> : vector<64x32xf32>
    %52 = tpu.matmul %10, %51, %cst_30 {dimension_numbers = #tpu.dot_dimension_numbers<[1], [0], [0], [1], [0, 0, 1, 1], [], []>, precision = #tpu.contract_precision<fp32>} : vector<64x40xf32>, vector<40x32xf32>, vector<64x32xf32> -> vector<64x32xf32>
    %53 = vector.extract_strided_slice %52 {offsets = [0, 0], sizes = [16, 16], strides = [1, 1]} : vector<64x32xf32> to vector<16x16xf32>
    %54 = vector.extract_strided_slice %52 {offsets = [16, 0], sizes = [16, 16], strides = [1, 1]} : vector<64x32xf32> to vector<16x16xf32>
    %55 = vector.extract_strided_slice %52 {offsets = [32, 0], sizes = [16, 16], strides = [1, 1]} : vector<64x32xf32> to vector<16x16xf32>
    %56 = vector.extract_strided_slice %52 {offsets = [48, 0], sizes = [16, 16], strides = [1, 1]} : vector<64x32xf32> to vector<16x16xf32>
    %57 = tpu.concatenate %53, %54, %55, %56 in 1 : vector<16x16xf32>, vector<16x16xf32>, vector<16x16xf32>, vector<16x16xf32> -> vector<16x64xf32>
    %58 = vector.extract_strided_slice %52 {offsets = [0, 16], sizes = [16, 16], strides = [1, 1]} : vector<64x32xf32> to vector<16x16xf32>
    %59 = vector.extract_strided_slice %52 {offsets = [16, 16], sizes = [16, 16], strides = [1, 1]} : vector<64x32xf32> to vector<16x16xf32>
    %60 = vector.extract_strided_slice %52 {offsets = [32, 16], sizes = [16, 16], strides = [1, 1]} : vector<64x32xf32> to vector<16x16xf32>
    %61 = vector.extract_strided_slice %52 {offsets = [48, 16], sizes = [16, 16], strides = [1, 1]} : vector<64x32xf32> to vector<16x16xf32>
    %62 = tpu.concatenate %58, %59, %60, %61 in 1 : vector<16x16xf32>, vector<16x16xf32>, vector<16x16xf32>, vector<16x16xf32> -> vector<16x64xf32>
    %63 = tpu.concatenate %57, %62 in 0 : vector<16x64xf32>, vector<16x64xf32> -> vector<32x64xf32>
    %64 = tpu.concatenate %33, %63 in 1 : vector<32x64xf32>, vector<32x64xf32> -> vector<32x128xf32>
    %cst_31 = arith.constant dense<0.000000e+00> : vector<32x256xf32>
    %65 = tpu.matmul %64, %13, %cst_31 {dimension_numbers = #tpu.dot_dimension_numbers<[1], [0], [0], [1], [0, 0, 1, 1], [], []>, precision = #tpu.contract_precision<fp32>} : vector<32x128xf32>, vector<128x256xf32>, vector<32x256xf32> -> vector<32x256xf32>
    %66 = vector.broadcast %14 : vector<1x256xf32> to vector<32x256xf32>
    %67 = arith.addf %65, %66 : vector<32x256xf32>
    %68 = arith.negf %67 : vector<32x256xf32>
    %69 = math.exp %68 : vector<32x256xf32>
    %cst_32 = arith.constant 1.000000e+00 : f32
    %70 = vector.broadcast %cst_32 : f32 to vector<32x256xf32>
    %71 = arith.addf %70, %69 : vector<32x256xf32>
    %72 = arith.divf %70, %71 : vector<32x256xf32>
    %73 = arith.mulf %67, %72 : vector<32x256xf32>
    %cst_33 = arith.constant dense<0.000000e+00> : vector<32x128xf32>
    %74 = tpu.matmul %73, %11, %cst_33 {dimension_numbers = #tpu.dot_dimension_numbers<[1], [0], [0], [1], [0, 0, 1, 1], [], []>, precision = #tpu.contract_precision<fp32>} : vector<32x256xf32>, vector<256x128xf32>, vector<32x128xf32> -> vector<32x128xf32>
    %75 = vector.broadcast %12 : vector<1x128xf32> to vector<32x128xf32>
    %76 = arith.addf %74, %75 : vector<32x128xf32>
    %77 = arith.addf %76, %2 : vector<32x128xf32>
    %c0_34 = arith.constant 0 : index
    %c0_35 = arith.constant 0 : index
    %78 = vector.load %arg4[%c0_34, %c0_35] : memref<32x128xf32, #tpu.memory_space<vmem>>, vector<32x128xf32>
    tpu.vector_store %arg4[%c0_34, %c0_35], %77 {strides = array<i32>} : memref<32x128xf32, #tpu.memory_space<vmem>>, vector<32x128xf32>,
    return
  }
  func.func @transform_0(%arg0: i32) -> (i32, i32) {
    %c0_i32 = arith.constant 0 : i32
    %c0_i32_0 = arith.constant 0 : i32
    %c0_i32_1 = arith.constant 0 : i32
    return %c0_i32, %c0_i32_0 : i32, i32
  }
  func.func @transform_1(%arg0: i32) -> (i32, i32) {
    %c0_i32 = arith.constant 0 : i32
    %c0_i32_0 = arith.constant 0 : i32
    %c0_i32_1 = arith.constant 0 : i32
    return %c0_i32, %c0_i32_0 : i32, i32
  }
  func.func @transform_2(%arg0: i32) -> (i32, i32) {
    %c0_i32 = arith.constant 0 : i32
    %c0_i32_0 = arith.constant 0 : i32
    %c0_i32_1 = arith.constant 0 : i32
    return %c0_i32, %c0_i32_0 : i32, i32
  }
  func.func @transform_3(%arg0: i32) -> (i32, i32) {
    %c0_i32 = arith.constant 0 : i32
    %c0_i32_0 = arith.constant 0 : i32
    %c0_i32_1 = arith.constant 0 : i32
    return %c0_i32, %c0_i32_0 : i32, i32
  }
}

</mosaic_0001>

<llo_original>
// kernel: tile.27
$region0: #{tile.27}
  %s0 = inlined_call_operand.vmem [shape: f32[2,4,5], index: 0, kind: input, shape index: {}]
  %s1 = inlined_call_operand.vmem [shape: f32[2,20], index: 1, kind: output, shape index: {}]
  $region1: #{tile.27} parent=0
    #allocation0 [shape = 'u8[4096]{0}', space=vmem, size = 0x1000, scoped, tag = 'scoped mem for output reshape']
    #allocation1 [shape = 'u8[8192]{0}', space=vmem, size = 0x2000, scoped, tag = 'scoped mem for input reshape']
    %s3 = ssub.s32 16, 1
    %s4 = scalar_lea.vmem %s0, 4
    %v5 = vld [vmem:[%s4] sm:%s3]
    %s6 = scalar_lea.vmem [#allocation1], 8
    %7 = vst [vmem:[%s6] sm:%s3] %v5
    %v8 = vld [vmem:[%s0] sm:%s3]
    %9 = vst [vmem:[#allocation1] sm:%s3] %v8
    %s10 = smov 3
    %v11 = vld [vmem:[#allocation1] ss:$8 sm:%s10]
    %vm12 = vcmask 39936
    %13 = vst.msk [vmem:[#allocation0] sm:$0x3] %vm12, %v11
    %s14 = scalar_lea.vmem [#allocation1], 3
    %s15 = smov 3
    %v16 = vld [vmem:[%s14] ss:$8 sm:%s15]
    %17 = vrot.lane.b32.xlu0 %v16, 15
    %v18 = vpop.permute.xlu0 %17
    %vm19 = vcmask 162936
    %20 = vst.msk [vmem:[#allocation0] sm:$0x3] %vm19, %v18
    %s21 = scalar_lea.vmem [#allocation1], 2
    %s22 = smov 3
    %v23 = vld [vmem:[%s21] ss:$8 sm:%s22]
    %24 = vrot.lane.b32.xlu0 %v23, 10
    %v25 = vpop.permute.xlu0 %24
    %vm26 = vcmask 121936
    %27 = vst.msk [vmem:[#allocation0] sm:$0x3] %vm26, %v25
    %s28 = scalar_lea.vmem [#allocation1], 1
    %s29 = smov 3
    %v30 = vld [vmem:[%s28] ss:$8 sm:%s29]
    %31 = vrot.lane.b32.xlu0 %v30, 5
    %v32 = vpop.permute.xlu0 %31
    %vm33 = vcmask 80936
    %34 = vst.msk [vmem:[#allocation0] sm:$0x3] %vm33, %v32
    %s36 = ssub.s32 4, 1
    %v37 = vld [vmem:[#allocation0] sm:%s36]
    %s39 = ssub.s32 4, 1
    %40 = vst [vmem:[%s1] sm:%s39] %v37

// kernel: neg.2
$region0: #{neg.2}
  #allocation0 [shape = 's32[1]{0}', space=sflag, size = 0x4, scoped, tag = 'scoped memory for neg.2']
  %s0 = inlined_call_operand.vmem [shape: f32[2,20], index: 0, kind: input, shape index: {}]
  %s1 = inlined_call_operand.vmem [shape: f32[2,20], index: 1, kind: output, shape index: {}]
  %v2 = vld [vmem:[%s0] sm:$0x3]
  %3 = xla_tuple %v2
  %4 = xla_tuple %3
  %v5 = vxor.u32 %v2, 2147483648
  %6 = xla_tuple %v5
  %7 = vst [vmem:[%s1] sm:$0x3] %v5

// kernel: tile.36
$region0: #{tile.36}
  %s0 = inlined_call_operand.vmem [shape: f32[8,5,32], index: 0, kind: input, shape index: {}]
  %s1 = inlined_call_operand.vmem [shape: f32[40,32], index: 1, kind: output, shape index: {}]
  %v2 = vld [vmem:[%s0] sm:$0x1f]
  %vm3 = vcmask 261120
  %4 = vst.msk [vmem:[%s1] sm:$0x1f] %vm3, %v2
  %s5 = scalar_lea.vmem %s0, 8
  %v6 = vld [vmem:[%s5] sm:$0x1f]
  %vm7 = vcmask 261120
  %s8 = scalar_lea.vmem %s1, 5
  %9 = vst.msk [vmem:[%s8] sm:$0x1f] %vm7, %v6
  %s10 = scalar_lea.vmem %s0, 16
  %v11 = vld [vmem:[%s10] sm:$0x1f]
  %vm12 = vcmask 261120
  %s13 = scalar_lea.vmem %s1, 10
  %14 = vst.msk [vmem:[%s13] sm:$0x1f] %vm12, %v11
  %s15 = scalar_lea.vmem %s0, 24
  %v16 = vld [vmem:[%s15] sm:$0x1f]
  %vm17 = vcmask 261120
  %s18 = scalar_lea.vmem %s1, 15
  %19 = vst.msk [vmem:[%s18] sm:$0x1f] %vm17, %v16
  %s20 = scalar_lea.vmem %s0, 32
  %v21 = vld [vmem:[%s20] sm:$0x1f]
  %vm22 = vcmask 261120
  %s23 = scalar_lea.vmem %s1, 20
  %24 = vst.msk [vmem:[%s23] sm:$0x1f] %vm22, %v21
  %s25 = scalar_lea.vmem %s0, 40
  %v26 = vld [vmem:[%s25] sm:$0x1f]
  %vm27 = vcmask 261120
  %s28 = scalar_lea.vmem %s1, 25
  %29 = vst.msk [vmem:[%s28] sm:$0x1f] %vm27, %v26
  %s30 = scalar_lea.vmem %s0, 48
  %v31 = vld [vmem:[%s30] sm:$0x1f]
  %vm32 = vcmask 261120
  %s33 = scalar_lea.vmem %s1, 30
  %34 = vst.msk [vmem:[%s33] sm:$0x1f] %vm32, %v31
  %s35 = scalar_lea.vmem %s0, 56
  %v36 = vld [vmem:[%s35] sm:$0x1f]
  %vm37 = vcmask 261120
  %s38 = scalar_lea.vmem %s1, 35
  %39 = vst.msk [vmem:[%s38] sm:$0x1f] %vm37, %v36

// kernel: tile.45
$region0: #{tile.45}
  %s0 = inlined_call_operand.vmem [shape: f32[4,5,32], index: 0, kind: input, shape index: {}]
  %s1 = inlined_call_operand.vmem [shape: f32[20,32], index: 1, kind: output, shape index: {}]
  %v2 = vld [vmem:[%s0] sm:$0x1f]
  %vm3 = vcmask 261120
  %4 = vst.msk [vmem:[%s1] sm:$0x1f] %vm3, %v2
  %s5 = scalar_lea.vmem %s0, 8
  %v6 = vld [vmem:[%s5] sm:$0x1f]
  %vm7 = vcmask 261120
  %s8 = scalar_lea.vmem %s1, 5
  %9 = vst.msk [vmem:[%s8] sm:$0x1f] %vm7, %v6
  %s10 = scalar_lea.vmem %s0, 16
  %v11 = vld [vmem:[%s10] sm:$0x1f]
  %vm12 = vcmask 261120
  %s13 = scalar_lea.vmem %s1, 10
  %14 = vst.msk [vmem:[%s13] sm:$0x1f] %vm12, %v11
  %s15 = scalar_lea.vmem %s0, 24
  %v16 = vld [vmem:[%s15] sm:$0x1f]
  %vm17 = vcmask 261120
  %s18 = scalar_lea.vmem %s1, 15
  %19 = vst.msk [vmem:[%s18] sm:$0x1f] %vm17, %v16

// kernel: neg.1
$region0: #{neg.1}
  #allocation0 [shape = 's32[1]{0}', space=sflag, size = 0x4, scoped, tag = 'scoped memory for neg.1']
  %s0 = inlined_call_operand.vmem [shape: f32[5,32], index: 0, kind: input, shape index: {}]
  %s1 = inlined_call_operand.vmem [shape: f32[5,32], index: 1, kind: output, shape index: {}]
  %v2 = vld [vmem:[%s0] sm:$0x1f]
  %3 = xla_tuple %v2
  %4 = xla_tuple %3
  %v5 = vxor.u32 %v2, 2147483648
  %6 = xla_tuple %v5
  %7 = vst [vmem:[%s1] sm:$0xff] %v5

// kernel: _lambda_.1
$region0: #{_lambda_.1}
  #allocation0 [shape = 'u32[]', space=smem, size = 0x4, offset = 0x4, fixed_abs, tag = 'smem constant byte address 0x4 - core index']
  #allocation1 [shape = 'u32[72,128]{1,0:T(1,128)}', space=vmem, size = 0x9000, scoped, tag = 'internal scratch']
  %s0 = inlined_call_operand.vmem [shape: f32[272,128], index: 0, kind: input, shape index: {}]
  %s1 = inlined_call_operand.vmem [shape: f32[472,128], index: 1, kind: input, shape index: {}]
  %s2 = inlined_call_operand.vmem [shape: f32[136,256], index: 2, kind: input, shape index: {}]
  %s3 = inlined_call_operand.vmem [shape: f32[32,128], index: 3, kind: output, shape index: {}]
  %s4 = sld [smem:[#allocation0]]
  $region22: #{_lambda_.1} parent=0
    _
  %s6 = ssub.s32 1, %s4
  %s7 = scalar_select 0, %s6, %s4
  // Predicated region
  $region2: #{_lambda_.1} parent=0 // pred_check
    _
  $region3: #{_lambda_.1} parent=0 // pred_check_branch
    %9 = sbr.rel (0) target = $region5
  $region4: #{_lambda_.1} parent=0 // pred_region
    _
  $region5: #{_lambda_.1} parent=0 // pred_fallthru
    _
  // Predicated region
  $region6: #{_lambda_.1} parent=0 // pred_check
    _
  $region7: #{_lambda_.1} parent=0 // pred_check_branch
    %11 = sbr.rel (0) target = $region9
  $region8: #{_lambda_.1} parent=0 // pred_region
    _
  $region9: #{_lambda_.1} parent=0 // pred_fallthru
    _
  // Predicated region
  $region10: #{_lambda_.1} parent=0 // pred_check
    _
  $region11: #{_lambda_.1} parent=0 // pred_check_branch
    %13 = sbr.rel (0) target = $region13
  $region12: #{_lambda_.1} parent=0 // pred_region
    _
  $region13: #{_lambda_.1} parent=0 // pred_fallthru
    _
  %v14 = vld [vmem:[%s0] sm:$0xff]
  %v15 = vld [vmem:[%s0 + $0x8] sm:$0xff]
  %v16 = vld [vmem:[%s0 + $0x10] sm:$0xff]
  %v17 = vld [vmem:[%s0 + $0x18] sm:$0xff]
  %v18 = vld [vmem:[%s0 + $0x20] sm:$0xff]
  %v19 = vld [vmem:[%s0 + $0x28] sm:$0xff]
  %v20 = vld [vmem:[%s0 + $0x30] sm:$0xff]
  %v21 = vld [vmem:[%s0 + $0x38] sm:$0xff]
  %v22 = vld [vmem:[%s0 + $0x40] sm:$0xff]
  %v23 = vld [vmem:[%s0 + $0x48] sm:$0xff]
  %v24 = vld [vmem:[%s0 + $0x50] sm:$0xff]
  %v25 = vld [vmem:[%s0 + $0x58] sm:$0xff]
  %v26 = vld [vmem:[%s0 + $0x60] sm:$0xff]
  %v27 = vld [vmem:[%s0 + $0x68] sm:$0xff]
  %v28 = vld [vmem:[%s0 + $0x70] sm:$0xff]
  %v29 = vld [vmem:[%s0 + $0x78] sm:$0xff]
  %v30 = vld [vmem:[%s0 + $0x80] sm:$0xff]
  %v31 = vld [vmem:[%s0 + $0x88] sm:$0xff]
  %v32 = vld [vmem:[%s0 + $0x90] sm:$0xff]
  %v33 = vld [vmem:[%s0 + $0x98] sm:$0xff]
  %v34 = vld [vmem:[%s0 + $0xa0] sm:$0xff]
  %v35 = vld [vmem:[%s0 + $0xa8] sm:$0xff]
  %v36 = vld [vmem:[%s0 + $0xb0] sm:$0xff]
  %v37 = vld [vmem:[%s0 + $0xb8] sm:$0xff]
  %v38 = vld [vmem:[%s0 + $0xc0] sm:$0xff]
  %v39 = vld [vmem:[%s0 + $0xc8] sm:$0xff]
  %v40 = vld [vmem:[%s0 + $0xd0] sm:$0xff]
  %v41 = vld [vmem:[%s0 + $0xd8] sm:$0xff]
  %v42 = vld [vmem:[%s0 + $0xe0] sm:$0xff]
  %v43 = vld [vmem:[%s0 + $0xe8] sm:$0xff]
  %v44 = vld [vmem:[%s0 + $0xf0] sm:$0xff]
  %v45 = vld [vmem:[%s0 + $0xf8] sm:$0xff]
  %v46 = vld [vmem:[%s0 + $0x100] sm:$0xff]
  %v47 = vld [vmem:[%s0 + $0x108] sm:$0xff]
  %v48 = vld [vmem:[%s1] sm:$0xff]
  %v49 = vld [vmem:[%s1 + $0x8] sm:$0xff]
  %v50 = vld [vmem:[%s1 + $0x10] sm:$0xff]
  %v51 = vld [vmem:[%s1 + $0x18] sm:$0xff]
  %v52 = vld [vmem:[%s1 + $0x20] sm:$0xff]
  %v53 = vld [vmem:[%s1 + $0x28] sm:$0xff]
  %v54 = vld [vmem:[%s1 + $0x30] sm:$0xff]
  %v55 = vld [vmem:[%s1 + $0x38] sm:$0xff]
  %v56 = vld [vmem:[%s1 + $0x40] sm:$0xff]
  %v57 = vld [vmem:[%s1 + $0x48] sm:$0xff]
  %v58 = vld [vmem:[%s1 + $0x50] sm:$0xff]
  %v59 = vld [vmem:[%s1 + $0x58] sm:$0xff]
  %v60 = vld [vmem:[%s1 + $0x60] sm:$0xff]
  %v61 = vld [vmem:[%s1 + $0x68] sm:$0xff]
  %v62 = vld [vmem:[%s1 + $0x70] sm:$0xff]
  %v63 = vld [vmem:[%s1 + $0x78] sm:$0xff]
  %v64 = vld [vmem:[%s1 + $0x80] sm:$0xff]
  %v65 = vld [vmem:[%s1 + $0x88] sm:$0xff]
  %v66 = vld [vmem:[%s1 + $0x90] sm:$0xff]
  %v67 = vld [vmem:[%s1 + $0x98] sm:$0xff]
  %v68 = vld [vmem:[%s1 + $0xa0] sm:$0xff]
  %v69 = vld [vmem:[%s1 + $0xa8] sm:$0xff]
  %v70 = vld [vmem:[%s1 + $0xb0] sm:$0xff]
  %v71 = vld [vmem:[%s1 + $0xb8] sm:$0xff]
  %v72 = vld [vmem:[%s1 + $0xc0] sm:$0xff]
  %v73 = vld [vmem:[%s1 + $0xc8] sm:$0xff]
  %v74 = vld [vmem:[%s1 + $0xd0] sm:$0xff]
  %v75 = vld [vmem:[%s1 + $0xd8] sm:$0xff]
  %v76 = vld [vmem:[%s1 + $0xe0] sm:$0xff]
  %v77 = vld [vmem:[%s1 + $0xe8] sm:$0xff]
  %v78 = vld [vmem:[%s1 + $0xf0] sm:$0xff]
  %v79 = vld [vmem:[%s1 + $0xf8] sm:$0xff]
  %v80 = vld [vmem:[%s1 + $0x100] sm:$0xff]
  %v81 = vld [vmem:[%s1 + $0x108] sm:$0xff]
  %v82 = vld [vmem:[%s1 + $0x110] sm:$0xff]
  %v83 = vld [vmem:[%s1 + $0x118] sm:$0xff]
  %v84 = vld [vmem:[%s1 + $0x120] sm:$0xff]
  %v85 = vld [vmem:[%s1 + $0x128] sm:$0xff]
  %v86 = vld [vmem:[%s1 + $0x130] sm:$0xff]
  %v87 = vld [vmem:[%s1 + $0x138] sm:$0xff]
  %v88 = vld [vmem:[%s1 + $0x140] sm:$0xff]
  %v89 = vld [vmem:[%s1 + $0x148] sm:$0xff]
  %v90 = vld [vmem:[%s1 + $0x150] sm:$0xff]
  %v91 = vld [vmem:[%s1 + $0x158] sm:$0xff]
  %v92 = vld [vmem:[%s1 + $0x160] sm:$0xff]
  %v93 = vld [vmem:[%s1 + $0x168] sm:$0xff]
  %v94 = vld [vmem:[%s1 + $0x170] sm:$0xff]
  %v95 = vld [vmem:[%s1 + $0x178] sm:$0xff]
  %v96 = vld [vmem:[%s1 + $0x180] sm:$0xff]
  %v97 = vld [vmem:[%s1 + $0x188] sm:$0xff]
  %v98 = vld [vmem:[%s1 + $0x190] sm:$0xff]
  %v99 = vld [vmem:[%s1 + $0x198] sm:$0xff]
  %v100 = vld [vmem:[%s1 + $0x1a0] sm:$0xff]
  %v101 = vld [vmem:[%s1 + $0x1a8] sm:$0xff]
  %v102 = vld [vmem:[%s1 + $0x1b0] sm:$0xff]
  %v103 = vld [vmem:[%s1 + $0x1b8] sm:$0xff]
  %v104 = vld [vmem:[%s1 + $0x1c0] sm:$0xff]
  %v105 = vld [vmem:[%s1 + $0x1c8] sm:$0xff]
  %v106 = vld [vmem:[%s1 + $0x1d0] sm:$0x1]
  %v107 = vld [vmem:[%s2] sm:$0xff]
  %v108 = vld [vmem:[%s2 + $0x8] sm:$0xff]
  %v109 = vld [vmem:[%s2 + $0x10] sm:$0xff]
  %v110 = vld [vmem:[%s2 + $0x18] sm:$0xff]
  %v111 = vld [vmem:[%s2 + $0x20] sm:$0xff]
  %v112 = vld [vmem:[%s2 + $0x28] sm:$0xff]
  %v113 = vld [vmem:[%s2 + $0x30] sm:$0xff]
  %v114 = vld [vmem:[%s2 + $0x38] sm:$0xff]
  %v115 = vld [vmem:[%s2 + $0x40] sm:$0xff]
  %v116 = vld [vmem:[%s2 + $0x48] sm:$0xff]
  %v117 = vld [vmem:[%s2 + $0x50] sm:$0xff]
  %v118 = vld [vmem:[%s2 + $0x58] sm:$0xff]
  %v119 = vld [vmem:[%s2 + $0x60] sm:$0xff]
  %v120 = vld [vmem:[%s2 + $0x68] sm:$0xff]
  %v121 = vld [vmem:[%s2 + $0x70] sm:$0xff]
  %v122 = vld [vmem:[%s2 + $0x78] sm:$0xff]
  %v123 = vld [vmem:[%s2 + $0x80] sm:$0xff]
  %v124 = vld [vmem:[%s2 + $0x88] sm:$0xff]
  %v125 = vld [vmem:[%s2 + $0x90] sm:$0xff]
  %v126 = vld [vmem:[%s2 + $0x98] sm:$0xff]
  %v127 = vld [vmem:[%s2 + $0xa0] sm:$0xff]
  %v128 = vld [vmem:[%s2 + $0xa8] sm:$0xff]
  %v129 = vld [vmem:[%s2 + $0xb0] sm:$0xff]
  %v130 = vld [vmem:[%s2 + $0xb8] sm:$0xff]
  %v131 = vld [vmem:[%s2 + $0xc0] sm:$0xff]
  %v132 = vld [vmem:[%s2 + $0xc8] sm:$0xff]
  %v133 = vld [vmem:[%s2 + $0xd0] sm:$0xff]
  %v134 = vld [vmem:[%s2 + $0xd8] sm:$0xff]
  %v135 = vld [vmem:[%s2 + $0xe0] sm:$0xff]
  %v136 = vld [vmem:[%s2 + $0xe8] sm:$0xff]
  %v137 = vld [vmem:[%s2 + $0xf0] sm:$0xff]
  %v138 = vld [vmem:[%s2 + $0xf8] sm:$0xff]
  %s139 = scalar_lea.vmem %s2, 256
  %v140 = vld [vmem:[%s139] ss:$8 sm:$0x3]
  %vm141 = vcmask 523264
  %v143 = vsel %vm141, %v14, 0
  %v146 = vsel %vm141, %v15, 0
  %v149 = vsel %vm141, %v16, 0
  %v152 = vsel %vm141, %v17, 0
  %154 = vmatpush.msra.mxu0 0.0
  %155 = vmatpush.msra.mxu0 0.0
  %156 = vmatpush.msra.mxu0 0.0
  %157 = vmatpush.msra.mxu0 0.0
  %158 = vmatpush.msra.mxu0 0.0
  %159 = vmatpush.msra.mxu0 0.0
  %160 = vmatpush.msra.mxu0 0.0
  %161 = vmatpush.msra.mxu0 0.0
  %v162 = vand.u32 %v65, 4294901760
  %163 = vmatpush.msra.mxu0 %v162
  %v164 = vand.u32 %v64, 4294901760
  %165 = vmatpush.msra.mxu0 %v164
  %v166 = vand.u32 %v63, 4294901760
  %167 = vmatpush.msra.mxu0 %v166
  %v168 = vand.u32 %v62, 4294901760
  %169 = vmatpush.msra.mxu0 %v168
  %v170 = vand.u32 %v61, 4294901760
  %171 = vmatpush.msra.mxu0 %v170
  %v172 = vand.u32 %v60, 4294901760
  %173 = vmatpush.msra.mxu0 %v172
  %v174 = vand.u32 %v59, 4294901760
  %175 = vmatpush.msra.mxu0 %v174
  %v176 = vand.u32 %v58, 4294901760
  %177 = vmatpush.msra.mxu0 %v176
  %v178 = vand.u32 %v143, 4294901760
  %v179 = vsub.f32 %v143, %v178
  %v180 = vand.u32 %v179, 4294901760
  %v181 = vsub.f32 %v179, %v180
  %v182 = vand.u32 %v181, 4294901760
  %183 = vmatmul.f32.gmra.mxu0 %v182
  %v184 = vpop.f32.mrf.mxu0
  %v185 = vadd.f32 0.0, %v184
  %v186 = vand.u32 %v146, 4294901760
  %v187 = vsub.f32 %v146, %v186
  %v188 = vand.u32 %v187, 4294901760
  %v189 = vsub.f32 %v187, %v188
  %v190 = vand.u32 %v189, 4294901760
  %191 = vmatmul.f32.gmra.mxu0 %v190
  %v192 = vpop.f32.mrf.mxu0
  %v193 = vadd.f32 0.0, %v192
  %v194 = vand.u32 %v149, 4294901760
  %v195 = vsub.f32 %v149, %v194
  %v196 = vand.u32 %v195, 4294901760
  %v197 = vsub.f32 %v195, %v196
  %v198 = vand.u32 %v197, 4294901760
  %199 = vmatmul.f32.gmra.mxu0 %v198
  %v200 = vpop.f32.mrf.mxu0
  %v201 = vadd.f32 0.0, %v200
  %v202 = vand.u32 %v152, 4294901760
  %v203 = vsub.f32 %v152, %v202
  %v204 = vand.u32 %v203, 4294901760
  %v205 = vsub.f32 %v203, %v204
  %v206 = vand.u32 %v205, 4294901760
  %207 = vmatmul.f32.gmra.mxu0 %v206
  %v208 = vpop.f32.mrf.mxu0
  %v209 = vadd.f32 0.0, %v208
  %210 = vdwg.mxu0
  %211 = vmatpush.msra.mxu0 0.0
  %212 = vmatpush.msra.mxu0 0.0
  %213 = vmatpush.msra.mxu0 0.0
  %214 = vmatpush.msra.mxu0 0.0
  %215 = vmatpush.msra.mxu0 0.0
  %216 = vmatpush.msra.mxu0 0.0
  %217 = vmatpush.msra.mxu0 0.0
  %218 = vmatpush.msra.mxu0 0.0
  %v219 = vand.u32 %v65, 4294901760
  %v220 = vsub.f32 %v65, %v219
  %v221 = vand.u32 %v220, 4294901760
  %v222 = vsub.f32 %v220, %v221
  %v223 = vand.u32 %v222, 4294901760
  %224 = vmatpush.msra.mxu0 %v223
  %v225 = vand.u32 %v64, 4294901760
  %v226 = vsub.f32 %v64, %v225
  %v227 = vand.u32 %v226, 4294901760
  %v228 = vsub.f32 %v226, %v227
  %v229 = vand.u32 %v228, 4294901760
  %230 = vmatpush.msra.mxu0 %v229
  %v231 = vand.u32 %v63, 4294901760
  %v232 = vsub.f32 %v63, %v231
  %v233 = vand.u32 %v232, 4294901760
  %v234 = vsub.f32 %v232, %v233
  %v235 = vand.u32 %v234, 4294901760
  %236 = vmatpush.msra.mxu0 %v235
  %v237 = vand.u32 %v62, 4294901760
  %v238 = vsub.f32 %v62, %v237
  %v239 = vand.u32 %v238, 4294901760
  %v240 = vsub.f32 %v238, %v239
  %v241 = vand.u32 %v240, 4294901760
  %242 = vmatpush.msra.mxu0 %v241
  %v243 = vand.u32 %v61, 4294901760
  %v244 = vsub.f32 %v61, %v243
  %v245 = vand.u32 %v244, 4294901760
  %v246 = vsub.f32 %v244, %v245
  %v247 = vand.u32 %v246, 4294901760
  %248 = vmatpush.msra.mxu0 %v247
  %v249 = vand.u32 %v60, 4294901760
  %v250 = vsub.f32 %v60, %v249
  %v251 = vand.u32 %v250, 4294901760
  %v252 = vsub.f32 %v250, %v251
  %v253 = vand.u32 %v252, 4294901760
  %254 = vmatpush.msra.mxu0 %v253
  %v255 = vand.u32 %v59, 4294901760
  %v256 = vsub.f32 %v59, %v255
  %v257 = vand.u32 %v256, 4294901760
  %v258 = vsub.f32 %v256, %v257
  %v259 = vand.u32 %v258, 4294901760
  %260 = vmatpush.msra.mxu0 %v259
  %v261 = vand.u32 %v58, 4294901760
  %v262 = vsub.f32 %v58, %v261
  %v263 = vand.u32 %v262, 4294901760
  %v264 = vsub.f32 %v262, %v263
  %v265 = vand.u32 %v264, 4294901760
  %266 = vmatpush.msra.mxu0 %v265
  %v267 = vand.u32 %v143, 4294901760
  %268 = vmatmul.f32.gmra.mxu0 %v267
  %v269 = vpop.f32.mrf.mxu0
  %v270 = vadd.f32 %v185, %v269
  %v271 = vand.u32 %v146, 4294901760
  %272 = vmatmul.f32.gmra.mxu0 %v271
  %v273 = vpop.f32.mrf.mxu0
  %v274 = vadd.f32 %v193, %v273
  %v275 = vand.u32 %v149, 4294901760
  %276 = vmatmul.f32.gmra.mxu0 %v275
  %v277 = vpop.f32.mrf.mxu0
  %v278 = vadd.f32 %v201, %v277
  %v279 = vand.u32 %v152, 4294901760
  %280 = vmatmul.f32.gmra.mxu0 %v279
  %v281 = vpop.f32.mrf.mxu0
  %v282 = vadd.f32 %v209, %v281
  %283 = vdwg.mxu0
  %284 = vmatpush.msra.mxu0 0.0
  %285 = vmatpush.msra.mxu0 0.0
  %286 = vmatpush.msra.mxu0 0.0
  %287 = vmatpush.msra.mxu0 0.0
  %288 = vmatpush.msra.mxu0 0.0
  %289 = vmatpush.msra.mxu0 0.0
  %290 = vmatpush.msra.mxu0 0.0
  %291 = vmatpush.msra.mxu0 0.0
  %v292 = vand.u32 %v65, 4294901760
  %v293 = vsub.f32 %v65, %v292
  %294 = vmatpush.msra.mxu0 %v293
  %v295 = vand.u32 %v64, 4294901760
  %v296 = vsub.f32 %v64, %v295
  %297 = vmatpush.msra.mxu0 %v296
  %v298 = vand.u32 %v63, 4294901760
  %v299 = vsub.f32 %v63, %v298
  %300 = vmatpush.msra.mxu0 %v299
  %v301 = vand.u32 %v62, 4294901760
  %v302 = vsub.f32 %v62, %v301
  %303 = vmatpush.msra.mxu0 %v302
  %v304 = vand.u32 %v61, 4294901760
  %v305 = vsub.f32 %v61, %v304
  %306 = vmatpush.msra.mxu0 %v305
  %v307 = vand.u32 %v60, 4294901760
  %v308 = vsub.f32 %v60, %v307
  %309 = vmatpush.msra.mxu0 %v308
  %v310 = vand.u32 %v59, 4294901760
  %v311 = vsub.f32 %v59, %v310
  %312 = vmatpush.msra.mxu0 %v311
  %v313 = vand.u32 %v58, 4294901760
  %v314 = vsub.f32 %v58, %v313
  %315 = vmatpush.msra.mxu0 %v314
  %v316 = vand.u32 %v143, 4294901760
  %v317 = vsub.f32 %v143, %v316
  %318 = vmatmul.f32.gmra.mxu0 %v317
  %v319 = vpop.f32.mrf.mxu0
  %v320 = vadd.f32 %v270, %v319
  %v321 = vand.u32 %v146, 4294901760
  %v322 = vsub.f32 %v146, %v321
  %323 = vmatmul.f32.gmra.mxu0 %v322
  %v324 = vpop.f32.mrf.mxu0
  %v325 = vadd.f32 %v274, %v324
  %v326 = vand.u32 %v149, 4294901760
  %v327 = vsub.f32 %v149, %v326
  %328 = vmatmul.f32.gmra.mxu0 %v327
  %v329 = vpop.f32.mrf.mxu0
  %v330 = vadd.f32 %v278, %v329
  %v331 = vand.u32 %v152, 4294901760
  %v332 = vsub.f32 %v152, %v331
  %333 = vmatmul.f32.gmra.mxu0 %v332
  %v334 = vpop.f32.mrf.mxu0
  %v335 = vadd.f32 %v282, %v334
  %336 = vdwg.mxu0
  %337 = vmatpush.msra.mxu0 0.0
  %338 = vmatpush.msra.mxu0 0.0
  %339 = vmatpush.msra.mxu0 0.0
  %340 = vmatpush.msra.mxu0 0.0
  %341 = vmatpush.msra.mxu0 0.0
  %342 = vmatpush.msra.mxu0 0.0
  %343 = vmatpush.msra.mxu0 0.0
  %344 = vmatpush.msra.mxu0 0.0
  %v345 = vand.u32 %v65, 4294901760
  %346 = vmatpush.msra.mxu0 %v345
  %v347 = vand.u32 %v64, 4294901760
  %348 = vmatpush.msra.mxu0 %v347
  %v349 = vand.u32 %v63, 4294901760
  %350 = vmatpush.msra.mxu0 %v349
  %v351 = vand.u32 %v62, 4294901760
  %352 = vmatpush.msra.mxu0 %v351
  %v353 = vand.u32 %v61, 4294901760
  %354 = vmatpush.msra.mxu0 %v353
  %v355 = vand.u32 %v60, 4294901760
  %356 = vmatpush.msra.mxu0 %v355
  %v357 = vand.u32 %v59, 4294901760
  %358 = vmatpush.msra.mxu0 %v357
  %v359 = vand.u32 %v58, 4294901760
  %360 = vmatpush.msra.mxu0 %v359
  %v361 = vand.u32 %v143, 4294901760
  %v362 = vsub.f32 %v143, %v361
  %v363 = vand.u32 %v362, 4294901760
  %364 = vmatmul.f32.gmra.mxu0 %v363
  %v365 = vpop.f32.mrf.mxu0
  %v366 = vadd.f32 %v320, %v365
  %v367 = vand.u32 %v146, 4294901760
  %v368 = vsub.f32 %v146, %v367
  %v369 = vand.u32 %v368, 4294901760
  %370 = vmatmul.f32.gmra.mxu0 %v369
  %v371 = vpop.f32.mrf.mxu0
  %v372 = vadd.f32 %v325, %v371
  %v373 = vand.u32 %v149, 4294901760
  %v374 = vsub.f32 %v149, %v373
  %v375 = vand.u32 %v374, 4294901760
  %376 = vmatmul.f32.gmra.mxu0 %v375
  %v377 = vpop.f32.mrf.mxu0
  %v378 = vadd.f32 %v330, %v377
  %v379 = vand.u32 %v152, 4294901760
  %v380 = vsub.f32 %v152, %v379
  %v381 = vand.u32 %v380, 4294901760
  %382 = vmatmul.f32.gmra.mxu0 %v381
  %v383 = vpop.f32.mrf.mxu0
  %v384 = vadd.f32 %v335, %v383
  %385 = vdwg.mxu0
  %386 = vmatpush.msra.mxu0 0.0
  %387 = vmatpush.msra.mxu0 0.0
  %388 = vmatpush.msra.mxu0 0.0
  %389 = vmatpush.msra.mxu0 0.0
  %390 = vmatpush.msra.mxu0 0.0
  %391 = vmatpush.msra.mxu0 0.0
  %392 = vmatpush.msra.mxu0 0.0
  %393 = vmatpush.msra.mxu0 0.0
  %v394 = vand.u32 %v65, 4294901760
  %v395 = vsub.f32 %v65, %v394
  %v396 = vand.u32 %v395, 4294901760
  %397 = vmatpush.msra.mxu0 %v396
  %v398 = vand.u32 %v64, 4294901760
  %v399 = vsub.f32 %v64, %v398
  %v400 = vand.u32 %v399, 4294901760
  %401 = vmatpush.msra.mxu0 %v400
  %v402 = vand.u32 %v63, 4294901760
  %v403 = vsub.f32 %v63, %v402
  %v404 = vand.u32 %v403, 4294901760
  %405 = vmatpush.msra.mxu0 %v404
  %v406 = vand.u32 %v62, 4294901760
  %v407 = vsub.f32 %v62, %v406
  %v408 = vand.u32 %v407, 4294901760
  %409 = vmatpush.msra.mxu0 %v408
  %v410 = vand.u32 %v61, 4294901760
  %v411 = vsub.f32 %v61, %v410
  %v412 = vand.u32 %v411, 4294901760
  %413 = vmatpush.msra.mxu0 %v412
  %v414 = vand.u32 %v60, 4294901760
  %v415 = vsub.f32 %v60, %v414
  %v416 = vand.u32 %v415, 4294901760
  %417 = vmatpush.msra.mxu0 %v416
  %v418 = vand.u32 %v59, 4294901760
  %v419 = vsub.f32 %v59, %v418
  %v420 = vand.u32 %v419, 4294901760
  %421 = vmatpush.msra.mxu0 %v420
  %v422 = vand.u32 %v58, 4294901760
  %v423 = vsub.f32 %v58, %v422
  %v424 = vand.u32 %v423, 4294901760
  %425 = vmatpush.msra.mxu0 %v424
  %v426 = vand.u32 %v143, 4294901760
  %427 = vmatmul.f32.gmra.mxu0 %v426
  %v428 = vpop.f32.mrf.mxu0
  %v429 = vadd.f32 %v366, %v428
  %v430 = vand.u32 %v146, 4294901760
  %431 = vmatmul.f32.gmra.mxu0 %v430
  %v432 = vpop.f32.mrf.mxu0
  %v433 = vadd.f32 %v372, %v432
  %v434 = vand.u32 %v149, 4294901760
  %435 = vmatmul.f32.gmra.mxu0 %v434
  %v436 = vpop.f32.mrf.mxu0
  %v437 = vadd.f32 %v378, %v436
  %v438 = vand.u32 %v152, 4294901760
  %439 = vmatmul.f32.gmra.mxu0 %v438
  %v440 = vpop.f32.mrf.mxu0
  %v441 = vadd.f32 %v384, %v440
  %442 = vdwg.mxu0
  %443 = vmatpush.msra.mxu0 0.0
  %444 = vmatpush.msra.mxu0 0.0
  %445 = vmatpush.msra.mxu0 0.0
  %446 = vmatpush.msra.mxu0 0.0
  %447 = vmatpush.msra.mxu0 0.0
  %448 = vmatpush.msra.mxu0 0.0
  %449 = vmatpush.msra.mxu0 0.0
  %450 = vmatpush.msra.mxu0 0.0
  %v451 = vand.u32 %v65, 4294901760
  %452 = vmatpush.msra.mxu0 %v451
  %v453 = vand.u32 %v64, 4294901760
  %454 = vmatpush.msra.mxu0 %v453
  %v455 = vand.u32 %v63, 4294901760
  %456 = vmatpush.msra.mxu0 %v455
  %v457 = vand.u32 %v62, 4294901760
  %458 = vmatpush.msra.mxu0 %v457
  %v459 = vand.u32 %v61, 4294901760
  %460 = vmatpush.msra.mxu0 %v459
  %v461 = vand.u32 %v60, 4294901760
  %462 = vmatpush.msra.mxu0 %v461
  %v463 = vand.u32 %v59, 4294901760
  %464 = vmatpush.msra.mxu0 %v463
  %v465 = vand.u32 %v58, 4294901760
  %466 = vmatpush.msra.mxu0 %v465
  %v467 = vand.u32 %v143, 4294901760
  %468 = vmatmul.f32.gmra.mxu0 %v467
  %v469 = vpop.f32.mrf.mxu0
  %v470 = vadd.f32 %v429, %v469
  %v471 = vand.u32 %v146, 4294901760
  %472 = vmatmul.f32.gmra.mxu0 %v471
  %v473 = vpop.f32.mrf.mxu0
  %v474 = vadd.f32 %v433, %v473
  %v475 = vand.u32 %v149, 4294901760
  %476 = vmatmul.f32.gmra.mxu0 %v475
  %v477 = vpop.f32.mrf.mxu0
  %v478 = vadd.f32 %v437, %v477
  %v479 = vand.u32 %v152, 4294901760
  %480 = vmatmul.f32.gmra.mxu0 %v479
  %v481 = vpop.f32.mrf.mxu0
  %v482 = vadd.f32 %v441, %v481
  %483 = vdwg.mxu0
  %488 = vrot.lane.b32.xlu0 %v470, 108
  %v489 = vpop.permute.xlu0 %488
  %490 = vrot.lane.b32.xlu0 %v474, 108
  %v491 = vpop.permute.xlu0 %490
  %492 = vrot.lane.b32.xlu0 %v478, 108
  %v493 = vpop.permute.xlu0 %492
  %494 = vrot.lane.b32.xlu0 %v482, 108
  %v495 = vpop.permute.xlu0 %494
  %500 = vrot.lane.b32.xlu0 %v470, 20
  %v501 = vpop.permute.xlu0 %500
  %502 = vrot.lane.b32.xlu0 %v474, 20
  %v503 = vpop.permute.xlu0 %502
  %504 = vrot.lane.b32.xlu0 %v478, 20
  %v505 = vpop.permute.xlu0 %504
  %506 = vrot.lane.b32.xlu0 %v482, 20
  %v507 = vpop.permute.xlu0 %506
  %vm512 = vcmask 162816
  %v513 = vsel %vm512, %v489, %v501
  %v514 = vsel %vm512, %v491, %v503
  %v515 = vsel %vm512, %v493, %v505
  %v516 = vsel %vm512, %v495, %v507
  %v517 = vmul.f32 %v470, %v30
  %v518 = vmul.f32 %v474, %v31
  %v519 = vmul.f32 %v478, %v32
  %v520 = vmul.f32 %v482, %v33
  %v521 = vmul.f32 %v513, %v34
  %v522 = vmul.f32 %v514, %v35
  %v523 = vmul.f32 %v515, %v36
  %v524 = vmul.f32 %v516, %v37
  %v525 = vadd.f32 %v517, %v521
  %v526 = vadd.f32 %v518, %v522
  %v527 = vadd.f32 %v519, %v523
  %v528 = vadd.f32 %v520, %v524
  %vm529 = vcmp.gt.f32.partialorder %v525, 0.01
  %vm530 = vcmp.gt.f32.partialorder %v526, 0.01
  %vm531 = vcmp.gt.f32.partialorder %v527, 0.01
  %vm532 = vcmp.gt.f32.partialorder %v528, 0.01
  %v533 = vsub.f32 %v525, 0.01
  %v534 = vsub.f32 %v526, 0.01
  %v535 = vsub.f32 %v527, 0.01
  %v536 = vsub.f32 %v528, 0.01
  %vm537 = vcmp.lt.f32.partialorder %v525, -0.01
  %vm538 = vcmp.lt.f32.partialorder %v526, -0.01
  %vm539 = vcmp.lt.f32.partialorder %v527, -0.01
  %vm540 = vcmp.lt.f32.partialorder %v528, -0.01
  %v541 = vadd.f32 %v525, 0.01
  %v542 = vadd.f32 %v526, 0.01
  %v543 = vadd.f32 %v527, 0.01
  %v544 = vadd.f32 %v528, 0.01
  %v545 = vsel %vm537, %v541, 0.0
  %v546 = vsel %vm538, %v542, 0.0
  %v547 = vsel %vm539, %v543, 0.0
  %v548 = vsel %vm540, %v544, 0.0
  %v549 = vsel %vm529, %v533, %v545
  %v550 = vsel %vm530, %v534, %v546
  %v551 = vsel %vm531, %v535, %v547
  %v552 = vsel %vm532, %v536, %v548
  %vm553 = vcmask 326656
  %v555 = vsel %vm553, %v549, 0
  %v558 = vsel %vm553, %v550, 0
  %v561 = vsel %vm553, %v551, 0
  %v564 = vsel %vm553, %v552, 0
  %566 = vmatpush.msra.mxu0 0.0
  %567 = vmatpush.msra.mxu0 0.0
  %568 = vmatpush.msra.mxu0 0.0
  %569 = vmatpush.msra.mxu0 0.0
  %570 = vmatpush.msra.mxu0 0.0
  %571 = vmatpush.msra.mxu0 0.0
  %572 = vmatpush.msra.mxu0 0.0
  %573 = vmatpush.msra.mxu0 0.0
  %574 = vmatpush.msra.mxu0 0.0
  %575 = vmatpush.msra.mxu0 0.0
  %576 = vmatpush.msra.mxu0 0.0
  %v577 = vand.u32 %v52, 4294901760
  %578 = vmatpush.msra.mxu0 %v577
  %v579 = vand.u32 %v51, 4294901760
  %580 = vmatpush.msra.mxu0 %v579
  %v581 = vand.u32 %v50, 4294901760
  %582 = vmatpush.msra.mxu0 %v581
  %v583 = vand.u32 %v49, 4294901760
  %584 = vmatpush.msra.mxu0 %v583
  %v585 = vand.u32 %v48, 4294901760
  %586 = vmatpush.msra.mxu0 %v585
  %v587 = vand.u32 %v555, 4294901760
  %v588 = vsub.f32 %v555, %v587
  %v589 = vand.u32 %v588, 4294901760
  %v590 = vsub.f32 %v588, %v589
  %v591 = vand.u32 %v590, 4294901760
  %592 = vmatmul.f32.gmra.mxu0 %v591
  %v593 = vpop.f32.mrf.mxu0
  %v594 = vadd.f32 0.0, %v593
  %v595 = vand.u32 %v558, 4294901760
  %v596 = vsub.f32 %v558, %v595
  %v597 = vand.u32 %v596, 4294901760
  %v598 = vsub.f32 %v596, %v597
  %v599 = vand.u32 %v598, 4294901760
  %600 = vmatmul.f32.gmra.mxu0 %v599
  %v601 = vpop.f32.mrf.mxu0
  %v602 = vadd.f32 0.0, %v601
  %v603 = vand.u32 %v561, 4294901760
  %v604 = vsub.f32 %v561, %v603
  %v605 = vand.u32 %v604, 4294901760
  %v606 = vsub.f32 %v604, %v605
  %v607 = vand.u32 %v606, 4294901760
  %608 = vmatmul.f32.gmra.mxu0 %v607
  %v609 = vpop.f32.mrf.mxu0
  %v610 = vadd.f32 0.0, %v609
  %v611 = vand.u32 %v564, 4294901760
  %v612 = vsub.f32 %v564, %v611
  %v613 = vand.u32 %v612, 4294901760
  %v614 = vsub.f32 %v612, %v613
  %v615 = vand.u32 %v614, 4294901760
  %616 = vmatmul.f32.gmra.mxu0 %v615
  %v617 = vpop.f32.mrf.mxu0
  %v618 = vadd.f32 0.0, %v617
  %619 = vdwg.mxu0
  %620 = vmatpush.msra.mxu0 0.0
  %621 = vmatpush.msra.mxu0 0.0
  %622 = vmatpush.msra.mxu0 0.0
  %623 = vmatpush.msra.mxu0 0.0
  %624 = vmatpush.msra.mxu0 0.0
  %625 = vmatpush.msra.mxu0 0.0
  %626 = vmatpush.msra.mxu0 0.0
  %627 = vmatpush.msra.mxu0 0.0
  %628 = vmatpush.msra.mxu0 0.0
  %629 = vmatpush.msra.mxu0 0.0
  %630 = vmatpush.msra.mxu0 0.0
  %v631 = vand.u32 %v52, 4294901760
  %v632 = vsub.f32 %v52, %v631
  %v633 = vand.u32 %v632, 4294901760
  %v634 = vsub.f32 %v632, %v633
  %v635 = vand.u32 %v634, 4294901760
  %636 = vmatpush.msra.mxu0 %v635
  %v637 = vand.u32 %v51, 4294901760
  %v638 = vsub.f32 %v51, %v637
  %v639 = vand.u32 %v638, 4294901760
  %v640 = vsub.f32 %v638, %v639
  %v641 = vand.u32 %v640, 4294901760
  %642 = vmatpush.msra.mxu0 %v641
  %v643 = vand.u32 %v50, 4294901760
  %v644 = vsub.f32 %v50, %v643
  %v645 = vand.u32 %v644, 4294901760
  %v646 = vsub.f32 %v644, %v645
  %v647 = vand.u32 %v646, 4294901760
  %648 = vmatpush.msra.mxu0 %v647
  %v649 = vand.u32 %v49, 4294901760
  %v650 = vsub.f32 %v49, %v649
  %v651 = vand.u32 %v650, 4294901760
  %v652 = vsub.f32 %v650, %v651
  %v653 = vand.u32 %v652, 4294901760
  %654 = vmatpush.msra.mxu0 %v653
  %v655 = vand.u32 %v48, 4294901760
  %v656 = vsub.f32 %v48, %v655
  %v657 = vand.u32 %v656, 4294901760
  %v658 = vsub.f32 %v656, %v657
  %v659 = vand.u32 %v658, 4294901760
  %660 = vmatpush.msra.mxu0 %v659
  %v661 = vand.u32 %v555, 4294901760
  %662 = vmatmul.f32.gmra.mxu0 %v661
  %v663 = vpop.f32.mrf.mxu0
  %v664 = vadd.f32 %v594, %v663
  %v665 = vand.u32 %v558, 4294901760
  %666 = vmatmul.f32.gmra.mxu0 %v665
  %v667 = vpop.f32.mrf.mxu0
  %v668 = vadd.f32 %v602, %v667
  %v669 = vand.u32 %v561, 4294901760
  %670 = vmatmul.f32.gmra.mxu0 %v669
  %v671 = vpop.f32.mrf.mxu0
  %v672 = vadd.f32 %v610, %v671
  %v673 = vand.u32 %v564, 4294901760
  %674 = vmatmul.f32.gmra.mxu0 %v673
  %v675 = vpop.f32.mrf.mxu0
  %v676 = vadd.f32 %v618, %v675
  %677 = vdwg.mxu0
  %678 = vmatpush.msra.mxu0 0.0
  %679 = vmatpush.msra.mxu0 0.0
  %680 = vmatpush.msra.mxu0 0.0
  %681 = vmatpush.msra.mxu0 0.0
  %682 = vmatpush.msra.mxu0 0.0
  %683 = vmatpush.msra.mxu0 0.0
  %684 = vmatpush.msra.mxu0 0.0
  %685 = vmatpush.msra.mxu0 0.0
  %686 = vmatpush.msra.mxu0 0.0
  %687 = vmatpush.msra.mxu0 0.0
  %688 = vmatpush.msra.mxu0 0.0
  %v689 = vand.u32 %v52, 4294901760
  %v690 = vsub.f32 %v52, %v689
  %691 = vmatpush.msra.mxu0 %v690
  %v692 = vand.u32 %v51, 4294901760
  %v693 = vsub.f32 %v51, %v692
  %694 = vmatpush.msra.mxu0 %v693
  %v695 = vand.u32 %v50, 4294901760
  %v696 = vsub.f32 %v50, %v695
  %697 = vmatpush.msra.mxu0 %v696
  %v698 = vand.u32 %v49, 4294901760
  %v699 = vsub.f32 %v49, %v698
  %700 = vmatpush.msra.mxu0 %v699
  %v701 = vand.u32 %v48, 4294901760
  %v702 = vsub.f32 %v48, %v701
  %703 = vmatpush.msra.mxu0 %v702
  %v704 = vand.u32 %v555, 4294901760
  %v705 = vsub.f32 %v555, %v704
  %706 = vmatmul.f32.gmra.mxu0 %v705
  %v707 = vpop.f32.mrf.mxu0
  %v708 = vadd.f32 %v664, %v707
  %v709 = vand.u32 %v558, 4294901760
  %v710 = vsub.f32 %v558, %v709
  %711 = vmatmul.f32.gmra.mxu0 %v710
  %v712 = vpop.f32.mrf.mxu0
  %v713 = vadd.f32 %v668, %v712
  %v714 = vand.u32 %v561, 4294901760
  %v715 = vsub.f32 %v561, %v714
  %716 = vmatmul.f32.gmra.mxu0 %v715
  %v717 = vpop.f32.mrf.mxu0
  %v718 = vadd.f32 %v672, %v717
  %v719 = vand.u32 %v564, 4294901760
  %v720 = vsub.f32 %v564, %v719
  %721 = vmatmul.f32.gmra.mxu0 %v720
  %v722 = vpop.f32.mrf.mxu0
  %v723 = vadd.f32 %v676, %v722
  %724 = vdwg.mxu0
  %725 = vmatpush.msra.mxu0 0.0
  %726 = vmatpush.msra.mxu0 0.0
  %727 = vmatpush.msra.mxu0 0.0
  %728 = vmatpush.msra.mxu0 0.0
  %729 = vmatpush.msra.mxu0 0.0
  %730 = vmatpush.msra.mxu0 0.0
  %731 = vmatpush.msra.mxu0 0.0
  %732 = vmatpush.msra.mxu0 0.0
  %733 = vmatpush.msra.mxu0 0.0
  %734 = vmatpush.msra.mxu0 0.0
  %735 = vmatpush.msra.mxu0 0.0
  %v736 = vand.u32 %v52, 4294901760
  %737 = vmatpush.msra.mxu0 %v736
  %v738 = vand.u32 %v51, 4294901760
  %739 = vmatpush.msra.mxu0 %v738
  %v740 = vand.u32 %v50, 4294901760
  %741 = vmatpush.msra.mxu0 %v740
  %v742 = vand.u32 %v49, 4294901760
  %743 = vmatpush.msra.mxu0 %v742
  %v744 = vand.u32 %v48, 4294901760
  %745 = vmatpush.msra.mxu0 %v744
  %v746 = vand.u32 %v555, 4294901760
  %v747 = vsub.f32 %v555, %v746
  %v748 = vand.u32 %v747, 4294901760
  %749 = vmatmul.f32.gmra.mxu0 %v748
  %v750 = vpop.f32.mrf.mxu0
  %v751 = vadd.f32 %v708, %v750
  %v752 = vand.u32 %v558, 4294901760
  %v753 = vsub.f32 %v558, %v752
  %v754 = vand.u32 %v753, 4294901760
  %755 = vmatmul.f32.gmra.mxu0 %v754
  %v756 = vpop.f32.mrf.mxu0
  %v757 = vadd.f32 %v713, %v756
  %v758 = vand.u32 %v561, 4294901760
  %v759 = vsub.f32 %v561, %v758
  %v760 = vand.u32 %v759, 4294901760
  %761 = vmatmul.f32.gmra.mxu0 %v760
  %v762 = vpop.f32.mrf.mxu0
  %v763 = vadd.f32 %v718, %v762
  %v764 = vand.u32 %v564, 4294901760
  %v765 = vsub.f32 %v564, %v764
  %v766 = vand.u32 %v765, 4294901760
  %767 = vmatmul.f32.gmra.mxu0 %v766
  %v768 = vpop.f32.mrf.mxu0
  %v769 = vadd.f32 %v723, %v768
  %770 = vdwg.mxu0
  %771 = vmatpush.msra.mxu0 0.0
  %772 = vmatpush.msra.mxu0 0.0
  %773 = vmatpush.msra.mxu0 0.0
  %774 = vmatpush.msra.mxu0 0.0
  %775 = vmatpush.msra.mxu0 0.0
  %776 = vmatpush.msra.mxu0 0.0
  %777 = vmatpush.msra.mxu0 0.0
  %778 = vmatpush.msra.mxu0 0.0
  %779 = vmatpush.msra.mxu0 0.0
  %780 = vmatpush.msra.mxu0 0.0
  %781 = vmatpush.msra.mxu0 0.0
  %v782 = vand.u32 %v52, 4294901760
  %v783 = vsub.f32 %v52, %v782
  %v784 = vand.u32 %v783, 4294901760
  %785 = vmatpush.msra.mxu0 %v784
  %v786 = vand.u32 %v51, 4294901760
  %v787 = vsub.f32 %v51, %v786
  %v788 = vand.u32 %v787, 4294901760
  %789 = vmatpush.msra.mxu0 %v788
  %v790 = vand.u32 %v50, 4294901760
  %v791 = vsub.f32 %v50, %v790
  %v792 = vand.u32 %v791, 4294901760
  %793 = vmatpush.msra.mxu0 %v792
  %v794 = vand.u32 %v49, 4294901760
  %v795 = vsub.f32 %v49, %v794
  %v796 = vand.u32 %v795, 4294901760
  %797 = vmatpush.msra.mxu0 %v796
  %v798 = vand.u32 %v48, 4294901760
  %v799 = vsub.f32 %v48, %v798
  %v800 = vand.u32 %v799, 4294901760
  %801 = vmatpush.msra.mxu0 %v800
  %v802 = vand.u32 %v555, 4294901760
  %803 = vmatmul.f32.gmra.mxu0 %v802
  %v804 = vpop.f32.mrf.mxu0
  %v805 = vadd.f32 %v751, %v804
  %v806 = vand.u32 %v558, 4294901760
  %807 = vmatmul.f32.gmra.mxu0 %v806
  %v808 = vpop.f32.mrf.mxu0
  %v809 = vadd.f32 %v757, %v808
  %v810 = vand.u32 %v561, 4294901760
  %811 = vmatmul.f32.gmra.mxu0 %v810
  %v812 = vpop.f32.mrf.mxu0
  %v813 = vadd.f32 %v763, %v812
  %v814 = vand.u32 %v564, 4294901760
  %815 = vmatmul.f32.gmra.mxu0 %v814
  %v816 = vpop.f32.mrf.mxu0
  %v817 = vadd.f32 %v769, %v816
  %818 = vdwg.mxu0
  %819 = vmatpush.msra.mxu0 0.0
  %820 = vmatpush.msra.mxu0 0.0
  %821 = vmatpush.msra.mxu0 0.0
  %822 = vmatpush.msra.mxu0 0.0
  %823 = vmatpush.msra.mxu0 0.0
  %824 = vmatpush.msra.mxu0 0.0
  %825 = vmatpush.msra.mxu0 0.0
  %826 = vmatpush.msra.mxu0 0.0
  %827 = vmatpush.msra.mxu0 0.0
  %828 = vmatpush.msra.mxu0 0.0
  %829 = vmatpush.msra.mxu0 0.0
  %v830 = vand.u32 %v52, 4294901760
  %831 = vmatpush.msra.mxu0 %v830
  %v832 = vand.u32 %v51, 4294901760
  %833 = vmatpush.msra.mxu0 %v832
  %v834 = vand.u32 %v50, 4294901760
  %835 = vmatpush.msra.mxu0 %v834
  %v836 = vand.u32 %v49, 4294901760
  %837 = vmatpush.msra.mxu0 %v836
  %v838 = vand.u32 %v48, 4294901760
  %839 = vmatpush.msra.mxu0 %v838
  %v840 = vand.u32 %v555, 4294901760
  %841 = vmatmul.f32.gmra.mxu0 %v840
  %v842 = vpop.f32.mrf.mxu0
  %v843 = vadd.f32 %v805, %v842
  %v844 = vand.u32 %v558, 4294901760
  %845 = vmatmul.f32.gmra.mxu0 %v844
  %v846 = vpop.f32.mrf.mxu0
  %v847 = vadd.f32 %v809, %v846
  %v848 = vand.u32 %v561, 4294901760
  %849 = vmatmul.f32.gmra.mxu0 %v848
  %v850 = vpop.f32.mrf.mxu0
  %v851 = vadd.f32 %v813, %v850
  %v852 = vand.u32 %v564, 4294901760
  %853 = vmatmul.f32.gmra.mxu0 %v852
  %v854 = vpop.f32.mrf.mxu0
  %v855 = vadd.f32 %v817, %v854
  %856 = vdwg.mxu0
  %v858 = vsel %vm141, %v53, 0
  %v861 = vsel %vm141, %v54, 0
  %v864 = vsel %vm141, %v55, 0
  %v867 = vsel %vm141, %v56, 0
  %v870 = vsel %vm141, %v57, 0
  %872 = vmatpush.msra.mxu0 0.0
  %873 = vmatpush.msra.mxu0 0.0
  %874 = vmatpush.msra.mxu0 0.0
  %875 = vmatpush.msra.mxu0 0.0
  %876 = vmatpush.msra.mxu0 0.0
  %877 = vmatpush.msra.mxu0 0.0
  %878 = vmatpush.msra.mxu0 0.0
  %879 = vmatpush.msra.mxu0 0.0
  %v880 = vand.u32 %v25, 4294901760
  %881 = vmatpush.msra.mxu0 %v880
  %v882 = vand.u32 %v24, 4294901760
  %883 = vmatpush.msra.mxu0 %v882
  %v884 = vand.u32 %v23, 4294901760
  %885 = vmatpush.msra.mxu0 %v884
  %v886 = vand.u32 %v22, 4294901760
  %887 = vmatpush.msra.mxu0 %v886
  %v888 = vand.u32 %v21, 4294901760
  %889 = vmatpush.msra.mxu0 %v888
  %v890 = vand.u32 %v20, 4294901760
  %891 = vmatpush.msra.mxu0 %v890
  %v892 = vand.u32 %v19, 4294901760
  %893 = vmatpush.msra.mxu0 %v892
  %v894 = vand.u32 %v18, 4294901760
  %895 = vmatpush.msra.mxu0 %v894
  %v896 = vand.u32 %v858, 4294901760
  %v897 = vsub.f32 %v858, %v896
  %v898 = vand.u32 %v897, 4294901760
  %v899 = vsub.f32 %v897, %v898
  %v900 = vand.u32 %v899, 4294901760
  %901 = vmatmul.f32.gmra.mxu0 %v900
  %v902 = vpop.f32.mrf.mxu0
  %v903 = vadd.f32 0.0, %v902
  %v904 = vand.u32 %v861, 4294901760
  %v905 = vsub.f32 %v861, %v904
  %v906 = vand.u32 %v905, 4294901760
  %v907 = vsub.f32 %v905, %v906
  %v908 = vand.u32 %v907, 4294901760
  %909 = vmatmul.f32.gmra.mxu0 %v908
  %v910 = vpop.f32.mrf.mxu0
  %v911 = vadd.f32 0.0, %v910
  %v912 = vand.u32 %v864, 4294901760
  %v913 = vsub.f32 %v864, %v912
  %v914 = vand.u32 %v913, 4294901760
  %v915 = vsub.f32 %v913, %v914
  %v916 = vand.u32 %v915, 4294901760
  %917 = vmatmul.f32.gmra.mxu0 %v916
  %v918 = vpop.f32.mrf.mxu0
  %v919 = vadd.f32 0.0, %v918
  %v920 = vand.u32 %v867, 4294901760
  %v921 = vsub.f32 %v867, %v920
  %v922 = vand.u32 %v921, 4294901760
  %v923 = vsub.f32 %v921, %v922
  %v924 = vand.u32 %v923, 4294901760
  %925 = vmatmul.f32.gmra.mxu0 %v924
  %v926 = vpop.f32.mrf.mxu0
  %v927 = vadd.f32 0.0, %v926
  %v928 = vand.u32 %v870, 4294901760
  %v929 = vsub.f32 %v870, %v928
  %v930 = vand.u32 %v929, 4294901760
  %v931 = vsub.f32 %v929, %v930
  %v932 = vand.u32 %v931, 4294901760
  %933 = vmatmul.f32.gmra.mxu0 %v932
  %v934 = vpop.f32.mrf.mxu0
  %v935 = vadd.f32 0.0, %v934
  %936 = vdwg.mxu0
  %937 = vmatpush.msra.mxu0 0.0
  %938 = vmatpush.msra.mxu0 0.0
  %939 = vmatpush.msra.mxu0 0.0
  %940 = vmatpush.msra.mxu0 0.0
  %941 = vmatpush.msra.mxu0 0.0
  %942 = vmatpush.msra.mxu0 0.0
  %943 = vmatpush.msra.mxu0 0.0
  %944 = vmatpush.msra.mxu0 0.0
  %v945 = vand.u32 %v25, 4294901760
  %v946 = vsub.f32 %v25, %v945
  %v947 = vand.u32 %v946, 4294901760
  %v948 = vsub.f32 %v946, %v947
  %v949 = vand.u32 %v948, 4294901760
  %950 = vmatpush.msra.mxu0 %v949
  %v951 = vand.u32 %v24, 4294901760
  %v952 = vsub.f32 %v24, %v951
  %v953 = vand.u32 %v952, 4294901760
  %v954 = vsub.f32 %v952, %v953
  %v955 = vand.u32 %v954, 4294901760
  %956 = vmatpush.msra.mxu0 %v955
  %v957 = vand.u32 %v23, 4294901760
  %v958 = vsub.f32 %v23, %v957
  %v959 = vand.u32 %v958, 4294901760
  %v960 = vsub.f32 %v958, %v959
  %v961 = vand.u32 %v960, 4294901760
  %962 = vmatpush.msra.mxu0 %v961
  %v963 = vand.u32 %v22, 4294901760
  %v964 = vsub.f32 %v22, %v963
  %v965 = vand.u32 %v964, 4294901760
  %v966 = vsub.f32 %v964, %v965
  %v967 = vand.u32 %v966, 4294901760
  %968 = vmatpush.msra.mxu0 %v967
  %v969 = vand.u32 %v21, 4294901760
  %v970 = vsub.f32 %v21, %v969
  %v971 = vand.u32 %v970, 4294901760
  %v972 = vsub.f32 %v970, %v971
  %v973 = vand.u32 %v972, 4294901760
  %974 = vmatpush.msra.mxu0 %v973
  %v975 = vand.u32 %v20, 4294901760
  %v976 = vsub.f32 %v20, %v975
  %v977 = vand.u32 %v976, 4294901760
  %v978 = vsub.f32 %v976, %v977
  %v979 = vand.u32 %v978, 4294901760
  %980 = vmatpush.msra.mxu0 %v979
  %v981 = vand.u32 %v19, 4294901760
  %v982 = vsub.f32 %v19, %v981
  %v983 = vand.u32 %v982, 4294901760
  %v984 = vsub.f32 %v982, %v983
  %v985 = vand.u32 %v984, 4294901760
  %986 = vmatpush.msra.mxu0 %v985
  %v987 = vand.u32 %v18, 4294901760
  %v988 = vsub.f32 %v18, %v987
  %v989 = vand.u32 %v988, 4294901760
  %v990 = vsub.f32 %v988, %v989
  %v991 = vand.u32 %v990, 4294901760
  %992 = vmatpush.msra.mxu0 %v991
  %v993 = vand.u32 %v858, 4294901760
  %994 = vmatmul.f32.gmra.mxu0 %v993
  %v995 = vpop.f32.mrf.mxu0
  %v996 = vadd.f32 %v903, %v995
  %v997 = vand.u32 %v861, 4294901760
  %998 = vmatmul.f32.gmra.mxu0 %v997
  %v999 = vpop.f32.mrf.mxu0
  %v1000 = vadd.f32 %v911, %v999
  %v1001 = vand.u32 %v864, 4294901760
  %1002 = vmatmul.f32.gmra.mxu0 %v1001
  %v1003 = vpop.f32.mrf.mxu0
  %v1004 = vadd.f32 %v919, %v1003
  %v1005 = vand.u32 %v867, 4294901760
  %1006 = vmatmul.f32.gmra.mxu0 %v1005
  %v1007 = vpop.f32.mrf.mxu0
  %v1008 = vadd.f32 %v927, %v1007
  %v1009 = vand.u32 %v870, 4294901760
  %1010 = vmatmul.f32.gmra.mxu0 %v1009
  %v1011 = vpop.f32.mrf.mxu0
  %v1012 = vadd.f32 %v935, %v1011
  %1013 = vdwg.mxu0
  %1014 = vmatpush.msra.mxu0 0.0
  %1015 = vmatpush.msra.mxu0 0.0
  %1016 = vmatpush.msra.mxu0 0.0
  %1017 = vmatpush.msra.mxu0 0.0
  %1018 = vmatpush.msra.mxu0 0.0
  %1019 = vmatpush.msra.mxu0 0.0
  %1020 = vmatpush.msra.mxu0 0.0
  %1021 = vmatpush.msra.mxu0 0.0
  %v1022 = vand.u32 %v25, 4294901760
  %v1023 = vsub.f32 %v25, %v1022
  %1024 = vmatpush.msra.mxu0 %v1023
  %v1025 = vand.u32 %v24, 4294901760
  %v1026 = vsub.f32 %v24, %v1025
  %1027 = vmatpush.msra.mxu0 %v1026
  %v1028 = vand.u32 %v23, 4294901760
  %v1029 = vsub.f32 %v23, %v1028
  %1030 = vmatpush.msra.mxu0 %v1029
  %v1031 = vand.u32 %v22, 4294901760
  %v1032 = vsub.f32 %v22, %v1031
  %1033 = vmatpush.msra.mxu0 %v1032
  %v1034 = vand.u32 %v21, 4294901760
  %v1035 = vsub.f32 %v21, %v1034
  %1036 = vmatpush.msra.mxu0 %v1035
  %v1037 = vand.u32 %v20, 4294901760
  %v1038 = vsub.f32 %v20, %v1037
  %1039 = vmatpush.msra.mxu0 %v1038
  %v1040 = vand.u32 %v19, 4294901760
  %v1041 = vsub.f32 %v19, %v1040
  %1042 = vmatpush.msra.mxu0 %v1041
  %v1043 = vand.u32 %v18, 4294901760
  %v1044 = vsub.f32 %v18, %v1043
  %1045 = vmatpush.msra.mxu0 %v1044
  %v1046 = vand.u32 %v858, 4294901760
  %v1047 = vsub.f32 %v858, %v1046
  %1048 = vmatmul.f32.gmra.mxu0 %v1047
  %v1049 = vpop.f32.mrf.mxu0
  %v1050 = vadd.f32 %v996, %v1049
  %v1051 = vand.u32 %v861, 4294901760
  %v1052 = vsub.f32 %v861, %v1051
  %1053 = vmatmul.f32.gmra.mxu0 %v1052
  %v1054 = vpop.f32.mrf.mxu0
  %v1055 = vadd.f32 %v1000, %v1054
  %v1056 = vand.u32 %v864, 4294901760
  %v1057 = vsub.f32 %v864, %v1056
  %1058 = vmatmul.f32.gmra.mxu0 %v1057
  %v1059 = vpop.f32.mrf.mxu0
  %v1060 = vadd.f32 %v1004, %v1059
  %v1061 = vand.u32 %v867, 4294901760
  %v1062 = vsub.f32 %v867, %v1061
  %1063 = vmatmul.f32.gmra.mxu0 %v1062
  %v1064 = vpop.f32.mrf.mxu0
  %v1065 = vadd.f32 %v1008, %v1064
  %v1066 = vand.u32 %v870, 4294901760
  %v1067 = vsub.f32 %v870, %v1066
  %1068 = vmatmul.f32.gmra.mxu0 %v1067
  %v1069 = vpop.f32.mrf.mxu0
  %v1070 = vadd.f32 %v1012, %v1069
  %1071 = vdwg.mxu0
  %1072 = vmatpush.msra.mxu0 0.0
  %1073 = vmatpush.msra.mxu0 0.0
  %1074 = vmatpush.msra.mxu0 0.0
  %1075 = vmatpush.msra.mxu0 0.0
  %1076 = vmatpush.msra.mxu0 0.0
  %1077 = vmatpush.msra.mxu0 0.0
  %1078 = vmatpush.msra.mxu0 0.0
  %1079 = vmatpush.msra.mxu0 0.0
  %v1080 = vand.u32 %v25, 4294901760
  %1081 = vmatpush.msra.mxu0 %v1080
  %v1082 = vand.u32 %v24, 4294901760
  %1083 = vmatpush.msra.mxu0 %v1082
  %v1084 = vand.u32 %v23, 4294901760
  %1085 = vmatpush.msra.mxu0 %v1084
  %v1086 = vand.u32 %v22, 4294901760
  %1087 = vmatpush.msra.mxu0 %v1086
  %v1088 = vand.u32 %v21, 4294901760
  %1089 = vmatpush.msra.mxu0 %v1088
  %v1090 = vand.u32 %v20, 4294901760
  %1091 = vmatpush.msra.mxu0 %v1090
  %v1092 = vand.u32 %v19, 4294901760
  %1093 = vmatpush.msra.mxu0 %v1092
  %v1094 = vand.u32 %v18, 4294901760
  %1095 = vmatpush.msra.mxu0 %v1094
  %v1096 = vand.u32 %v858, 4294901760
  %v1097 = vsub.f32 %v858, %v1096
  %v1098 = vand.u32 %v1097, 4294901760
  %1099 = vmatmul.f32.gmra.mxu0 %v1098
  %v1100 = vpop.f32.mrf.mxu0
  %v1101 = vadd.f32 %v1050, %v1100
  %v1102 = vand.u32 %v861, 4294901760
  %v1103 = vsub.f32 %v861, %v1102
  %v1104 = vand.u32 %v1103, 4294901760
  %1105 = vmatmul.f32.gmra.mxu0 %v1104
  %v1106 = vpop.f32.mrf.mxu0
  %v1107 = vadd.f32 %v1055, %v1106
  %v1108 = vand.u32 %v864, 4294901760
  %v1109 = vsub.f32 %v864, %v1108
  %v1110 = vand.u32 %v1109, 4294901760
  %1111 = vmatmul.f32.gmra.mxu0 %v1110
  %v1112 = vpop.f32.mrf.mxu0
  %v1113 = vadd.f32 %v1060, %v1112
  %v1114 = vand.u32 %v867, 4294901760
  %v1115 = vsub.f32 %v867, %v1114
  %v1116 = vand.u32 %v1115, 4294901760
  %1117 = vmatmul.f32.gmra.mxu0 %v1116
  %v1118 = vpop.f32.mrf.mxu0
  %v1119 = vadd.f32 %v1065, %v1118
  %v1120 = vand.u32 %v870, 4294901760
  %v1121 = vsub.f32 %v870, %v1120
  %v1122 = vand.u32 %v1121, 4294901760
  %1123 = vmatmul.f32.gmra.mxu0 %v1122
  %v1124 = vpop.f32.mrf.mxu0
  %v1125 = vadd.f32 %v1070, %v1124
  %1126 = vdwg.mxu0
  %1127 = vmatpush.msra.mxu0 0.0
  %1128 = vmatpush.msra.mxu0 0.0
  %1129 = vmatpush.msra.mxu0 0.0
  %1130 = vmatpush.msra.mxu0 0.0
  %1131 = vmatpush.msra.mxu0 0.0
  %1132 = vmatpush.msra.mxu0 0.0
  %1133 = vmatpush.msra.mxu0 0.0
  %1134 = vmatpush.msra.mxu0 0.0
  %v1135 = vand.u32 %v25, 4294901760
  %v1136 = vsub.f32 %v25, %v1135
  %v1137 = vand.u32 %v1136, 4294901760
  %1138 = vmatpush.msra.mxu0 %v1137
  %v1139 = vand.u32 %v24, 4294901760
  %v1140 = vsub.f32 %v24, %v1139
  %v1141 = vand.u32 %v1140, 4294901760
  %1142 = vmatpush.msra.mxu0 %v1141
  %v1143 = vand.u32 %v23, 4294901760
  %v1144 = vsub.f32 %v23, %v1143
  %v1145 = vand.u32 %v1144, 4294901760
  %1146 = vmatpush.msra.mxu0 %v1145
  %v1147 = vand.u32 %v22, 4294901760
  %v1148 = vsub.f32 %v22, %v1147
  %v1149 = vand.u32 %v1148, 4294901760
  %1150 = vmatpush.msra.mxu0 %v1149
  %v1151 = vand.u32 %v21, 4294901760
  %v1152 = vsub.f32 %v21, %v1151
  %v1153 = vand.u32 %v1152, 4294901760
  %1154 = vmatpush.msra.mxu0 %v1153
  %v1155 = vand.u32 %v20, 4294901760
  %v1156 = vsub.f32 %v20, %v1155
  %v1157 = vand.u32 %v1156, 4294901760
  %1158 = vmatpush.msra.mxu0 %v1157
  %v1159 = vand.u32 %v19, 4294901760
  %v1160 = vsub.f32 %v19, %v1159
  %v1161 = vand.u32 %v1160, 4294901760
  %1162 = vmatpush.msra.mxu0 %v1161
  %v1163 = vand.u32 %v18, 4294901760
  %v1164 = vsub.f32 %v18, %v1163
  %v1165 = vand.u32 %v1164, 4294901760
  %1166 = vmatpush.msra.mxu0 %v1165
  %v1167 = vand.u32 %v858, 4294901760
  %1168 = vmatmul.f32.gmra.mxu0 %v1167
  %v1169 = vpop.f32.mrf.mxu0
  %v1170 = vadd.f32 %v1101, %v1169
  %v1171 = vand.u32 %v861, 4294901760
  %1172 = vmatmul.f32.gmra.mxu0 %v1171
  %v1173 = vpop.f32.mrf.mxu0
  %v1174 = vadd.f32 %v1107, %v1173
  %v1175 = vand.u32 %v864, 4294901760
  %1176 = vmatmul.f32.gmra.mxu0 %v1175
  %v1177 = vpop.f32.mrf.mxu0
  %v1178 = vadd.f32 %v1113, %v1177
  %v1179 = vand.u32 %v867, 4294901760
  %1180 = vmatmul.f32.gmra.mxu0 %v1179
  %v1181 = vpop.f32.mrf.mxu0
  %v1182 = vadd.f32 %v1119, %v1181
  %v1183 = vand.u32 %v870, 4294901760
  %1184 = vmatmul.f32.gmra.mxu0 %v1183
  %v1185 = vpop.f32.mrf.mxu0
  %v1186 = vadd.f32 %v1125, %v1185
  %1187 = vdwg.mxu0
  %1188 = vmatpush.msra.mxu0 0.0
  %1189 = vmatpush.msra.mxu0 0.0
  %1190 = vmatpush.msra.mxu0 0.0
  %1191 = vmatpush.msra.mxu0 0.0
  %1192 = vmatpush.msra.mxu0 0.0
  %1193 = vmatpush.msra.mxu0 0.0
  %1194 = vmatpush.msra.mxu0 0.0
  %1195 = vmatpush.msra.mxu0 0.0
  %v1196 = vand.u32 %v25, 4294901760
  %1197 = vmatpush.msra.mxu0 %v1196
  %v1198 = vand.u32 %v24, 4294901760
  %1199 = vmatpush.msra.mxu0 %v1198
  %v1200 = vand.u32 %v23, 4294901760
  %1201 = vmatpush.msra.mxu0 %v1200
  %v1202 = vand.u32 %v22, 4294901760
  %1203 = vmatpush.msra.mxu0 %v1202
  %v1204 = vand.u32 %v21, 4294901760
  %1205 = vmatpush.msra.mxu0 %v1204
  %v1206 = vand.u32 %v20, 4294901760
  %1207 = vmatpush.msra.mxu0 %v1206
  %v1208 = vand.u32 %v19, 4294901760
  %1209 = vmatpush.msra.mxu0 %v1208
  %v1210 = vand.u32 %v18, 4294901760
  %1211 = vmatpush.msra.mxu0 %v1210
  %v1212 = vand.u32 %v858, 4294901760
  %1213 = vmatmul.f32.gmra.mxu0 %v1212
  %v1214 = vpop.f32.mrf.mxu0
  %v1215 = vadd.f32 %v1170, %v1214
  %v1216 = vand.u32 %v861, 4294901760
  %1217 = vmatmul.f32.gmra.mxu0 %v1216
  %v1218 = vpop.f32.mrf.mxu0
  %v1219 = vadd.f32 %v1174, %v1218
  %v1220 = vand.u32 %v864, 4294901760
  %1221 = vmatmul.f32.gmra.mxu0 %v1220
  %v1222 = vpop.f32.mrf.mxu0
  %v1223 = vadd.f32 %v1178, %v1222
  %v1224 = vand.u32 %v867, 4294901760
  %1225 = vmatmul.f32.gmra.mxu0 %v1224
  %v1226 = vpop.f32.mrf.mxu0
  %v1227 = vadd.f32 %v1182, %v1226
  %v1228 = vand.u32 %v870, 4294901760
  %1229 = vmatmul.f32.gmra.mxu0 %v1228
  %v1230 = vpop.f32.mrf.mxu0
  %v1231 = vadd.f32 %v1186, %v1230
  %1232 = vdwg.mxu0
  %vm1236 = vcmask 1043456
  %v1237 = vrot.slane %v1223, 4
  %v1238 = vrot.slane %v1227, 4
  %v1239 = vsel %vm1236, %v1237, %v1238
  %v1240 = vrot.slane %v1231, 4
  %v1241 = vsel %vm1236, %v1238, %v1240
  %v1247 = vrot.slane %v1215, 4
  %v1248 = vrot.slane %v1219, 4
  %v1249 = vsel %vm1236, %v1247, %v1248
  %v1250 = vsel %vm1236, %v1248, %v1237
  %v1254 = vsel %vm1236, %v1240, %v1247
  %v1255 = vmul.f32 %v1215, %v38
  %v1256 = vmul.f32 %v1219, %v39
  %v1257 = vmul.f32 %v1223, %v40
  %v1258 = vmul.f32 %v1227, %v41
  %v1259 = vmul.f32 %v1231, %v42
  %v1260 = vmul.f32 %v1239, %v43
  %v1261 = vmul.f32 %v1241, %v44
  %v1262 = vmul.f32 %v1254, %v45
  %v1263 = vmul.f32 %v1249, %v46
  %v1264 = vmul.f32 %v1250, %v47
  %v1265 = vadd.f32 %v1255, %v1260
  %v1266 = vadd.f32 %v1256, %v1261
  %v1267 = vadd.f32 %v1257, %v1262
  %v1268 = vadd.f32 %v1258, %v1263
  %v1269 = vadd.f32 %v1259, %v1264
  %vm1270 = vcmp.gt.f32.partialorder %v1265, 0.01
  %vm1271 = vcmp.gt.f32.partialorder %v1266, 0.01
  %vm1272 = vcmp.gt.f32.partialorder %v1267, 0.01
  %vm1273 = vcmp.gt.f32.partialorder %v1268, 0.01
  %vm1274 = vcmp.gt.f32.partialorder %v1269, 0.01
  %v1275 = vsub.f32 %v1265, 0.01
  %v1276 = vsub.f32 %v1266, 0.01
  %v1277 = vsub.f32 %v1267, 0.01
  %v1278 = vsub.f32 %v1268, 0.01
  %v1279 = vsub.f32 %v1269, 0.01
  %vm1280 = vcmp.lt.f32.partialorder %v1265, -0.01
  %vm1281 = vcmp.lt.f32.partialorder %v1266, -0.01
  %vm1282 = vcmp.lt.f32.partialorder %v1267, -0.01
  %vm1283 = vcmp.lt.f32.partialorder %v1268, -0.01
  %vm1284 = vcmp.lt.f32.partialorder %v1269, -0.01
  %v1285 = vadd.f32 %v1265, 0.01
  %v1286 = vadd.f32 %v1266, 0.01
  %v1287 = vadd.f32 %v1267, 0.01
  %v1288 = vadd.f32 %v1268, 0.01
  %v1289 = vadd.f32 %v1269, 0.01
  %v1290 = vsel %vm1280, %v1285, 0.0
  %v1291 = vsel %vm1281, %v1286, 0.0
  %v1292 = vsel %vm1282, %v1287, 0.0
  %v1293 = vsel %vm1283, %v1288, 0.0
  %v1294 = vsel %vm1284, %v1289, 0.0
  %v1295 = vsel %vm1270, %v1275, %v1290
  %v1296 = vsel %vm1271, %v1276, %v1291
  %v1297 = vsel %vm1272, %v1277, %v1292
  %v1298 = vsel %vm1273, %v1278, %v1293
  %v1299 = vsel %vm1274, %v1279, %v1294
  %v1301 = vsel %vm553, %v66, 0
  %v1304 = vsel %vm553, %v67, 0
  %v1307 = vsel %vm553, %v68, 0
  %v1310 = vsel %vm553, %v69, 0
  %v1313 = vsel %vm553, %v70, 0
  %v1316 = vsel %vm553, %v71, 0
  %v1319 = vsel %vm553, %v72, 0
  %v1322 = vsel %vm553, %v73, 0
  %1324 = vmatpush.msra.mxu0 0.0
  %1325 = vmatpush.msra.mxu0 0.0
  %1326 = vmatpush.msra.mxu0 0.0
  %1327 = vmatpush.msra.mxu0 0.0
  %1328 = vmatpush.msra.mxu0 0.0
  %1329 = vmatpush.msra.mxu0 0.0
  %1330 = vmatpush.msra.mxu0 0.0
  %1331 = vmatpush.msra.mxu0 0.0
  %1332 = vmatpush.msra.mxu0 0.0
  %1333 = vmatpush.msra.mxu0 0.0
  %1334 = vmatpush.msra.mxu0 0.0
  %v1335 = vand.u32 %v1299, 4294901760
  %1336 = vmatpush.msra.mxu0 %v1335
  %v1337 = vand.u32 %v1298, 4294901760
  %1338 = vmatpush.msra.mxu0 %v1337
  %v1339 = vand.u32 %v1297, 4294901760
  %1340 = vmatpush.msra.mxu0 %v1339
  %v1341 = vand.u32 %v1296, 4294901760
  %1342 = vmatpush.msra.mxu0 %v1341
  %v1343 = vand.u32 %v1295, 4294901760
  %1344 = vmatpush.msra.mxu0 %v1343
  %v1345 = vand.u32 %v1301, 4294901760
  %v1346 = vsub.f32 %v1301, %v1345
  %v1347 = vand.u32 %v1346, 4294901760
  %v1348 = vsub.f32 %v1346, %v1347
  %v1349 = vand.u32 %v1348, 4294901760
  %1350 = vmatmul.f32.gmra.mxu0 %v1349
  %v1351 = vpop.f32.mrf.mxu0
  %v1352 = vadd.f32 0.0, %v1351
  %v1353 = vand.u32 %v1304, 4294901760
  %v1354 = vsub.f32 %v1304, %v1353
  %v1355 = vand.u32 %v1354, 4294901760
  %v1356 = vsub.f32 %v1354, %v1355
  %v1357 = vand.u32 %v1356, 4294901760
  %1358 = vmatmul.f32.gmra.mxu0 %v1357
  %v1359 = vpop.f32.mrf.mxu0
  %v1360 = vadd.f32 0.0, %v1359
  %v1361 = vand.u32 %v1307, 4294901760
  %v1362 = vsub.f32 %v1307, %v1361
  %v1363 = vand.u32 %v1362, 4294901760
  %v1364 = vsub.f32 %v1362, %v1363
  %v1365 = vand.u32 %v1364, 4294901760
  %1366 = vmatmul.f32.gmra.mxu0 %v1365
  %v1367 = vpop.f32.mrf.mxu0
  %v1368 = vadd.f32 0.0, %v1367
  %v1369 = vand.u32 %v1310, 4294901760
  %v1370 = vsub.f32 %v1310, %v1369
  %v1371 = vand.u32 %v1370, 4294901760
  %v1372 = vsub.f32 %v1370, %v1371
  %v1373 = vand.u32 %v1372, 4294901760
  %1374 = vmatmul.f32.gmra.mxu0 %v1373
  %v1375 = vpop.f32.mrf.mxu0
  %v1376 = vadd.f32 0.0, %v1375
  %v1377 = vand.u32 %v1313, 4294901760
  %v1378 = vsub.f32 %v1313, %v1377
  %v1379 = vand.u32 %v1378, 4294901760
  %v1380 = vsub.f32 %v1378, %v1379
  %v1381 = vand.u32 %v1380, 4294901760
  %1382 = vmatmul.f32.gmra.mxu0 %v1381
  %v1383 = vpop.f32.mrf.mxu0
  %v1384 = vadd.f32 0.0, %v1383
  %v1385 = vand.u32 %v1316, 4294901760
  %v1386 = vsub.f32 %v1316, %v1385
  %v1387 = vand.u32 %v1386, 4294901760
  %v1388 = vsub.f32 %v1386, %v1387
  %v1389 = vand.u32 %v1388, 4294901760
  %1390 = vmatmul.f32.gmra.mxu0 %v1389
  %v1391 = vpop.f32.mrf.mxu0
  %v1392 = vadd.f32 0.0, %v1391
  %v1393 = vand.u32 %v1319, 4294901760
  %v1394 = vsub.f32 %v1319, %v1393
  %v1395 = vand.u32 %v1394, 4294901760
  %v1396 = vsub.f32 %v1394, %v1395
  %v1397 = vand.u32 %v1396, 4294901760
  %1398 = vmatmul.f32.gmra.mxu0 %v1397
  %v1399 = vpop.f32.mrf.mxu0
  %v1400 = vadd.f32 0.0, %v1399
  %v1401 = vand.u32 %v1322, 4294901760
  %v1402 = vsub.f32 %v1322, %v1401
  %v1403 = vand.u32 %v1402, 4294901760
  %v1404 = vsub.f32 %v1402, %v1403
  %v1405 = vand.u32 %v1404, 4294901760
  %1406 = vmatmul.f32.gmra.mxu0 %v1405
  %v1407 = vpop.f32.mrf.mxu0
  %v1408 = vadd.f32 0.0, %v1407
  %1409 = vdwg.mxu0
  %1410 = vmatpush.msra.mxu0 0.0
  %1411 = vmatpush.msra.mxu0 0.0
  %1412 = vmatpush.msra.mxu0 0.0
  %1413 = vmatpush.msra.mxu0 0.0
  %1414 = vmatpush.msra.mxu0 0.0
  %1415 = vmatpush.msra.mxu0 0.0
  %1416 = vmatpush.msra.mxu0 0.0
  %1417 = vmatpush.msra.mxu0 0.0
  %1418 = vmatpush.msra.mxu0 0.0
  %1419 = vmatpush.msra.mxu0 0.0
  %1420 = vmatpush.msra.mxu0 0.0
  %v1421 = vand.u32 %v1299, 4294901760
  %v1422 = vsub.f32 %v1299, %v1421
  %v1423 = vand.u32 %v1422, 4294901760
  %v1424 = vsub.f32 %v1422, %v1423
  %v1425 = vand.u32 %v1424, 4294901760
  %1426 = vmatpush.msra.mxu0 %v1425
  %v1427 = vand.u32 %v1298, 4294901760
  %v1428 = vsub.f32 %v1298, %v1427
  %v1429 = vand.u32 %v1428, 4294901760
  %v1430 = vsub.f32 %v1428, %v1429
  %v1431 = vand.u32 %v1430, 4294901760
  %1432 = vmatpush.msra.mxu0 %v1431
  %v1433 = vand.u32 %v1297, 4294901760
  %v1434 = vsub.f32 %v1297, %v1433
  %v1435 = vand.u32 %v1434, 4294901760
  %v1436 = vsub.f32 %v1434, %v1435
  %v1437 = vand.u32 %v1436, 4294901760
  %1438 = vmatpush.msra.mxu0 %v1437
  %v1439 = vand.u32 %v1296, 4294901760
  %v1440 = vsub.f32 %v1296, %v1439
  %v1441 = vand.u32 %v1440, 4294901760
  %v1442 = vsub.f32 %v1440, %v1441
  %v1443 = vand.u32 %v1442, 4294901760
  %1444 = vmatpush.msra.mxu0 %v1443
  %v1445 = vand.u32 %v1295, 4294901760
  %v1446 = vsub.f32 %v1295, %v1445
  %v1447 = vand.u32 %v1446, 4294901760
  %v1448 = vsub.f32 %v1446, %v1447
  %v1449 = vand.u32 %v1448, 4294901760
  %1450 = vmatpush.msra.mxu0 %v1449
  %v1451 = vand.u32 %v1301, 4294901760
  %1452 = vmatmul.f32.gmra.mxu0 %v1451
  %v1453 = vpop.f32.mrf.mxu0
  %v1454 = vadd.f32 %v1352, %v1453
  %v1455 = vand.u32 %v1304, 4294901760
  %1456 = vmatmul.f32.gmra.mxu0 %v1455
  %v1457 = vpop.f32.mrf.mxu0
  %v1458 = vadd.f32 %v1360, %v1457
  %v1459 = vand.u32 %v1307, 4294901760
  %1460 = vmatmul.f32.gmra.mxu0 %v1459
  %v1461 = vpop.f32.mrf.mxu0
  %v1462 = vadd.f32 %v1368, %v1461
  %v1463 = vand.u32 %v1310, 4294901760
  %1464 = vmatmul.f32.gmra.mxu0 %v1463
  %v1465 = vpop.f32.mrf.mxu0
  %v1466 = vadd.f32 %v1376, %v1465
  %v1467 = vand.u32 %v1313, 4294901760
  %1468 = vmatmul.f32.gmra.mxu0 %v1467
  %v1469 = vpop.f32.mrf.mxu0
  %v1470 = vadd.f32 %v1384, %v1469
  %v1471 = vand.u32 %v1316, 4294901760
  %1472 = vmatmul.f32.gmra.mxu0 %v1471
  %v1473 = vpop.f32.mrf.mxu0
  %v1474 = vadd.f32 %v1392, %v1473
  %v1475 = vand.u32 %v1319, 4294901760
  %1476 = vmatmul.f32.gmra.mxu0 %v1475
  %v1477 = vpop.f32.mrf.mxu0
  %v1478 = vadd.f32 %v1400, %v1477
  %v1479 = vand.u32 %v1322, 4294901760
  %1480 = vmatmul.f32.gmra.mxu0 %v1479
  %v1481 = vpop.f32.mrf.mxu0
  %v1482 = vadd.f32 %v1408, %v1481
  %1483 = vdwg.mxu0
  %1484 = vmatpush.msra.mxu0 0.0
  %1485 = vmatpush.msra.mxu0 0.0
  %1486 = vmatpush.msra.mxu0 0.0
  %1487 = vmatpush.msra.mxu0 0.0
  %1488 = vmatpush.msra.mxu0 0.0
  %1489 = vmatpush.msra.mxu0 0.0
  %1490 = vmatpush.msra.mxu0 0.0
  %1491 = vmatpush.msra.mxu0 0.0
  %1492 = vmatpush.msra.mxu0 0.0
  %1493 = vmatpush.msra.mxu0 0.0
  %1494 = vmatpush.msra.mxu0 0.0
  %v1495 = vand.u32 %v1299, 4294901760
  %v1496 = vsub.f32 %v1299, %v1495
  %1497 = vmatpush.msra.mxu0 %v1496
  %v1498 = vand.u32 %v1298, 4294901760
  %v1499 = vsub.f32 %v1298, %v1498
  %1500 = vmatpush.msra.mxu0 %v1499
  %v1501 = vand.u32 %v1297, 4294901760
  %v1502 = vsub.f32 %v1297, %v1501
  %1503 = vmatpush.msra.mxu0 %v1502
  %v1504 = vand.u32 %v1296, 4294901760
  %v1505 = vsub.f32 %v1296, %v1504
  %1506 = vmatpush.msra.mxu0 %v1505
  %v1507 = vand.u32 %v1295, 4294901760
  %v1508 = vsub.f32 %v1295, %v1507
  %1509 = vmatpush.msra.mxu0 %v1508
  %v1510 = vand.u32 %v1301, 4294901760
  %v1511 = vsub.f32 %v1301, %v1510
  %1512 = vmatmul.f32.gmra.mxu0 %v1511
  %v1513 = vpop.f32.mrf.mxu0
  %v1514 = vadd.f32 %v1454, %v1513
  %v1515 = vand.u32 %v1304, 4294901760
  %v1516 = vsub.f32 %v1304, %v1515
  %1517 = vmatmul.f32.gmra.mxu0 %v1516
  %v1518 = vpop.f32.mrf.mxu0
  %v1519 = vadd.f32 %v1458, %v1518
  %v1520 = vand.u32 %v1307, 4294901760
  %v1521 = vsub.f32 %v1307, %v1520
  %1522 = vmatmul.f32.gmra.mxu0 %v1521
  %v1523 = vpop.f32.mrf.mxu0
  %v1524 = vadd.f32 %v1462, %v1523
  %v1525 = vand.u32 %v1310, 4294901760
  %v1526 = vsub.f32 %v1310, %v1525
  %1527 = vmatmul.f32.gmra.mxu0 %v1526
  %v1528 = vpop.f32.mrf.mxu0
  %v1529 = vadd.f32 %v1466, %v1528
  %v1530 = vand.u32 %v1313, 4294901760
  %v1531 = vsub.f32 %v1313, %v1530
  %1532 = vmatmul.f32.gmra.mxu0 %v1531
  %v1533 = vpop.f32.mrf.mxu0
  %v1534 = vadd.f32 %v1470, %v1533
  %v1535 = vand.u32 %v1316, 4294901760
  %v1536 = vsub.f32 %v1316, %v1535
  %1537 = vmatmul.f32.gmra.mxu0 %v1536
  %v1538 = vpop.f32.mrf.mxu0
  %v1539 = vadd.f32 %v1474, %v1538
  %v1540 = vand.u32 %v1319, 4294901760
  %v1541 = vsub.f32 %v1319, %v1540
  %1542 = vmatmul.f32.gmra.mxu0 %v1541
  %v1543 = vpop.f32.mrf.mxu0
  %v1544 = vadd.f32 %v1478, %v1543
  %v1545 = vand.u32 %v1322, 4294901760
  %v1546 = vsub.f32 %v1322, %v1545
  %1547 = vmatmul.f32.gmra.mxu0 %v1546
  %v1548 = vpop.f32.mrf.mxu0
  %v1549 = vadd.f32 %v1482, %v1548
  %1550 = vdwg.mxu0
  %1551 = vmatpush.msra.mxu0 0.0
  %1552 = vmatpush.msra.mxu0 0.0
  %1553 = vmatpush.msra.mxu0 0.0
  %1554 = vmatpush.msra.mxu0 0.0
  %1555 = vmatpush.msra.mxu0 0.0
  %1556 = vmatpush.msra.mxu0 0.0
  %1557 = vmatpush.msra.mxu0 0.0
  %1558 = vmatpush.msra.mxu0 0.0
  %1559 = vmatpush.msra.mxu0 0.0
  %1560 = vmatpush.msra.mxu0 0.0
  %1561 = vmatpush.msra.mxu0 0.0
  %v1562 = vand.u32 %v1299, 4294901760
  %1563 = vmatpush.msra.mxu0 %v1562
  %v1564 = vand.u32 %v1298, 4294901760
  %1565 = vmatpush.msra.mxu0 %v1564
  %v1566 = vand.u32 %v1297, 4294901760
  %1567 = vmatpush.msra.mxu0 %v1566
  %v1568 = vand.u32 %v1296, 4294901760
  %1569 = vmatpush.msra.mxu0 %v1568
  %v1570 = vand.u32 %v1295, 4294901760
  %1571 = vmatpush.msra.mxu0 %v1570
  %v1572 = vand.u32 %v1301, 4294901760
  %v1573 = vsub.f32 %v1301, %v1572
  %v1574 = vand.u32 %v1573, 4294901760
  %1575 = vmatmul.f32.gmra.mxu0 %v1574
  %v1576 = vpop.f32.mrf.mxu0
  %v1577 = vadd.f32 %v1514, %v1576
  %v1578 = vand.u32 %v1304, 4294901760
  %v1579 = vsub.f32 %v1304, %v1578
  %v1580 = vand.u32 %v1579, 4294901760
  %1581 = vmatmul.f32.gmra.mxu0 %v1580
  %v1582 = vpop.f32.mrf.mxu0
  %v1583 = vadd.f32 %v1519, %v1582
  %v1584 = vand.u32 %v1307, 4294901760
  %v1585 = vsub.f32 %v1307, %v1584
  %v1586 = vand.u32 %v1585, 4294901760
  %1587 = vmatmul.f32.gmra.mxu0 %v1586
  %v1588 = vpop.f32.mrf.mxu0
  %v1589 = vadd.f32 %v1524, %v1588
  %v1590 = vand.u32 %v1310, 4294901760
  %v1591 = vsub.f32 %v1310, %v1590
  %v1592 = vand.u32 %v1591, 4294901760
  %1593 = vmatmul.f32.gmra.mxu0 %v1592
  %v1594 = vpop.f32.mrf.mxu0
  %v1595 = vadd.f32 %v1529, %v1594
  %v1596 = vand.u32 %v1313, 4294901760
  %v1597 = vsub.f32 %v1313, %v1596
  %v1598 = vand.u32 %v1597, 4294901760
  %1599 = vmatmul.f32.gmra.mxu0 %v1598
  %v1600 = vpop.f32.mrf.mxu0
  %v1601 = vadd.f32 %v1534, %v1600
  %v1602 = vand.u32 %v1316, 4294901760
  %v1603 = vsub.f32 %v1316, %v1602
  %v1604 = vand.u32 %v1603, 4294901760
  %1605 = vmatmul.f32.gmra.mxu0 %v1604
  %v1606 = vpop.f32.mrf.mxu0
  %v1607 = vadd.f32 %v1539, %v1606
  %v1608 = vand.u32 %v1319, 4294901760
  %v1609 = vsub.f32 %v1319, %v1608
  %v1610 = vand.u32 %v1609, 4294901760
  %1611 = vmatmul.f32.gmra.mxu0 %v1610
  %v1612 = vpop.f32.mrf.mxu0
  %v1613 = vadd.f32 %v1544, %v1612
  %v1614 = vand.u32 %v1322, 4294901760
  %v1615 = vsub.f32 %v1322, %v1614
  %v1616 = vand.u32 %v1615, 4294901760
  %1617 = vmatmul.f32.gmra.mxu0 %v1616
  %v1618 = vpop.f32.mrf.mxu0
  %v1619 = vadd.f32 %v1549, %v1618
  %1620 = vdwg.mxu0
  %1621 = vmatpush.msra.mxu0 0.0
  %1622 = vmatpush.msra.mxu0 0.0
  %1623 = vmatpush.msra.mxu0 0.0
  %1624 = vmatpush.msra.mxu0 0.0
  %1625 = vmatpush.msra.mxu0 0.0
  %1626 = vmatpush.msra.mxu0 0.0
  %1627 = vmatpush.msra.mxu0 0.0
  %1628 = vmatpush.msra.mxu0 0.0
  %1629 = vmatpush.msra.mxu0 0.0
  %1630 = vmatpush.msra.mxu0 0.0
  %1631 = vmatpush.msra.mxu0 0.0
  %v1632 = vand.u32 %v1299, 4294901760
  %v1633 = vsub.f32 %v1299, %v1632
  %v1634 = vand.u32 %v1633, 4294901760
  %1635 = vmatpush.msra.mxu0 %v1634
  %v1636 = vand.u32 %v1298, 4294901760
  %v1637 = vsub.f32 %v1298, %v1636
  %v1638 = vand.u32 %v1637, 4294901760
  %1639 = vmatpush.msra.mxu0 %v1638
  %v1640 = vand.u32 %v1297, 4294901760
  %v1641 = vsub.f32 %v1297, %v1640
  %v1642 = vand.u32 %v1641, 4294901760
  %1643 = vmatpush.msra.mxu0 %v1642
  %v1644 = vand.u32 %v1296, 4294901760
  %v1645 = vsub.f32 %v1296, %v1644
  %v1646 = vand.u32 %v1645, 4294901760
  %1647 = vmatpush.msra.mxu0 %v1646
  %v1648 = vand.u32 %v1295, 4294901760
  %v1649 = vsub.f32 %v1295, %v1648
  %v1650 = vand.u32 %v1649, 4294901760
  %1651 = vmatpush.msra.mxu0 %v1650
  %v1652 = vand.u32 %v1301, 4294901760
  %1653 = vmatmul.f32.gmra.mxu0 %v1652
  %v1654 = vpop.f32.mrf.mxu0
  %v1655 = vadd.f32 %v1577, %v1654
  %v1656 = vand.u32 %v1304, 4294901760
  %1657 = vmatmul.f32.gmra.mxu0 %v1656
  %v1658 = vpop.f32.mrf.mxu0
  %v1659 = vadd.f32 %v1583, %v1658
  %v1660 = vand.u32 %v1307, 4294901760
  %1661 = vmatmul.f32.gmra.mxu0 %v1660
  %v1662 = vpop.f32.mrf.mxu0
  %v1663 = vadd.f32 %v1589, %v1662
  %v1664 = vand.u32 %v1310, 4294901760
  %1665 = vmatmul.f32.gmra.mxu0 %v1664
  %v1666 = vpop.f32.mrf.mxu0
  %v1667 = vadd.f32 %v1595, %v1666
  %v1668 = vand.u32 %v1313, 4294901760
  %1669 = vmatmul.f32.gmra.mxu0 %v1668
  %v1670 = vpop.f32.mrf.mxu0
  %v1671 = vadd.f32 %v1601, %v1670
  %v1672 = vand.u32 %v1316, 4294901760
  %1673 = vmatmul.f32.gmra.mxu0 %v1672
  %v1674 = vpop.f32.mrf.mxu0
  %v1675 = vadd.f32 %v1607, %v1674
  %v1676 = vand.u32 %v1319, 4294901760
  %1677 = vmatmul.f32.gmra.mxu0 %v1676
  %v1678 = vpop.f32.mrf.mxu0
  %v1679 = vadd.f32 %v1613, %v1678
  %v1680 = vand.u32 %v1322, 4294901760
  %1681 = vmatmul.f32.gmra.mxu0 %v1680
  %v1682 = vpop.f32.mrf.mxu0
  %v1683 = vadd.f32 %v1619, %v1682
  %1684 = vdwg.mxu0
  %1685 = vmatpush.msra.mxu0 0.0
  %1686 = vmatpush.msra.mxu0 0.0
  %1687 = vmatpush.msra.mxu0 0.0
  %1688 = vmatpush.msra.mxu0 0.0
  %1689 = vmatpush.msra.mxu0 0.0
  %1690 = vmatpush.msra.mxu0 0.0
  %1691 = vmatpush.msra.mxu0 0.0
  %1692 = vmatpush.msra.mxu0 0.0
  %1693 = vmatpush.msra.mxu0 0.0
  %1694 = vmatpush.msra.mxu0 0.0
  %1695 = vmatpush.msra.mxu0 0.0
  %v1696 = vand.u32 %v1299, 4294901760
  %1697 = vmatpush.msra.mxu0 %v1696
  %v1698 = vand.u32 %v1298, 4294901760
  %1699 = vmatpush.msra.mxu0 %v1698
  %v1700 = vand.u32 %v1297, 4294901760
  %1701 = vmatpush.msra.mxu0 %v1700
  %v1702 = vand.u32 %v1296, 4294901760
  %1703 = vmatpush.msra.mxu0 %v1702
  %v1704 = vand.u32 %v1295, 4294901760
  %1705 = vmatpush.msra.mxu0 %v1704
  %v1706 = vand.u32 %v1301, 4294901760
  %1707 = vmatmul.f32.gmra.mxu0 %v1706
  %v1708 = vpop.f32.mrf.mxu0
  %v1709 = vadd.f32 %v1655, %v1708
  %v1710 = vand.u32 %v1304, 4294901760
  %1711 = vmatmul.f32.gmra.mxu0 %v1710
  %v1712 = vpop.f32.mrf.mxu0
  %v1713 = vadd.f32 %v1659, %v1712
  %v1714 = vand.u32 %v1307, 4294901760
  %1715 = vmatmul.f32.gmra.mxu0 %v1714
  %v1716 = vpop.f32.mrf.mxu0
  %v1717 = vadd.f32 %v1663, %v1716
  %v1718 = vand.u32 %v1310, 4294901760
  %1719 = vmatmul.f32.gmra.mxu0 %v1718
  %v1720 = vpop.f32.mrf.mxu0
  %v1721 = vadd.f32 %v1667, %v1720
  %v1722 = vand.u32 %v1313, 4294901760
  %1723 = vmatmul.f32.gmra.mxu0 %v1722
  %v1724 = vpop.f32.mrf.mxu0
  %v1725 = vadd.f32 %v1671, %v1724
  %v1726 = vand.u32 %v1316, 4294901760
  %1727 = vmatmul.f32.gmra.mxu0 %v1726
  %v1728 = vpop.f32.mrf.mxu0
  %v1729 = vadd.f32 %v1675, %v1728
  %v1730 = vand.u32 %v1319, 4294901760
  %1731 = vmatmul.f32.gmra.mxu0 %v1730
  %v1732 = vpop.f32.mrf.mxu0
  %v1733 = vadd.f32 %v1679, %v1732
  %v1734 = vand.u32 %v1322, 4294901760
  %1735 = vmatmul.f32.gmra.mxu0 %v1734
  %v1736 = vpop.f32.mrf.mxu0
  %v1737 = vadd.f32 %v1683, %v1736
  %1738 = vdwg.mxu0
  %1741 = vrot.lane.b32.xlu0 %v1717, 16
  %v1742 = vpop.permute.xlu0 %1741
  %1743 = vrot.lane.b32.xlu0 %v1721, 16
  %v1744 = vpop.permute.xlu0 %1743
  %1749 = vrot.lane.b32.xlu0 %v1725, 32
  %v1750 = vpop.permute.xlu0 %1749
  %1751 = vrot.lane.b32.xlu0 %v1729, 32
  %v1752 = vpop.permute.xlu0 %1751
  %1757 = vrot.lane.b32.xlu0 %v1733, 48
  %v1758 = vpop.permute.xlu0 %1757
  %1759 = vrot.lane.b32.xlu0 %v1737, 48
  %v1760 = vpop.permute.xlu0 %1759
  %vm1763 = vcmask 130048
  %v1764 = vsel %vm1763, %v1709, %v1742
  %v1765 = vsel %vm1763, %v1713, %v1744
  %vm1766 = vcmask 261120
  %v1767 = vsel %vm1766, %v1764, %v1750
  %v1768 = vsel %vm1766, %v1765, %v1752
  %vm1769 = vcmask 392192
  %v1770 = vsel %vm1769, %v1767, %v1758
  %v1771 = vsel %vm1769, %v1768, %v1760
  %1774 = vrot.lane.b32.xlu0 %v1709, 112
  %v1775 = vpop.permute.xlu0 %1774
  %1776 = vrot.lane.b32.xlu0 %v1713, 112
  %v1777 = vpop.permute.xlu0 %1776
  %1780 = vrot.lane.b32.xlu0 %v1725, 16
  %v1781 = vpop.permute.xlu0 %1780
  %1782 = vrot.lane.b32.xlu0 %v1729, 16
  %v1783 = vpop.permute.xlu0 %1782
  %1786 = vrot.lane.b32.xlu0 %v1733, 32
  %v1787 = vpop.permute.xlu0 %1786
  %1788 = vrot.lane.b32.xlu0 %v1737, 32
  %v1789 = vpop.permute.xlu0 %1788
  %v1792 = vsel %vm1763, %v1775, %v1717
  %v1793 = vsel %vm1763, %v1777, %v1721
  %v1794 = vsel %vm1766, %v1792, %v1781
  %v1795 = vsel %vm1766, %v1793, %v1783
  %v1796 = vsel %vm1769, %v1794, %v1787
  %v1797 = vsel %vm1769, %v1795, %v1789
  %1802 = vrot.lane.b32.xlu0 %v1770, 64
  %v1803 = vpop.permute.xlu0 %1802
  %1804 = vrot.lane.b32.xlu0 %v1771, 64
  %v1805 = vpop.permute.xlu0 %1804
  %1806 = vrot.lane.b32.xlu0 %v1796, 64
  %v1807 = vpop.permute.xlu0 %1806
  %1808 = vrot.lane.b32.xlu0 %v1797, 64
  %v1809 = vpop.permute.xlu0 %1808
  %v1814 = vsel %vm141, %v843, %v1803
  %v1815 = vsel %vm141, %v847, %v1805
  %v1816 = vsel %vm141, %v851, %v1807
  %v1817 = vsel %vm141, %v855, %v1809
  %v1819 = vperm.slane %v140, 0
  %v1820 = vperm.slane %v140, 1
  %v1823 = vand.u32 %v137, 4294901760
  %1824 = vmatpush.msra.mxu0 %v1823
  %v1825 = vand.u32 %v135, 4294901760
  %1826 = vmatpush.msra.mxu0 %v1825
  %v1827 = vand.u32 %v133, 4294901760
  %1828 = vmatpush.msra.mxu0 %v1827
  %v1829 = vand.u32 %v131, 4294901760
  %1830 = vmatpush.msra.mxu0 %v1829
  %v1831 = vand.u32 %v129, 4294901760
  %1832 = vmatpush.msra.mxu0 %v1831
  %v1833 = vand.u32 %v127, 4294901760
  %1834 = vmatpush.msra.mxu0 %v1833
  %v1835 = vand.u32 %v125, 4294901760
  %1836 = vmatpush.msra.mxu0 %v1835
  %v1837 = vand.u32 %v123, 4294901760
  %1838 = vmatpush.msra.mxu0 %v1837
  %v1839 = vand.u32 %v121, 4294901760
  %1840 = vmatpush.msra.mxu0 %v1839
  %v1841 = vand.u32 %v119, 4294901760
  %1842 = vmatpush.msra.mxu0 %v1841
  %v1843 = vand.u32 %v117, 4294901760
  %1844 = vmatpush.msra.mxu0 %v1843
  %v1845 = vand.u32 %v115, 4294901760
  %1846 = vmatpush.msra.mxu0 %v1845
  %v1847 = vand.u32 %v113, 4294901760
  %1848 = vmatpush.msra.mxu0 %v1847
  %v1849 = vand.u32 %v111, 4294901760
  %1850 = vmatpush.msra.mxu0 %v1849
  %v1851 = vand.u32 %v109, 4294901760
  %1852 = vmatpush.msra.mxu0 %v1851
  %v1853 = vand.u32 %v107, 4294901760
  %1854 = vmatpush.msra.mxu0 %v1853
  %v1855 = vand.u32 %v1814, 4294901760
  %v1856 = vsub.f32 %v1814, %v1855
  %v1857 = vand.u32 %v1856, 4294901760
  %v1858 = vsub.f32 %v1856, %v1857
  %v1859 = vand.u32 %v1858, 4294901760
  %1860 = vmatmul.f32.gmra.mxu0 %v1859
  %v1861 = vpop.f32.mrf.mxu0
  %v1862 = vadd.f32 %v1819, %v1861
  %v1863 = vand.u32 %v1815, 4294901760
  %v1864 = vsub.f32 %v1815, %v1863
  %v1865 = vand.u32 %v1864, 4294901760
  %v1866 = vsub.f32 %v1864, %v1865
  %v1867 = vand.u32 %v1866, 4294901760
  %1868 = vmatmul.f32.gmra.mxu0 %v1867
  %v1869 = vpop.f32.mrf.mxu0
  %v1870 = vadd.f32 %v1819, %v1869
  %v1871 = vand.u32 %v1816, 4294901760
  %v1872 = vsub.f32 %v1816, %v1871
  %v1873 = vand.u32 %v1872, 4294901760
  %v1874 = vsub.f32 %v1872, %v1873
  %v1875 = vand.u32 %v1874, 4294901760
  %1876 = vmatmul.f32.gmra.mxu0 %v1875
  %v1877 = vpop.f32.mrf.mxu0
  %v1878 = vadd.f32 %v1819, %v1877
  %v1879 = vand.u32 %v1817, 4294901760
  %v1880 = vsub.f32 %v1817, %v1879
  %v1881 = vand.u32 %v1880, 4294901760
  %v1882 = vsub.f32 %v1880, %v1881
  %v1883 = vand.u32 %v1882, 4294901760
  %1884 = vmatmul.f32.gmra.mxu0 %v1883
  %v1885 = vpop.f32.mrf.mxu0
  %v1886 = vadd.f32 %v1819, %v1885
  %1887 = vdwg.mxu0
  %v1888 = vand.u32 %v137, 4294901760
  %v1889 = vsub.f32 %v137, %v1888
  %v1890 = vand.u32 %v1889, 4294901760
  %v1891 = vsub.f32 %v1889, %v1890
  %v1892 = vand.u32 %v1891, 4294901760
  %1893 = vmatpush.msra.mxu0 %v1892
  %v1894 = vand.u32 %v135, 4294901760
  %v1895 = vsub.f32 %v135, %v1894
  %v1896 = vand.u32 %v1895, 4294901760
  %v1897 = vsub.f32 %v1895, %v1896
  %v1898 = vand.u32 %v1897, 4294901760
  %1899 = vmatpush.msra.mxu0 %v1898
  %v1900 = vand.u32 %v133, 4294901760
  %v1901 = vsub.f32 %v133, %v1900
  %v1902 = vand.u32 %v1901, 4294901760
  %v1903 = vsub.f32 %v1901, %v1902
  %v1904 = vand.u32 %v1903, 4294901760
  %1905 = vmatpush.msra.mxu0 %v1904
  %v1906 = vand.u32 %v131, 4294901760
  %v1907 = vsub.f32 %v131, %v1906
  %v1908 = vand.u32 %v1907, 4294901760
  %v1909 = vsub.f32 %v1907, %v1908
  %v1910 = vand.u32 %v1909, 4294901760
  %1911 = vmatpush.msra.mxu0 %v1910
  %v1912 = vand.u32 %v129, 4294901760
  %v1913 = vsub.f32 %v129, %v1912
  %v1914 = vand.u32 %v1913, 4294901760
  %v1915 = vsub.f32 %v1913, %v1914
  %v1916 = vand.u32 %v1915, 4294901760
  %1917 = vmatpush.msra.mxu0 %v1916
  %v1918 = vand.u32 %v127, 4294901760
  %v1919 = vsub.f32 %v127, %v1918
  %v1920 = vand.u32 %v1919, 4294901760
  %v1921 = vsub.f32 %v1919, %v1920
  %v1922 = vand.u32 %v1921, 4294901760
  %1923 = vmatpush.msra.mxu0 %v1922
  %v1924 = vand.u32 %v125, 4294901760
  %v1925 = vsub.f32 %v125, %v1924
  %v1926 = vand.u32 %v1925, 4294901760
  %v1927 = vsub.f32 %v1925, %v1926
  %v1928 = vand.u32 %v1927, 4294901760
  %1929 = vmatpush.msra.mxu0 %v1928
  %v1930 = vand.u32 %v123, 4294901760
  %v1931 = vsub.f32 %v123, %v1930
  %v1932 = vand.u32 %v1931, 4294901760
  %v1933 = vsub.f32 %v1931, %v1932
  %v1934 = vand.u32 %v1933, 4294901760
  %1935 = vmatpush.msra.mxu0 %v1934
  %v1936 = vand.u32 %v121, 4294901760
  %v1937 = vsub.f32 %v121, %v1936
  %v1938 = vand.u32 %v1937, 4294901760
  %v1939 = vsub.f32 %v1937, %v1938
  %v1940 = vand.u32 %v1939, 4294901760
  %1941 = vmatpush.msra.mxu0 %v1940
  %v1942 = vand.u32 %v119, 4294901760
  %v1943 = vsub.f32 %v119, %v1942
  %v1944 = vand.u32 %v1943, 4294901760
  %v1945 = vsub.f32 %v1943, %v1944
  %v1946 = vand.u32 %v1945, 4294901760
  %1947 = vmatpush.msra.mxu0 %v1946
  %v1948 = vand.u32 %v117, 4294901760
  %v1949 = vsub.f32 %v117, %v1948
  %v1950 = vand.u32 %v1949, 4294901760
  %v1951 = vsub.f32 %v1949, %v1950
  %v1952 = vand.u32 %v1951, 4294901760
  %1953 = vmatpush.msra.mxu0 %v1952
  %v1954 = vand.u32 %v115, 4294901760
  %v1955 = vsub.f32 %v115, %v1954
  %v1956 = vand.u32 %v1955, 4294901760
  %v1957 = vsub.f32 %v1955, %v1956
  %v1958 = vand.u32 %v1957, 4294901760
  %1959 = vmatpush.msra.mxu0 %v1958
  %v1960 = vand.u32 %v113, 4294901760
  %v1961 = vsub.f32 %v113, %v1960
  %v1962 = vand.u32 %v1961, 4294901760
  %v1963 = vsub.f32 %v1961, %v1962
  %v1964 = vand.u32 %v1963, 4294901760
  %1965 = vmatpush.msra.mxu0 %v1964
  %v1966 = vand.u32 %v111, 4294901760
  %v1967 = vsub.f32 %v111, %v1966
  %v1968 = vand.u32 %v1967, 4294901760
  %v1969 = vsub.f32 %v1967, %v1968
  %v1970 = vand.u32 %v1969, 4294901760
  %1971 = vmatpush.msra.mxu0 %v1970
  %v1972 = vand.u32 %v109, 4294901760
  %v1973 = vsub.f32 %v109, %v1972
  %v1974 = vand.u32 %v1973, 4294901760
  %v1975 = vsub.f32 %v1973, %v1974
  %v1976 = vand.u32 %v1975, 4294901760
  %1977 = vmatpush.msra.mxu0 %v1976
  %v1978 = vand.u32 %v107, 4294901760
  %v1979 = vsub.f32 %v107, %v1978
  %v1980 = vand.u32 %v1979, 4294901760
  %v1981 = vsub.f32 %v1979, %v1980
  %v1982 = vand.u32 %v1981, 4294901760
  %1983 = vmatpush.msra.mxu0 %v1982
  %v1984 = vand.u32 %v1814, 4294901760
  %1985 = vmatmul.f32.gmra.mxu0 %v1984
  %v1986 = vpop.f32.mrf.mxu0
  %v1987 = vadd.f32 %v1862, %v1986
  %v1988 = vand.u32 %v1815, 4294901760
  %1989 = vmatmul.f32.gmra.mxu0 %v1988
  %v1990 = vpop.f32.mrf.mxu0
  %v1991 = vadd.f32 %v1870, %v1990
  %v1992 = vand.u32 %v1816, 4294901760
  %1993 = vmatmul.f32.gmra.mxu0 %v1992
  %v1994 = vpop.f32.mrf.mxu0
  %v1995 = vadd.f32 %v1878, %v1994
  %v1996 = vand.u32 %v1817, 4294901760
  %1997 = vmatmul.f32.gmra.mxu0 %v1996
  %v1998 = vpop.f32.mrf.mxu0
  %v1999 = vadd.f32 %v1886, %v1998
  %2000 = vdwg.mxu0
  %v2001 = vand.u32 %v137, 4294901760
  %v2002 = vsub.f32 %v137, %v2001
  %2003 = vmatpush.msra.mxu0 %v2002
  %v2004 = vand.u32 %v135, 4294901760
  %v2005 = vsub.f32 %v135, %v2004
  %2006 = vmatpush.msra.mxu0 %v2005
  %v2007 = vand.u32 %v133, 4294901760
  %v2008 = vsub.f32 %v133, %v2007
  %2009 = vmatpush.msra.mxu0 %v2008
  %v2010 = vand.u32 %v131, 4294901760
  %v2011 = vsub.f32 %v131, %v2010
  %2012 = vmatpush.msra.mxu0 %v2011
  %v2013 = vand.u32 %v129, 4294901760
  %v2014 = vsub.f32 %v129, %v2013
  %2015 = vmatpush.msra.mxu0 %v2014
  %v2016 = vand.u32 %v127, 4294901760
  %v2017 = vsub.f32 %v127, %v2016
  %2018 = vmatpush.msra.mxu0 %v2017
  %v2019 = vand.u32 %v125, 4294901760
  %v2020 = vsub.f32 %v125, %v2019
  %2021 = vmatpush.msra.mxu0 %v2020
  %v2022 = vand.u32 %v123, 4294901760
  %v2023 = vsub.f32 %v123, %v2022
  %2024 = vmatpush.msra.mxu0 %v2023
  %v2025 = vand.u32 %v121, 4294901760
  %v2026 = vsub.f32 %v121, %v2025
  %2027 = vmatpush.msra.mxu0 %v2026
  %v2028 = vand.u32 %v119, 4294901760
  %v2029 = vsub.f32 %v119, %v2028
  %2030 = vmatpush.msra.mxu0 %v2029
  %v2031 = vand.u32 %v117, 4294901760
  %v2032 = vsub.f32 %v117, %v2031
  %2033 = vmatpush.msra.mxu0 %v2032
  %v2034 = vand.u32 %v115, 4294901760
  %v2035 = vsub.f32 %v115, %v2034
  %2036 = vmatpush.msra.mxu0 %v2035
  %v2037 = vand.u32 %v113, 4294901760
  %v2038 = vsub.f32 %v113, %v2037
  %2039 = vmatpush.msra.mxu0 %v2038
  %v2040 = vand.u32 %v111, 4294901760
  %v2041 = vsub.f32 %v111, %v2040
  %2042 = vmatpush.msra.mxu0 %v2041
  %v2043 = vand.u32 %v109, 4294901760
  %v2044 = vsub.f32 %v109, %v2043
  %2045 = vmatpush.msra.mxu0 %v2044
  %v2046 = vand.u32 %v107, 4294901760
  %v2047 = vsub.f32 %v107, %v2046
  %2048 = vmatpush.msra.mxu0 %v2047
  %v2049 = vand.u32 %v1814, 4294901760
  %v2050 = vsub.f32 %v1814, %v2049
  %2051 = vmatmul.f32.gmra.mxu0 %v2050
  %v2052 = vpop.f32.mrf.mxu0
  %v2053 = vadd.f32 %v1987, %v2052
  %v2054 = vand.u32 %v1815, 4294901760
  %v2055 = vsub.f32 %v1815, %v2054
  %2056 = vmatmul.f32.gmra.mxu0 %v2055
  %v2057 = vpop.f32.mrf.mxu0
  %v2058 = vadd.f32 %v1991, %v2057
  %v2059 = vand.u32 %v1816, 4294901760
  %v2060 = vsub.f32 %v1816, %v2059
  %2061 = vmatmul.f32.gmra.mxu0 %v2060
  %v2062 = vpop.f32.mrf.mxu0
  %v2063 = vadd.f32 %v1995, %v2062
  %v2064 = vand.u32 %v1817, 4294901760
  %v2065 = vsub.f32 %v1817, %v2064
  %2066 = vmatmul.f32.gmra.mxu0 %v2065
  %v2067 = vpop.f32.mrf.mxu0
  %v2068 = vadd.f32 %v1999, %v2067
  %2069 = vdwg.mxu0
  %v2070 = vand.u32 %v137, 4294901760
  %2071 = vmatpush.msra.mxu0 %v2070
  %v2072 = vand.u32 %v135, 4294901760
  %2073 = vmatpush.msra.mxu0 %v2072
  %v2074 = vand.u32 %v133, 4294901760
  %2075 = vmatpush.msra.mxu0 %v2074
  %v2076 = vand.u32 %v131, 4294901760
  %2077 = vmatpush.msra.mxu0 %v2076
  %v2078 = vand.u32 %v129, 4294901760
  %2079 = vmatpush.msra.mxu0 %v2078
  %v2080 = vand.u32 %v127, 4294901760
  %2081 = vmatpush.msra.mxu0 %v2080
  %v2082 = vand.u32 %v125, 4294901760
  %2083 = vmatpush.msra.mxu0 %v2082
  %v2084 = vand.u32 %v123, 4294901760
  %2085 = vmatpush.msra.mxu0 %v2084
  %v2086 = vand.u32 %v121, 4294901760
  %2087 = vmatpush.msra.mxu0 %v2086
  %v2088 = vand.u32 %v119, 4294901760
  %2089 = vmatpush.msra.mxu0 %v2088
  %v2090 = vand.u32 %v117, 4294901760
  %2091 = vmatpush.msra.mxu0 %v2090
  %v2092 = vand.u32 %v115, 4294901760
  %2093 = vmatpush.msra.mxu0 %v2092
  %v2094 = vand.u32 %v113, 4294901760
  %2095 = vmatpush.msra.mxu0 %v2094
  %v2096 = vand.u32 %v111, 4294901760
  %2097 = vmatpush.msra.mxu0 %v2096
  %v2098 = vand.u32 %v109, 4294901760
  %2099 = vmatpush.msra.mxu0 %v2098
  %v2100 = vand.u32 %v107, 4294901760
  %2101 = vmatpush.msra.mxu0 %v2100
  %v2102 = vand.u32 %v1814, 4294901760
  %v2103 = vsub.f32 %v1814, %v2102
  %v2104 = vand.u32 %v2103, 4294901760
  %2105 = vmatmul.f32.gmra.mxu0 %v2104
  %v2106 = vpop.f32.mrf.mxu0
  %v2107 = vadd.f32 %v2053, %v2106
  %v2108 = vand.u32 %v1815, 4294901760
  %v2109 = vsub.f32 %v1815, %v2108
  %v2110 = vand.u32 %v2109, 4294901760
  %2111 = vmatmul.f32.gmra.mxu0 %v2110
  %v2112 = vpop.f32.mrf.mxu0
  %v2113 = vadd.f32 %v2058, %v2112
  %v2114 = vand.u32 %v1816, 4294901760
  %v2115 = vsub.f32 %v1816, %v2114
  %v2116 = vand.u32 %v2115, 4294901760
  %2117 = vmatmul.f32.gmra.mxu0 %v2116
  %v2118 = vpop.f32.mrf.mxu0
  %v2119 = vadd.f32 %v2063, %v2118
  %v2120 = vand.u32 %v1817, 4294901760
  %v2121 = vsub.f32 %v1817, %v2120
  %v2122 = vand.u32 %v2121, 4294901760
  %2123 = vmatmul.f32.gmra.mxu0 %v2122
  %v2124 = vpop.f32.mrf.mxu0
  %v2125 = vadd.f32 %v2068, %v2124
  %2126 = vdwg.mxu0
  %v2127 = vand.u32 %v137, 4294901760
  %v2128 = vsub.f32 %v137, %v2127
  %v2129 = vand.u32 %v2128, 4294901760
  %2130 = vmatpush.msra.mxu0 %v2129
  %v2131 = vand.u32 %v135, 4294901760
  %v2132 = vsub.f32 %v135, %v2131
  %v2133 = vand.u32 %v2132, 4294901760
  %2134 = vmatpush.msra.mxu0 %v2133
  %v2135 = vand.u32 %v133, 4294901760
  %v2136 = vsub.f32 %v133, %v2135
  %v2137 = vand.u32 %v2136, 4294901760
  %2138 = vmatpush.msra.mxu0 %v2137
  %v2139 = vand.u32 %v131, 4294901760
  %v2140 = vsub.f32 %v131, %v2139
  %v2141 = vand.u32 %v2140, 4294901760
  %2142 = vmatpush.msra.mxu0 %v2141
  %v2143 = vand.u32 %v129, 4294901760
  %v2144 = vsub.f32 %v129, %v2143
  %v2145 = vand.u32 %v2144, 4294901760
  %2146 = vmatpush.msra.mxu0 %v2145
  %v2147 = vand.u32 %v127, 4294901760
  %v2148 = vsub.f32 %v127, %v2147
  %v2149 = vand.u32 %v2148, 4294901760
  %2150 = vmatpush.msra.mxu0 %v2149
  %v2151 = vand.u32 %v125, 4294901760
  %v2152 = vsub.f32 %v125, %v2151
  %v2153 = vand.u32 %v2152, 4294901760
  %2154 = vmatpush.msra.mxu0 %v2153
  %v2155 = vand.u32 %v123, 4294901760
  %v2156 = vsub.f32 %v123, %v2155
  %v2157 = vand.u32 %v2156, 4294901760
  %2158 = vmatpush.msra.mxu0 %v2157
  %v2159 = vand.u32 %v121, 4294901760
  %v2160 = vsub.f32 %v121, %v2159
  %v2161 = vand.u32 %v2160, 4294901760
  %2162 = vmatpush.msra.mxu0 %v2161
  %v2163 = vand.u32 %v119, 4294901760
  %v2164 = vsub.f32 %v119, %v2163
  %v2165 = vand.u32 %v2164, 4294901760
  %2166 = vmatpush.msra.mxu0 %v2165
  %v2167 = vand.u32 %v117, 4294901760
  %v2168 = vsub.f32 %v117, %v2167
  %v2169 = vand.u32 %v2168, 4294901760
  %2170 = vmatpush.msra.mxu0 %v2169
  %v2171 = vand.u32 %v115, 4294901760
  %v2172 = vsub.f32 %v115, %v2171
  %v2173 = vand.u32 %v2172, 4294901760
  %2174 = vmatpush.msra.mxu0 %v2173
  %v2175 = vand.u32 %v113, 4294901760
  %v2176 = vsub.f32 %v113, %v2175
  %v2177 = vand.u32 %v2176, 4294901760
  %2178 = vmatpush.msra.mxu0 %v2177
  %v2179 = vand.u32 %v111, 4294901760
  %v2180 = vsub.f32 %v111, %v2179
  %v2181 = vand.u32 %v2180, 4294901760
  %2182 = vmatpush.msra.mxu0 %v2181
  %v2183 = vand.u32 %v109, 4294901760
  %v2184 = vsub.f32 %v109, %v2183
  %v2185 = vand.u32 %v2184, 4294901760
  %2186 = vmatpush.msra.mxu0 %v2185
  %v2187 = vand.u32 %v107, 4294901760
  %v2188 = vsub.f32 %v107, %v2187
  %v2189 = vand.u32 %v2188, 4294901760
  %2190 = vmatpush.msra.mxu0 %v2189
  %v2191 = vand.u32 %v1814, 4294901760
  %2192 = vmatmul.f32.gmra.mxu0 %v2191
  %v2193 = vpop.f32.mrf.mxu0
  %v2194 = vadd.f32 %v2107, %v2193
  %v2195 = vand.u32 %v1815, 4294901760
  %2196 = vmatmul.f32.gmra.mxu0 %v2195
  %v2197 = vpop.f32.mrf.mxu0
  %v2198 = vadd.f32 %v2113, %v2197
  %v2199 = vand.u32 %v1816, 4294901760
  %2200 = vmatmul.f32.gmra.mxu0 %v2199
  %v2201 = vpop.f32.mrf.mxu0
  %v2202 = vadd.f32 %v2119, %v2201
  %v2203 = vand.u32 %v1817, 4294901760
  %2204 = vmatmul.f32.gmra.mxu0 %v2203
  %v2205 = vpop.f32.mrf.mxu0
  %v2206 = vadd.f32 %v2125, %v2205
  %2207 = vdwg.mxu0
  %v2208 = vand.u32 %v137, 4294901760
  %2209 = vmatpush.msra.mxu0 %v2208
  %v2210 = vand.u32 %v135, 4294901760
  %2211 = vmatpush.msra.mxu0 %v2210
  %v2212 = vand.u32 %v133, 4294901760
  %2213 = vmatpush.msra.mxu0 %v2212
  %v2214 = vand.u32 %v131, 4294901760
  %2215 = vmatpush.msra.mxu0 %v2214
  %v2216 = vand.u32 %v129, 4294901760
  %2217 = vmatpush.msra.mxu0 %v2216
  %v2218 = vand.u32 %v127, 4294901760
  %2219 = vmatpush.msra.mxu0 %v2218
  %v2220 = vand.u32 %v125, 4294901760
  %2221 = vmatpush.msra.mxu0 %v2220
  %v2222 = vand.u32 %v123, 4294901760
  %2223 = vmatpush.msra.mxu0 %v2222
  %v2224 = vand.u32 %v121, 4294901760
  %2225 = vmatpush.msra.mxu0 %v2224
  %v2226 = vand.u32 %v119, 4294901760
  %2227 = vmatpush.msra.mxu0 %v2226
  %v2228 = vand.u32 %v117, 4294901760
  %2229 = vmatpush.msra.mxu0 %v2228
  %v2230 = vand.u32 %v115, 4294901760
  %2231 = vmatpush.msra.mxu0 %v2230
  %v2232 = vand.u32 %v113, 4294901760
  %2233 = vmatpush.msra.mxu0 %v2232
  %v2234 = vand.u32 %v111, 4294901760
  %2235 = vmatpush.msra.mxu0 %v2234
  %v2236 = vand.u32 %v109, 4294901760
  %2237 = vmatpush.msra.mxu0 %v2236
  %v2238 = vand.u32 %v107, 4294901760
  %2239 = vmatpush.msra.mxu0 %v2238
  %v2240 = vand.u32 %v1814, 4294901760
  %2241 = vmatmul.f32.gmra.mxu0 %v2240
  %v2242 = vpop.f32.mrf.mxu0
  %v2243 = vadd.f32 %v2194, %v2242
  %v2244 = vand.u32 %v1815, 4294901760
  %2245 = vmatmul.f32.gmra.mxu0 %v2244
  %v2246 = vpop.f32.mrf.mxu0
  %v2247 = vadd.f32 %v2198, %v2246
  %v2248 = vand.u32 %v1816, 4294901760
  %2249 = vmatmul.f32.gmra.mxu0 %v2248
  %v2250 = vpop.f32.mrf.mxu0
  %v2251 = vadd.f32 %v2202, %v2250
  %v2252 = vand.u32 %v1817, 4294901760
  %2253 = vmatmul.f32.gmra.mxu0 %v2252
  %v2254 = vpop.f32.mrf.mxu0
  %v2255 = vadd.f32 %v2206, %v2254
  %2256 = vdwg.mxu0
  %v2257 = vand.u32 %v138, 4294901760
  %2258 = vmatpush.msra.mxu0 %v2257
  %v2259 = vand.u32 %v136, 4294901760
  %2260 = vmatpush.msra.mxu0 %v2259
  %v2261 = vand.u32 %v134, 4294901760
  %2262 = vmatpush.msra.mxu0 %v2261
  %v2263 = vand.u32 %v132, 4294901760
  %2264 = vmatpush.msra.mxu0 %v2263
  %v2265 = vand.u32 %v130, 4294901760
  %2266 = vmatpush.msra.mxu0 %v2265
  %v2267 = vand.u32 %v128, 4294901760
  %2268 = vmatpush.msra.mxu0 %v2267
  %v2269 = vand.u32 %v126, 4294901760
  %2270 = vmatpush.msra.mxu0 %v2269
  %v2271 = vand.u32 %v124, 4294901760
  %2272 = vmatpush.msra.mxu0 %v2271
  %v2273 = vand.u32 %v122, 4294901760
  %2274 = vmatpush.msra.mxu0 %v2273
  %v2275 = vand.u32 %v120, 4294901760
  %2276 = vmatpush.msra.mxu0 %v2275
  %v2277 = vand.u32 %v118, 4294901760
  %2278 = vmatpush.msra.mxu0 %v2277
  %v2279 = vand.u32 %v116, 4294901760
  %2280 = vmatpush.msra.mxu0 %v2279
  %v2281 = vand.u32 %v114, 4294901760
  %2282 = vmatpush.msra.mxu0 %v2281
  %v2283 = vand.u32 %v112, 4294901760
  %2284 = vmatpush.msra.mxu0 %v2283
  %v2285 = vand.u32 %v110, 4294901760
  %2286 = vmatpush.msra.mxu0 %v2285
  %v2287 = vand.u32 %v108, 4294901760
  %2288 = vmatpush.msra.mxu0 %v2287
  %v2289 = vand.u32 %v1814, 4294901760
  %v2290 = vsub.f32 %v1814, %v2289
  %v2291 = vand.u32 %v2290, 4294901760
  %v2292 = vsub.f32 %v2290, %v2291
  %v2293 = vand.u32 %v2292, 4294901760
  %2294 = vmatmul.f32.gmra.mxu0 %v2293
  %v2295 = vpop.f32.mrf.mxu0
  %v2296 = vadd.f32 %v1820, %v2295
  %v2297 = vand.u32 %v1815, 4294901760
  %v2298 = vsub.f32 %v1815, %v2297
  %v2299 = vand.u32 %v2298, 4294901760
  %v2300 = vsub.f32 %v2298, %v2299
  %v2301 = vand.u32 %v2300, 4294901760
  %2302 = vmatmul.f32.gmra.mxu0 %v2301
  %v2303 = vpop.f32.mrf.mxu0
  %v2304 = vadd.f32 %v1820, %v2303
  %v2305 = vand.u32 %v1816, 4294901760
  %v2306 = vsub.f32 %v1816, %v2305
  %v2307 = vand.u32 %v2306, 4294901760
  %v2308 = vsub.f32 %v2306, %v2307
  %v2309 = vand.u32 %v2308, 4294901760
  %2310 = vmatmul.f32.gmra.mxu0 %v2309
  %v2311 = vpop.f32.mrf.mxu0
  %v2312 = vadd.f32 %v1820, %v2311
  %v2313 = vand.u32 %v1817, 4294901760
  %v2314 = vsub.f32 %v1817, %v2313
  %v2315 = vand.u32 %v2314, 4294901760
  %v2316 = vsub.f32 %v2314, %v2315
  %v2317 = vand.u32 %v2316, 4294901760
  %2318 = vmatmul.f32.gmra.mxu0 %v2317
  %v2319 = vpop.f32.mrf.mxu0
  %v2320 = vadd.f32 %v1820, %v2319
  %2321 = vdwg.mxu0
  %v2322 = vand.u32 %v138, 4294901760
  %v2323 = vsub.f32 %v138, %v2322
  %v2324 = vand.u32 %v2323, 4294901760
  %v2325 = vsub.f32 %v2323, %v2324
  %v2326 = vand.u32 %v2325, 4294901760
  %2327 = vmatpush.msra.mxu0 %v2326
  %v2328 = vand.u32 %v136, 4294901760
  %v2329 = vsub.f32 %v136, %v2328
  %v2330 = vand.u32 %v2329, 4294901760
  %v2331 = vsub.f32 %v2329, %v2330
  %v2332 = vand.u32 %v2331, 4294901760
  %2333 = vmatpush.msra.mxu0 %v2332
  %v2334 = vand.u32 %v134, 4294901760
  %v2335 = vsub.f32 %v134, %v2334
  %v2336 = vand.u32 %v2335, 4294901760
  %v2337 = vsub.f32 %v2335, %v2336
  %v2338 = vand.u32 %v2337, 4294901760
  %2339 = vmatpush.msra.mxu0 %v2338
  %v2340 = vand.u32 %v132, 4294901760
  %v2341 = vsub.f32 %v132, %v2340
  %v2342 = vand.u32 %v2341, 4294901760
  %v2343 = vsub.f32 %v2341, %v2342
  %v2344 = vand.u32 %v2343, 4294901760
  %2345 = vmatpush.msra.mxu0 %v2344
  %v2346 = vand.u32 %v130, 4294901760
  %v2347 = vsub.f32 %v130, %v2346
  %v2348 = vand.u32 %v2347, 4294901760
  %v2349 = vsub.f32 %v2347, %v2348
  %v2350 = vand.u32 %v2349, 4294901760
  %2351 = vmatpush.msra.mxu0 %v2350
  %v2352 = vand.u32 %v128, 4294901760
  %v2353 = vsub.f32 %v128, %v2352
  %v2354 = vand.u32 %v2353, 4294901760
  %v2355 = vsub.f32 %v2353, %v2354
  %v2356 = vand.u32 %v2355, 4294901760
  %2357 = vmatpush.msra.mxu0 %v2356
  %v2358 = vand.u32 %v126, 4294901760
  %v2359 = vsub.f32 %v126, %v2358
  %v2360 = vand.u32 %v2359, 4294901760
  %v2361 = vsub.f32 %v2359, %v2360
  %v2362 = vand.u32 %v2361, 4294901760
  %2363 = vmatpush.msra.mxu0 %v2362
  %v2364 = vand.u32 %v124, 4294901760
  %v2365 = vsub.f32 %v124, %v2364
  %v2366 = vand.u32 %v2365, 4294901760
  %v2367 = vsub.f32 %v2365, %v2366
  %v2368 = vand.u32 %v2367, 4294901760
  %2369 = vmatpush.msra.mxu0 %v2368
  %v2370 = vand.u32 %v122, 4294901760
  %v2371 = vsub.f32 %v122, %v2370
  %v2372 = vand.u32 %v2371, 4294901760
  %v2373 = vsub.f32 %v2371, %v2372
  %v2374 = vand.u32 %v2373, 4294901760
  %2375 = vmatpush.msra.mxu0 %v2374
  %v2376 = vand.u32 %v120, 4294901760
  %v2377 = vsub.f32 %v120, %v2376
  %v2378 = vand.u32 %v2377, 4294901760
  %v2379 = vsub.f32 %v2377, %v2378
  %v2380 = vand.u32 %v2379, 4294901760
  %2381 = vmatpush.msra.mxu0 %v2380
  %v2382 = vand.u32 %v118, 4294901760
  %v2383 = vsub.f32 %v118, %v2382
  %v2384 = vand.u32 %v2383, 4294901760
  %v2385 = vsub.f32 %v2383, %v2384
  %v2386 = vand.u32 %v2385, 4294901760
  %2387 = vmatpush.msra.mxu0 %v2386
  %v2388 = vand.u32 %v116, 4294901760
  %v2389 = vsub.f32 %v116, %v2388
  %v2390 = vand.u32 %v2389, 4294901760
  %v2391 = vsub.f32 %v2389, %v2390
  %v2392 = vand.u32 %v2391, 4294901760
  %2393 = vmatpush.msra.mxu0 %v2392
  %v2394 = vand.u32 %v114, 4294901760
  %v2395 = vsub.f32 %v114, %v2394
  %v2396 = vand.u32 %v2395, 4294901760
  %v2397 = vsub.f32 %v2395, %v2396
  %v2398 = vand.u32 %v2397, 4294901760
  %2399 = vmatpush.msra.mxu0 %v2398
  %v2400 = vand.u32 %v112, 4294901760
  %v2401 = vsub.f32 %v112, %v2400
  %v2402 = vand.u32 %v2401, 4294901760
  %v2403 = vsub.f32 %v2401, %v2402
  %v2404 = vand.u32 %v2403, 4294901760
  %2405 = vmatpush.msra.mxu0 %v2404
  %v2406 = vand.u32 %v110, 4294901760
  %v2407 = vsub.f32 %v110, %v2406
  %v2408 = vand.u32 %v2407, 4294901760
  %v2409 = vsub.f32 %v2407, %v2408
  %v2410 = vand.u32 %v2409, 4294901760
  %2411 = vmatpush.msra.mxu0 %v2410
  %v2412 = vand.u32 %v108, 4294901760
  %v2413 = vsub.f32 %v108, %v2412
  %v2414 = vand.u32 %v2413, 4294901760
  %v2415 = vsub.f32 %v2413, %v2414
  %v2416 = vand.u32 %v2415, 4294901760
  %2417 = vmatpush.msra.mxu0 %v2416
  %v2418 = vand.u32 %v1814, 4294901760
  %2419 = vmatmul.f32.gmra.mxu0 %v2418
  %v2420 = vpop.f32.mrf.mxu0
  %v2421 = vadd.f32 %v2296, %v2420
  %v2422 = vand.u32 %v1815, 4294901760
  %2423 = vmatmul.f32.gmra.mxu0 %v2422
  %v2424 = vpop.f32.mrf.mxu0
  %v2425 = vadd.f32 %v2304, %v2424
  %v2426 = vand.u32 %v1816, 4294901760
  %2427 = vmatmul.f32.gmra.mxu0 %v2426
  %v2428 = vpop.f32.mrf.mxu0
  %v2429 = vadd.f32 %v2312, %v2428
  %v2430 = vand.u32 %v1817, 4294901760
  %2431 = vmatmul.f32.gmra.mxu0 %v2430
  %v2432 = vpop.f32.mrf.mxu0
  %v2433 = vadd.f32 %v2320, %v2432
  %2434 = vdwg.mxu0
  %v2435 = vand.u32 %v138, 4294901760
  %v2436 = vsub.f32 %v138, %v2435
  %2437 = vmatpush.msra.mxu0 %v2436
  %v2438 = vand.u32 %v136, 4294901760
  %v2439 = vsub.f32 %v136, %v2438
  %2440 = vmatpush.msra.mxu0 %v2439
  %v2441 = vand.u32 %v134, 4294901760
  %v2442 = vsub.f32 %v134, %v2441
  %2443 = vmatpush.msra.mxu0 %v2442
  %v2444 = vand.u32 %v132, 4294901760
  %v2445 = vsub.f32 %v132, %v2444
  %2446 = vmatpush.msra.mxu0 %v2445
  %v2447 = vand.u32 %v130, 4294901760
  %v2448 = vsub.f32 %v130, %v2447
  %2449 = vmatpush.msra.mxu0 %v2448
  %v2450 = vand.u32 %v128, 4294901760
  %v2451 = vsub.f32 %v128, %v2450
  %2452 = vmatpush.msra.mxu0 %v2451
  %v2453 = vand.u32 %v126, 4294901760
  %v2454 = vsub.f32 %v126, %v2453
  %2455 = vmatpush.msra.mxu0 %v2454
  %v2456 = vand.u32 %v124, 4294901760
  %v2457 = vsub.f32 %v124, %v2456
  %2458 = vmatpush.msra.mxu0 %v2457
  %v2459 = vand.u32 %v122, 4294901760
  %v2460 = vsub.f32 %v122, %v2459
  %2461 = vmatpush.msra.mxu0 %v2460
  %v2462 = vand.u32 %v120, 4294901760
  %v2463 = vsub.f32 %v120, %v2462
  %2464 = vmatpush.msra.mxu0 %v2463
  %v2465 = vand.u32 %v118, 4294901760
  %v2466 = vsub.f32 %v118, %v2465
  %2467 = vmatpush.msra.mxu0 %v2466
  %v2468 = vand.u32 %v116, 4294901760
  %v2469 = vsub.f32 %v116, %v2468
  %2470 = vmatpush.msra.mxu0 %v2469
  %v2471 = vand.u32 %v114, 4294901760
  %v2472 = vsub.f32 %v114, %v2471
  %2473 = vmatpush.msra.mxu0 %v2472
  %v2474 = vand.u32 %v112, 4294901760
  %v2475 = vsub.f32 %v112, %v2474
  %2476 = vmatpush.msra.mxu0 %v2475
  %v2477 = vand.u32 %v110, 4294901760
  %v2478 = vsub.f32 %v110, %v2477
  %2479 = vmatpush.msra.mxu0 %v2478
  %v2480 = vand.u32 %v108, 4294901760
  %v2481 = vsub.f32 %v108, %v2480
  %2482 = vmatpush.msra.mxu0 %v2481
  %v2483 = vand.u32 %v1814, 4294901760
  %v2484 = vsub.f32 %v1814, %v2483
  %2485 = vmatmul.f32.gmra.mxu0 %v2484
  %v2486 = vpop.f32.mrf.mxu0
  %v2487 = vadd.f32 %v2421, %v2486
  %v2488 = vand.u32 %v1815, 4294901760
  %v2489 = vsub.f32 %v1815, %v2488
  %2490 = vmatmul.f32.gmra.mxu0 %v2489
  %v2491 = vpop.f32.mrf.mxu0
  %v2492 = vadd.f32 %v2425, %v2491
  %v2493 = vand.u32 %v1816, 4294901760
  %v2494 = vsub.f32 %v1816, %v2493
  %2495 = vmatmul.f32.gmra.mxu0 %v2494
  %v2496 = vpop.f32.mrf.mxu0
  %v2497 = vadd.f32 %v2429, %v2496
  %v2498 = vand.u32 %v1817, 4294901760
  %v2499 = vsub.f32 %v1817, %v2498
  %2500 = vmatmul.f32.gmra.mxu0 %v2499
  %v2501 = vpop.f32.mrf.mxu0
  %v2502 = vadd.f32 %v2433, %v2501
  %2503 = vdwg.mxu0
  %v2504 = vand.u32 %v138, 4294901760
  %2505 = vmatpush.msra.mxu0 %v2504
  %v2506 = vand.u32 %v136, 4294901760
  %2507 = vmatpush.msra.mxu0 %v2506
  %v2508 = vand.u32 %v134, 4294901760
  %2509 = vmatpush.msra.mxu0 %v2508
  %v2510 = vand.u32 %v132, 4294901760
  %2511 = vmatpush.msra.mxu0 %v2510
  %v2512 = vand.u32 %v130, 4294901760
  %2513 = vmatpush.msra.mxu0 %v2512
  %v2514 = vand.u32 %v128, 4294901760
  %2515 = vmatpush.msra.mxu0 %v2514
  %v2516 = vand.u32 %v126, 4294901760
  %2517 = vmatpush.msra.mxu0 %v2516
  %v2518 = vand.u32 %v124, 4294901760
  %2519 = vmatpush.msra.mxu0 %v2518
  %v2520 = vand.u32 %v122, 4294901760
  %2521 = vmatpush.msra.mxu0 %v2520
  %v2522 = vand.u32 %v120, 4294901760
  %2523 = vmatpush.msra.mxu0 %v2522
  %v2524 = vand.u32 %v118, 4294901760
  %2525 = vmatpush.msra.mxu0 %v2524
  %v2526 = vand.u32 %v116, 4294901760
  %2527 = vmatpush.msra.mxu0 %v2526
  %v2528 = vand.u32 %v114, 4294901760
  %2529 = vmatpush.msra.mxu0 %v2528
  %v2530 = vand.u32 %v112, 4294901760
  %2531 = vmatpush.msra.mxu0 %v2530
  %v2532 = vand.u32 %v110, 4294901760
  %2533 = vmatpush.msra.mxu0 %v2532
  %v2534 = vand.u32 %v108, 4294901760
  %2535 = vmatpush.msra.mxu0 %v2534
  %v2536 = vand.u32 %v1814, 4294901760
  %v2537 = vsub.f32 %v1814, %v2536
  %v2538 = vand.u32 %v2537, 4294901760
  %2539 = vmatmul.f32.gmra.mxu0 %v2538
  %v2540 = vpop.f32.mrf.mxu0
  %v2541 = vadd.f32 %v2487, %v2540
  %v2542 = vand.u32 %v1815, 4294901760
  %v2543 = vsub.f32 %v1815, %v2542
  %v2544 = vand.u32 %v2543, 4294901760
  %2545 = vmatmul.f32.gmra.mxu0 %v2544
  %v2546 = vpop.f32.mrf.mxu0
  %v2547 = vadd.f32 %v2492, %v2546
  %v2548 = vand.u32 %v1816, 4294901760
  %v2549 = vsub.f32 %v1816, %v2548
  %v2550 = vand.u32 %v2549, 4294901760
  %2551 = vmatmul.f32.gmra.mxu0 %v2550
  %v2552 = vpop.f32.mrf.mxu0
  %v2553 = vadd.f32 %v2497, %v2552
  %v2554 = vand.u32 %v1817, 4294901760
  %v2555 = vsub.f32 %v1817, %v2554
  %v2556 = vand.u32 %v2555, 4294901760
  %2557 = vmatmul.f32.gmra.mxu0 %v2556
  %v2558 = vpop.f32.mrf.mxu0
  %v2559 = vadd.f32 %v2502, %v2558
  %2560 = vdwg.mxu0
  %v2561 = vand.u32 %v138, 4294901760
  %v2562 = vsub.f32 %v138, %v2561
  %v2563 = vand.u32 %v2562, 4294901760
  %2564 = vmatpush.msra.mxu0 %v2563
  %v2565 = vand.u32 %v136, 4294901760
  %v2566 = vsub.f32 %v136, %v2565
  %v2567 = vand.u32 %v2566, 4294901760
  %2568 = vmatpush.msra.mxu0 %v2567
  %v2569 = vand.u32 %v134, 4294901760
  %v2570 = vsub.f32 %v134, %v2569
  %v2571 = vand.u32 %v2570, 4294901760
  %2572 = vmatpush.msra.mxu0 %v2571
  %v2573 = vand.u32 %v132, 4294901760
  %v2574 = vsub.f32 %v132, %v2573
  %v2575 = vand.u32 %v2574, 4294901760
  %2576 = vmatpush.msra.mxu0 %v2575
  %v2577 = vand.u32 %v130, 4294901760
  %v2578 = vsub.f32 %v130, %v2577
  %v2579 = vand.u32 %v2578, 4294901760
  %2580 = vmatpush.msra.mxu0 %v2579
  %v2581 = vand.u32 %v128, 4294901760
  %v2582 = vsub.f32 %v128, %v2581
  %v2583 = vand.u32 %v2582, 4294901760
  %2584 = vmatpush.msra.mxu0 %v2583
  %v2585 = vand.u32 %v126, 4294901760
  %v2586 = vsub.f32 %v126, %v2585
  %v2587 = vand.u32 %v2586, 4294901760
  %2588 = vmatpush.msra.mxu0 %v2587
  %v2589 = vand.u32 %v124, 4294901760
  %v2590 = vsub.f32 %v124, %v2589
  %v2591 = vand.u32 %v2590, 4294901760
  %2592 = vmatpush.msra.mxu0 %v2591
  %v2593 = vand.u32 %v122, 4294901760
  %v2594 = vsub.f32 %v122, %v2593
  %v2595 = vand.u32 %v2594, 4294901760
  %2596 = vmatpush.msra.mxu0 %v2595
  %v2597 = vand.u32 %v120, 4294901760
  %v2598 = vsub.f32 %v120, %v2597
  %v2599 = vand.u32 %v2598, 4294901760
  %2600 = vmatpush.msra.mxu0 %v2599
  %v2601 = vand.u32 %v118, 4294901760
  %v2602 = vsub.f32 %v118, %v2601
  %v2603 = vand.u32 %v2602, 4294901760
  %2604 = vmatpush.msra.mxu0 %v2603
  %v2605 = vand.u32 %v116, 4294901760
  %v2606 = vsub.f32 %v116, %v2605
  %v2607 = vand.u32 %v2606, 4294901760
  %2608 = vmatpush.msra.mxu0 %v2607
  %v2609 = vand.u32 %v114, 4294901760
  %v2610 = vsub.f32 %v114, %v2609
  %v2611 = vand.u32 %v2610, 4294901760
  %2612 = vmatpush.msra.mxu0 %v2611
  %v2613 = vand.u32 %v112, 4294901760
  %v2614 = vsub.f32 %v112, %v2613
  %v2615 = vand.u32 %v2614, 4294901760
  %2616 = vmatpush.msra.mxu0 %v2615
  %v2617 = vand.u32 %v110, 4294901760
  %v2618 = vsub.f32 %v110, %v2617
  %v2619 = vand.u32 %v2618, 4294901760
  %2620 = vmatpush.msra.mxu0 %v2619
  %v2621 = vand.u32 %v108, 4294901760
  %v2622 = vsub.f32 %v108, %v2621
  %v2623 = vand.u32 %v2622, 4294901760
  %2624 = vmatpush.msra.mxu0 %v2623
  %v2625 = vand.u32 %v1814, 4294901760
  %2626 = vmatmul.f32.gmra.mxu0 %v2625
  %v2627 = vpop.f32.mrf.mxu0
  %v2628 = vadd.f32 %v2541, %v2627
  %v2629 = vand.u32 %v1815, 4294901760
  %2630 = vmatmul.f32.gmra.mxu0 %v2629
  %v2631 = vpop.f32.mrf.mxu0
  %v2632 = vadd.f32 %v2547, %v2631
  %v2633 = vand.u32 %v1816, 4294901760
  %2634 = vmatmul.f32.gmra.mxu0 %v2633
  %v2635 = vpop.f32.mrf.mxu0
  %v2636 = vadd.f32 %v2553, %v2635
  %v2637 = vand.u32 %v1817, 4294901760
  %2638 = vmatmul.f32.gmra.mxu0 %v2637
  %v2639 = vpop.f32.mrf.mxu0
  %v2640 = vadd.f32 %v2559, %v2639
  %2641 = vdwg.mxu0
  %v2642 = vand.u32 %v138, 4294901760
  %2643 = vmatpush.msra.mxu0 %v2642
  %v2644 = vand.u32 %v136, 4294901760
  %2645 = vmatpush.msra.mxu0 %v2644
  %v2646 = vand.u32 %v134, 4294901760
  %2647 = vmatpush.msra.mxu0 %v2646
  %v2648 = vand.u32 %v132, 4294901760
  %2649 = vmatpush.msra.mxu0 %v2648
  %v2650 = vand.u32 %v130, 4294901760
  %2651 = vmatpush.msra.mxu0 %v2650
  %v2652 = vand.u32 %v128, 4294901760
  %2653 = vmatpush.msra.mxu0 %v2652
  %v2654 = vand.u32 %v126, 4294901760
  %2655 = vmatpush.msra.mxu0 %v2654
  %v2656 = vand.u32 %v124, 4294901760
  %2657 = vmatpush.msra.mxu0 %v2656
  %v2658 = vand.u32 %v122, 4294901760
  %2659 = vmatpush.msra.mxu0 %v2658
  %v2660 = vand.u32 %v120, 4294901760
  %2661 = vmatpush.msra.mxu0 %v2660
  %v2662 = vand.u32 %v118, 4294901760
  %2663 = vmatpush.msra.mxu0 %v2662
  %v2664 = vand.u32 %v116, 4294901760
  %2665 = vmatpush.msra.mxu0 %v2664
  %v2666 = vand.u32 %v114, 4294901760
  %2667 = vmatpush.msra.mxu0 %v2666
  %v2668 = vand.u32 %v112, 4294901760
  %2669 = vmatpush.msra.mxu0 %v2668
  %v2670 = vand.u32 %v110, 4294901760
  %2671 = vmatpush.msra.mxu0 %v2670
  %v2672 = vand.u32 %v108, 4294901760
  %2673 = vmatpush.msra.mxu0 %v2672
  %v2674 = vand.u32 %v1814, 4294901760
  %2675 = vmatmul.f32.gmra.mxu0 %v2674
  %v2676 = vpop.f32.mrf.mxu0
  %v2677 = vadd.f32 %v2628, %v2676
  %v2678 = vand.u32 %v1815, 4294901760
  %2679 = vmatmul.f32.gmra.mxu0 %v2678
  %v2680 = vpop.f32.mrf.mxu0
  %v2681 = vadd.f32 %v2632, %v2680
  %v2682 = vand.u32 %v1816, 4294901760
  %2683 = vmatmul.f32.gmra.mxu0 %v2682
  %v2684 = vpop.f32.mrf.mxu0
  %v2685 = vadd.f32 %v2636, %v2684
  %v2686 = vand.u32 %v1817, 4294901760
  %2687 = vmatmul.f32.gmra.mxu0 %v2686
  %v2688 = vpop.f32.mrf.mxu0
  %v2689 = vadd.f32 %v2640, %v2688
  %2690 = vdwg.mxu0
  %v2691 = vxor.u32 %v2243, 2147483648
  %v2692 = vxor.u32 %v2677, 2147483648
  %v2693 = vxor.u32 %v2247, 2147483648
  %v2694 = vxor.u32 %v2681, 2147483648
  %v2695 = vxor.u32 %v2251, 2147483648
  %v2696 = vxor.u32 %v2685, 2147483648
  %v2697 = vxor.u32 %v2255, 2147483648
  %v2698 = vxor.u32 %v2689, 2147483648
  %v2699 = vmul.f32 %v2691, 1.442695
  %v2700 = vpow.pop %v2699
  %v2701 = vmul.f32 %v2692, 1.442695
  %v2702 = vpow.pop %v2701
  %v2703 = vmul.f32 %v2693, 1.442695
  %v2704 = vpow.pop %v2703
  %v2705 = vmul.f32 %v2694, 1.442695
  %v2706 = vpow.pop %v2705
  %v2707 = vmul.f32 %v2695, 1.442695
  %v2708 = vpow.pop %v2707
  %v2709 = vmul.f32 %v2696, 1.442695
  %v2710 = vpow.pop %v2709
  %v2711 = vmul.f32 %v2697, 1.442695
  %v2712 = vpow.pop %v2711
  %v2713 = vmul.f32 %v2698, 1.442695
  %v2714 = vpow.pop %v2713
  %v2715 = vadd.f32 %v2700, 1.0
  %v2716 = vadd.f32 %v2702, 1.0
  %v2717 = vadd.f32 %v2704, 1.0
  %v2718 = vadd.f32 %v2706, 1.0
  %v2719 = vadd.f32 %v2708, 1.0
  %v2720 = vadd.f32 %v2710, 1.0
  %v2721 = vadd.f32 %v2712, 1.0
  %v2722 = vadd.f32 %v2714, 1.0
  %v2723 = vrcp.pop %v2715
  %v2724 = vmul.f32 %v2715, %v2723
  %v2725 = vsub.f32 1.0, %v2724
  %v2726 = vmul.f32 %v2723, %v2725
  %v2727 = vadd.f32 %v2723, %v2726
  %vm2728 = vweird.f32 %v2715
  %vm2729 = vweird.f32 %v2723
  %vm2730 = vmor %vm2728, %vm2729
  %v2731 = vsel %vm2730, %v2723, %v2727
  %v2732 = vand.u32 2147483647, %v2715
  %vm2733 = vcmp.eq.f32.partialorder %v2732, 8.507059e+37
  %v2734 = vand.u32 %v2715, 2147483648
  %v2735 = vor.u32 1.1754944e-38, %v2734
  %v2736 = vsel %vm2733, %v2735, %v2731
  %v2737 = vmul.f32 1.0, %v2736
  %v2738 = vrcp.pop %v2716
  %v2739 = vmul.f32 %v2716, %v2738
  %v2740 = vsub.f32 1.0, %v2739
  %v2741 = vmul.f32 %v2738, %v2740
  %v2742 = vadd.f32 %v2738, %v2741
  %vm2743 = vweird.f32 %v2716
  %vm2744 = vweird.f32 %v2738
  %vm2745 = vmor %vm2743, %vm2744
  %v2746 = vsel %vm2745, %v2738, %v2742
  %v2747 = vand.u32 2147483647, %v2716
  %vm2748 = vcmp.eq.f32.partialorder %v2747, 8.507059e+37
  %v2749 = vand.u32 %v2716, 2147483648
  %v2750 = vor.u32 1.1754944e-38, %v2749
  %v2751 = vsel %vm2748, %v2750, %v2746
  %v2752 = vmul.f32 1.0, %v2751
  %v2753 = vrcp.pop %v2717
  %v2754 = vmul.f32 %v2717, %v2753
  %v2755 = vsub.f32 1.0, %v2754
  %v2756 = vmul.f32 %v2753, %v2755
  %v2757 = vadd.f32 %v2753, %v2756
  %vm2758 = vweird.f32 %v2717
  %vm2759 = vweird.f32 %v2753
  %vm2760 = vmor %vm2758, %vm2759
  %v2761 = vsel %vm2760, %v2753, %v2757
  %v2762 = vand.u32 2147483647, %v2717
  %vm2763 = vcmp.eq.f32.partialorder %v2762, 8.507059e+37
  %v2764 = vand.u32 %v2717, 2147483648
  %v2765 = vor.u32 1.1754944e-38, %v2764
  %v2766 = vsel %vm2763, %v2765, %v2761
  %v2767 = vmul.f32 1.0, %v2766
  %v2768 = vrcp.pop %v2718
  %v2769 = vmul.f32 %v2718, %v2768
  %v2770 = vsub.f32 1.0, %v2769
  %v2771 = vmul.f32 %v2768, %v2770
  %v2772 = vadd.f32 %v2768, %v2771
  %vm2773 = vweird.f32 %v2718
  %vm2774 = vweird.f32 %v2768
  %vm2775 = vmor %vm2773, %vm2774
  %v2776 = vsel %vm2775, %v2768, %v2772
  %v2777 = vand.u32 2147483647, %v2718
  %vm2778 = vcmp.eq.f32.partialorder %v2777, 8.507059e+37
  %v2779 = vand.u32 %v2718, 2147483648
  %v2780 = vor.u32 1.1754944e-38, %v2779
  %v2781 = vsel %vm2778, %v2780, %v2776
  %v2782 = vmul.f32 1.0, %v2781
  %v2783 = vrcp.pop %v2719
  %v2784 = vmul.f32 %v2719, %v2783
  %v2785 = vsub.f32 1.0, %v2784
  %v2786 = vmul.f32 %v2783, %v2785
  %v2787 = vadd.f32 %v2783, %v2786
  %vm2788 = vweird.f32 %v2719
  %vm2789 = vweird.f32 %v2783
  %vm2790 = vmor %vm2788, %vm2789
  %v2791 = vsel %vm2790, %v2783, %v2787
  %v2792 = vand.u32 2147483647, %v2719
  %vm2793 = vcmp.eq.f32.partialorder %v2792, 8.507059e+37
  %v2794 = vand.u32 %v2719, 2147483648
  %v2795 = vor.u32 1.1754944e-38, %v2794
  %v2796 = vsel %vm2793, %v2795, %v2791
  %v2797 = vmul.f32 1.0, %v2796
  %v2798 = vrcp.pop %v2720
  %v2799 = vmul.f32 %v2720, %v2798
  %v2800 = vsub.f32 1.0, %v2799
  %v2801 = vmul.f32 %v2798, %v2800
  %v2802 = vadd.f32 %v2798, %v2801
  %vm2803 = vweird.f32 %v2720
  %vm2804 = vweird.f32 %v2798
  %vm2805 = vmor %vm2803, %vm2804
  %v2806 = vsel %vm2805, %v2798, %v2802
  %v2807 = vand.u32 2147483647, %v2720
  %vm2808 = vcmp.eq.f32.partialorder %v2807, 8.507059e+37
  %v2809 = vand.u32 %v2720, 2147483648
  %v2810 = vor.u32 1.1754944e-38, %v2809
  %v2811 = vsel %vm2808, %v2810, %v2806
  %v2812 = vmul.f32 1.0, %v2811
  %v2813 = vrcp.pop %v2721
  %v2814 = vmul.f32 %v2721, %v2813
  %v2815 = vsub.f32 1.0, %v2814
  %v2816 = vmul.f32 %v2813, %v2815
  %v2817 = vadd.f32 %v2813, %v2816
  %vm2818 = vweird.f32 %v2721
  %vm2819 = vweird.f32 %v2813
  %vm2820 = vmor %vm2818, %vm2819
  %v2821 = vsel %vm2820, %v2813, %v2817
  %v2822 = vand.u32 2147483647, %v2721
  %vm2823 = vcmp.eq.f32.partialorder %v2822, 8.507059e+37
  %v2824 = vand.u32 %v2721, 2147483648
  %v2825 = vor.u32 1.1754944e-38, %v2824
  %v2826 = vsel %vm2823, %v2825, %v2821
  %v2827 = vmul.f32 1.0, %v2826
  %v2828 = vrcp.pop %v2722
  %v2829 = vmul.f32 %v2722, %v2828
  %v2830 = vsub.f32 1.0, %v2829
  %v2831 = vmul.f32 %v2828, %v2830
  %v2832 = vadd.f32 %v2828, %v2831
  %vm2833 = vweird.f32 %v2722
  %vm2834 = vweird.f32 %v2828
  %vm2835 = vmor %vm2833, %vm2834
  %v2836 = vsel %vm2835, %v2828, %v2832
  %v2837 = vand.u32 2147483647, %v2722
  %vm2838 = vcmp.eq.f32.partialorder %v2837, 8.507059e+37
  %v2839 = vand.u32 %v2722, 2147483648
  %v2840 = vor.u32 1.1754944e-38, %v2839
  %v2841 = vsel %vm2838, %v2840, %v2836
  %v2842 = vmul.f32 1.0, %v2841
  %v2843 = vmul.f32 %v2243, %v2737
  %v2844 = vmul.f32 %v2677, %v2752
  %v2845 = vmul.f32 %v2247, %v2767
  %v2846 = vmul.f32 %v2681, %v2782
  %v2847 = vmul.f32 %v2251, %v2797
  %v2848 = vmul.f32 %v2685, %v2812
  %v2849 = vmul.f32 %v2255, %v2827
  %v2850 = vmul.f32 %v2689, %v2842
  %v2851 = vperm.slane %v106, 0
  %v2852 = vand.u32 %v89, 4294901760
  %2853 = vmatpush.msra.mxu0 %v2852
  %v2854 = vand.u32 %v88, 4294901760
  %2855 = vmatpush.msra.mxu0 %v2854
  %v2856 = vand.u32 %v87, 4294901760
  %2857 = vmatpush.msra.mxu0 %v2856
  %v2858 = vand.u32 %v86, 4294901760
  %2859 = vmatpush.msra.mxu0 %v2858
  %v2860 = vand.u32 %v85, 4294901760
  %2861 = vmatpush.msra.mxu0 %v2860
  %v2862 = vand.u32 %v84, 4294901760
  %2863 = vmatpush.msra.mxu0 %v2862
  %v2864 = vand.u32 %v83, 4294901760
  %2865 = vmatpush.msra.mxu0 %v2864
  %v2866 = vand.u32 %v82, 4294901760
  %2867 = vmatpush.msra.mxu0 %v2866
  %v2868 = vand.u32 %v81, 4294901760
  %2869 = vmatpush.msra.mxu0 %v2868
  %v2870 = vand.u32 %v80, 4294901760
  %2871 = vmatpush.msra.mxu0 %v2870
  %v2872 = vand.u32 %v79, 4294901760
  %2873 = vmatpush.msra.mxu0 %v2872
  %v2874 = vand.u32 %v78, 4294901760
  %2875 = vmatpush.msra.mxu0 %v2874
  %v2876 = vand.u32 %v77, 4294901760
  %2877 = vmatpush.msra.mxu0 %v2876
  %v2878 = vand.u32 %v76, 4294901760
  %2879 = vmatpush.msra.mxu0 %v2878
  %v2880 = vand.u32 %v75, 4294901760
  %2881 = vmatpush.msra.mxu0 %v2880
  %v2882 = vand.u32 %v74, 4294901760
  %2883 = vmatpush.msra.mxu0 %v2882
  %v2884 = vand.u32 %v2843, 4294901760
  %v2885 = vsub.f32 %v2843, %v2884
  %v2886 = vand.u32 %v2885, 4294901760
  %v2887 = vsub.f32 %v2885, %v2886
  %v2888 = vand.u32 %v2887, 4294901760
  %2889 = vmatmul.f32.gmra.mxu0 %v2888
  %v2890 = vpop.f32.mrf.mxu0
  %v2891 = vadd.f32 %v2851, %v2890
  %v2892 = vand.u32 %v2845, 4294901760
  %v2893 = vsub.f32 %v2845, %v2892
  %v2894 = vand.u32 %v2893, 4294901760
  %v2895 = vsub.f32 %v2893, %v2894
  %v2896 = vand.u32 %v2895, 4294901760
  %2897 = vmatmul.f32.gmra.mxu0 %v2896
  %v2898 = vpop.f32.mrf.mxu0
  %v2899 = vadd.f32 %v2851, %v2898
  %v2900 = vand.u32 %v2847, 4294901760
  %v2901 = vsub.f32 %v2847, %v2900
  %v2902 = vand.u32 %v2901, 4294901760
  %v2903 = vsub.f32 %v2901, %v2902
  %v2904 = vand.u32 %v2903, 4294901760
  %2905 = vmatmul.f32.gmra.mxu0 %v2904
  %v2906 = vpop.f32.mrf.mxu0
  %v2907 = vadd.f32 %v2851, %v2906
  %v2908 = vand.u32 %v2849, 4294901760
  %v2909 = vsub.f32 %v2849, %v2908
  %v2910 = vand.u32 %v2909, 4294901760
  %v2911 = vsub.f32 %v2909, %v2910
  %v2912 = vand.u32 %v2911, 4294901760
  %2913 = vmatmul.f32.gmra.mxu0 %v2912
  %v2914 = vpop.f32.mrf.mxu0
  %v2915 = vadd.f32 %v2851, %v2914
  %2916 = vdwg.mxu0
  %v2917 = vand.u32 %v89, 4294901760
  %v2918 = vsub.f32 %v89, %v2917
  %v2919 = vand.u32 %v2918, 4294901760
  %v2920 = vsub.f32 %v2918, %v2919
  %v2921 = vand.u32 %v2920, 4294901760
  %2922 = vmatpush.msra.mxu0 %v2921
  %v2923 = vand.u32 %v88, 4294901760
  %v2924 = vsub.f32 %v88, %v2923
  %v2925 = vand.u32 %v2924, 4294901760
  %v2926 = vsub.f32 %v2924, %v2925
  %v2927 = vand.u32 %v2926, 4294901760
  %2928 = vmatpush.msra.mxu0 %v2927
  %v2929 = vand.u32 %v87, 4294901760
  %v2930 = vsub.f32 %v87, %v2929
  %v2931 = vand.u32 %v2930, 4294901760
  %v2932 = vsub.f32 %v2930, %v2931
  %v2933 = vand.u32 %v2932, 4294901760
  %2934 = vmatpush.msra.mxu0 %v2933
  %v2935 = vand.u32 %v86, 4294901760
  %v2936 = vsub.f32 %v86, %v2935
  %v2937 = vand.u32 %v2936, 4294901760
  %v2938 = vsub.f32 %v2936, %v2937
  %v2939 = vand.u32 %v2938, 4294901760
  %2940 = vmatpush.msra.mxu0 %v2939
  %v2941 = vand.u32 %v85, 4294901760
  %v2942 = vsub.f32 %v85, %v2941
  %v2943 = vand.u32 %v2942, 4294901760
  %v2944 = vsub.f32 %v2942, %v2943
  %v2945 = vand.u32 %v2944, 4294901760
  %2946 = vmatpush.msra.mxu0 %v2945
  %v2947 = vand.u32 %v84, 4294901760
  %v2948 = vsub.f32 %v84, %v2947
  %v2949 = vand.u32 %v2948, 4294901760
  %v2950 = vsub.f32 %v2948, %v2949
  %v2951 = vand.u32 %v2950, 4294901760
  %2952 = vmatpush.msra.mxu0 %v2951
  %v2953 = vand.u32 %v83, 4294901760
  %v2954 = vsub.f32 %v83, %v2953
  %v2955 = vand.u32 %v2954, 4294901760
  %v2956 = vsub.f32 %v2954, %v2955
  %v2957 = vand.u32 %v2956, 4294901760
  %2958 = vmatpush.msra.mxu0 %v2957
  %v2959 = vand.u32 %v82, 4294901760
  %v2960 = vsub.f32 %v82, %v2959
  %v2961 = vand.u32 %v2960, 4294901760
  %v2962 = vsub.f32 %v2960, %v2961
  %v2963 = vand.u32 %v2962, 4294901760
  %2964 = vmatpush.msra.mxu0 %v2963
  %v2965 = vand.u32 %v81, 4294901760
  %v2966 = vsub.f32 %v81, %v2965
  %v2967 = vand.u32 %v2966, 4294901760
  %v2968 = vsub.f32 %v2966, %v2967
  %v2969 = vand.u32 %v2968, 4294901760
  %2970 = vmatpush.msra.mxu0 %v2969
  %v2971 = vand.u32 %v80, 4294901760
  %v2972 = vsub.f32 %v80, %v2971
  %v2973 = vand.u32 %v2972, 4294901760
  %v2974 = vsub.f32 %v2972, %v2973
  %v2975 = vand.u32 %v2974, 4294901760
  %2976 = vmatpush.msra.mxu0 %v2975
  %v2977 = vand.u32 %v79, 4294901760
  %v2978 = vsub.f32 %v79, %v2977
  %v2979 = vand.u32 %v2978, 4294901760
  %v2980 = vsub.f32 %v2978, %v2979
  %v2981 = vand.u32 %v2980, 4294901760
  %2982 = vmatpush.msra.mxu0 %v2981
  %v2983 = vand.u32 %v78, 4294901760
  %v2984 = vsub.f32 %v78, %v2983
  %v2985 = vand.u32 %v2984, 4294901760
  %v2986 = vsub.f32 %v2984, %v2985
  %v2987 = vand.u32 %v2986, 4294901760
  %2988 = vmatpush.msra.mxu0 %v2987
  %v2989 = vand.u32 %v77, 4294901760
  %v2990 = vsub.f32 %v77, %v2989
  %v2991 = vand.u32 %v2990, 4294901760
  %v2992 = vsub.f32 %v2990, %v2991
  %v2993 = vand.u32 %v2992, 4294901760
  %2994 = vmatpush.msra.mxu0 %v2993
  %v2995 = vand.u32 %v76, 4294901760
  %v2996 = vsub.f32 %v76, %v2995
  %v2997 = vand.u32 %v2996, 4294901760
  %v2998 = vsub.f32 %v2996, %v2997
  %v2999 = vand.u32 %v2998, 4294901760
  %3000 = vmatpush.msra.mxu0 %v2999
  %v3001 = vand.u32 %v75, 4294901760
  %v3002 = vsub.f32 %v75, %v3001
  %v3003 = vand.u32 %v3002, 4294901760
  %v3004 = vsub.f32 %v3002, %v3003
  %v3005 = vand.u32 %v3004, 4294901760
  %3006 = vmatpush.msra.mxu0 %v3005
  %v3007 = vand.u32 %v74, 4294901760
  %v3008 = vsub.f32 %v74, %v3007
  %v3009 = vand.u32 %v3008, 4294901760
  %v3010 = vsub.f32 %v3008, %v3009
  %v3011 = vand.u32 %v3010, 4294901760
  %3012 = vmatpush.msra.mxu0 %v3011
  %v3013 = vand.u32 %v2843, 4294901760
  %3014 = vmatmul.f32.gmra.mxu0 %v3013
  %v3015 = vpop.f32.mrf.mxu0
  %v3016 = vadd.f32 %v2891, %v3015
  %v3017 = vand.u32 %v2845, 4294901760
  %3018 = vmatmul.f32.gmra.mxu0 %v3017
  %v3019 = vpop.f32.mrf.mxu0
  %v3020 = vadd.f32 %v2899, %v3019
  %v3021 = vand.u32 %v2847, 4294901760
  %3022 = vmatmul.f32.gmra.mxu0 %v3021
  %v3023 = vpop.f32.mrf.mxu0
  %v3024 = vadd.f32 %v2907, %v3023
  %v3025 = vand.u32 %v2849, 4294901760
  %3026 = vmatmul.f32.gmra.mxu0 %v3025
  %v3027 = vpop.f32.mrf.mxu0
  %v3028 = vadd.f32 %v2915, %v3027
  %3029 = vdwg.mxu0
  %v3030 = vand.u32 %v89, 4294901760
  %v3031 = vsub.f32 %v89, %v3030
  %3032 = vmatpush.msra.mxu0 %v3031
  %v3033 = vand.u32 %v88, 4294901760
  %v3034 = vsub.f32 %v88, %v3033
  %3035 = vmatpush.msra.mxu0 %v3034
  %v3036 = vand.u32 %v87, 4294901760
  %v3037 = vsub.f32 %v87, %v3036
  %3038 = vmatpush.msra.mxu0 %v3037
  %v3039 = vand.u32 %v86, 4294901760
  %v3040 = vsub.f32 %v86, %v3039
  %3041 = vmatpush.msra.mxu0 %v3040
  %v3042 = vand.u32 %v85, 4294901760
  %v3043 = vsub.f32 %v85, %v3042
  %3044 = vmatpush.msra.mxu0 %v3043
  %v3045 = vand.u32 %v84, 4294901760
  %v3046 = vsub.f32 %v84, %v3045
  %3047 = vmatpush.msra.mxu0 %v3046
  %v3048 = vand.u32 %v83, 4294901760
  %v3049 = vsub.f32 %v83, %v3048
  %3050 = vmatpush.msra.mxu0 %v3049
  %v3051 = vand.u32 %v82, 4294901760
  %v3052 = vsub.f32 %v82, %v3051
  %3053 = vmatpush.msra.mxu0 %v3052
  %v3054 = vand.u32 %v81, 4294901760
  %v3055 = vsub.f32 %v81, %v3054
  %3056 = vmatpush.msra.mxu0 %v3055
  %v3057 = vand.u32 %v80, 4294901760
  %v3058 = vsub.f32 %v80, %v3057
  %3059 = vmatpush.msra.mxu0 %v3058
  %v3060 = vand.u32 %v79, 4294901760
  %v3061 = vsub.f32 %v79, %v3060
  %3062 = vmatpush.msra.mxu0 %v3061
  %v3063 = vand.u32 %v78, 4294901760
  %v3064 = vsub.f32 %v78, %v3063
  %3065 = vmatpush.msra.mxu0 %v3064
  %v3066 = vand.u32 %v77, 4294901760
  %v3067 = vsub.f32 %v77, %v3066
  %3068 = vmatpush.msra.mxu0 %v3067
  %v3069 = vand.u32 %v76, 4294901760
  %v3070 = vsub.f32 %v76, %v3069
  %3071 = vmatpush.msra.mxu0 %v3070
  %v3072 = vand.u32 %v75, 4294901760
  %v3073 = vsub.f32 %v75, %v3072
  %3074 = vmatpush.msra.mxu0 %v3073
  %v3075 = vand.u32 %v74, 4294901760
  %v3076 = vsub.f32 %v74, %v3075
  %3077 = vmatpush.msra.mxu0 %v3076
  %v3078 = vand.u32 %v2843, 4294901760
  %v3079 = vsub.f32 %v2843, %v3078
  %3080 = vmatmul.f32.gmra.mxu0 %v3079
  %v3081 = vpop.f32.mrf.mxu0
  %v3082 = vadd.f32 %v3016, %v3081
  %v3083 = vand.u32 %v2845, 4294901760
  %v3084 = vsub.f32 %v2845, %v3083
  %3085 = vmatmul.f32.gmra.mxu0 %v3084
  %v3086 = vpop.f32.mrf.mxu0
  %v3087 = vadd.f32 %v3020, %v3086
  %v3088 = vand.u32 %v2847, 4294901760
  %v3089 = vsub.f32 %v2847, %v3088
  %3090 = vmatmul.f32.gmra.mxu0 %v3089
  %v3091 = vpop.f32.mrf.mxu0
  %v3092 = vadd.f32 %v3024, %v3091
  %v3093 = vand.u32 %v2849, 4294901760
  %v3094 = vsub.f32 %v2849, %v3093
  %3095 = vmatmul.f32.gmra.mxu0 %v3094
  %v3096 = vpop.f32.mrf.mxu0
  %v3097 = vadd.f32 %v3028, %v3096
  %3098 = vdwg.mxu0
  %v3099 = vand.u32 %v89, 4294901760
  %3100 = vmatpush.msra.mxu0 %v3099
  %v3101 = vand.u32 %v88, 4294901760
  %3102 = vmatpush.msra.mxu0 %v3101
  %v3103 = vand.u32 %v87, 4294901760
  %3104 = vmatpush.msra.mxu0 %v3103
  %v3105 = vand.u32 %v86, 4294901760
  %3106 = vmatpush.msra.mxu0 %v3105
  %v3107 = vand.u32 %v85, 4294901760
  %3108 = vmatpush.msra.mxu0 %v3107
  %v3109 = vand.u32 %v84, 4294901760
  %3110 = vmatpush.msra.mxu0 %v3109
  %v3111 = vand.u32 %v83, 4294901760
  %3112 = vmatpush.msra.mxu0 %v3111
  %v3113 = vand.u32 %v82, 4294901760
  %3114 = vmatpush.msra.mxu0 %v3113
  %v3115 = vand.u32 %v81, 4294901760
  %3116 = vmatpush.msra.mxu0 %v3115
  %v3117 = vand.u32 %v80, 4294901760
  %3118 = vmatpush.msra.mxu0 %v3117
  %v3119 = vand.u32 %v79, 4294901760
  %3120 = vmatpush.msra.mxu0 %v3119
  %v3121 = vand.u32 %v78, 4294901760
  %3122 = vmatpush.msra.mxu0 %v3121
  %v3123 = vand.u32 %v77, 4294901760
  %3124 = vmatpush.msra.mxu0 %v3123
  %v3125 = vand.u32 %v76, 4294901760
  %3126 = vmatpush.msra.mxu0 %v3125
  %v3127 = vand.u32 %v75, 4294901760
  %3128 = vmatpush.msra.mxu0 %v3127
  %v3129 = vand.u32 %v74, 4294901760
  %3130 = vmatpush.msra.mxu0 %v3129
  %v3131 = vand.u32 %v2843, 4294901760
  %v3132 = vsub.f32 %v2843, %v3131
  %v3133 = vand.u32 %v3132, 4294901760
  %3134 = vmatmul.f32.gmra.mxu0 %v3133
  %v3135 = vpop.f32.mrf.mxu0
  %v3136 = vadd.f32 %v3082, %v3135
  %v3137 = vand.u32 %v2845, 4294901760
  %v3138 = vsub.f32 %v2845, %v3137
  %v3139 = vand.u32 %v3138, 4294901760
  %3140 = vmatmul.f32.gmra.mxu0 %v3139
  %v3141 = vpop.f32.mrf.mxu0
  %v3142 = vadd.f32 %v3087, %v3141
  %v3143 = vand.u32 %v2847, 4294901760
  %v3144 = vsub.f32 %v2847, %v3143
  %v3145 = vand.u32 %v3144, 4294901760
  %3146 = vmatmul.f32.gmra.mxu0 %v3145
  %v3147 = vpop.f32.mrf.mxu0
  %v3148 = vadd.f32 %v3092, %v3147
  %v3149 = vand.u32 %v2849, 4294901760
  %v3150 = vsub.f32 %v2849, %v3149
  %v3151 = vand.u32 %v3150, 4294901760
  %3152 = vmatmul.f32.gmra.mxu0 %v3151
  %v3153 = vpop.f32.mrf.mxu0
  %v3154 = vadd.f32 %v3097, %v3153
  %3155 = vdwg.mxu0
  %v3156 = vand.u32 %v89, 4294901760
  %v3157 = vsub.f32 %v89, %v3156
  %v3158 = vand.u32 %v3157, 4294901760
  %3159 = vmatpush.msra.mxu0 %v3158
  %v3160 = vand.u32 %v88, 4294901760
  %v3161 = vsub.f32 %v88, %v3160
  %v3162 = vand.u32 %v3161, 4294901760
  %3163 = vmatpush.msra.mxu0 %v3162
  %v3164 = vand.u32 %v87, 4294901760
  %v3165 = vsub.f32 %v87, %v3164
  %v3166 = vand.u32 %v3165, 4294901760
  %3167 = vmatpush.msra.mxu0 %v3166
  %v3168 = vand.u32 %v86, 4294901760
  %v3169 = vsub.f32 %v86, %v3168
  %v3170 = vand.u32 %v3169, 4294901760
  %3171 = vmatpush.msra.mxu0 %v3170
  %v3172 = vand.u32 %v85, 4294901760
  %v3173 = vsub.f32 %v85, %v3172
  %v3174 = vand.u32 %v3173, 4294901760
  %3175 = vmatpush.msra.mxu0 %v3174
  %v3176 = vand.u32 %v84, 4294901760
  %v3177 = vsub.f32 %v84, %v3176
  %v3178 = vand.u32 %v3177, 4294901760
  %3179 = vmatpush.msra.mxu0 %v3178
  %v3180 = vand.u32 %v83, 4294901760
  %v3181 = vsub.f32 %v83, %v3180
  %v3182 = vand.u32 %v3181, 4294901760
  %3183 = vmatpush.msra.mxu0 %v3182
  %v3184 = vand.u32 %v82, 4294901760
  %v3185 = vsub.f32 %v82, %v3184
  %v3186 = vand.u32 %v3185, 4294901760
  %3187 = vmatpush.msra.mxu0 %v3186
  %v3188 = vand.u32 %v81, 4294901760
  %v3189 = vsub.f32 %v81, %v3188
  %v3190 = vand.u32 %v3189, 4294901760
  %3191 = vmatpush.msra.mxu0 %v3190
  %v3192 = vand.u32 %v80, 4294901760
  %v3193 = vsub.f32 %v80, %v3192
  %v3194 = vand.u32 %v3193, 4294901760
  %3195 = vmatpush.msra.mxu0 %v3194
  %v3196 = vand.u32 %v79, 4294901760
  %v3197 = vsub.f32 %v79, %v3196
  %v3198 = vand.u32 %v3197, 4294901760
  %3199 = vmatpush.msra.mxu0 %v3198
  %v3200 = vand.u32 %v78, 4294901760
  %v3201 = vsub.f32 %v78, %v3200
  %v3202 = vand.u32 %v3201, 4294901760
  %3203 = vmatpush.msra.mxu0 %v3202
  %v3204 = vand.u32 %v77, 4294901760
  %v3205 = vsub.f32 %v77, %v3204
  %v3206 = vand.u32 %v3205, 4294901760
  %3207 = vmatpush.msra.mxu0 %v3206
  %v3208 = vand.u32 %v76, 4294901760
  %v3209 = vsub.f32 %v76, %v3208
  %v3210 = vand.u32 %v3209, 4294901760
  %3211 = vmatpush.msra.mxu0 %v3210
  %v3212 = vand.u32 %v75, 4294901760
  %v3213 = vsub.f32 %v75, %v3212
  %v3214 = vand.u32 %v3213, 4294901760
  %3215 = vmatpush.msra.mxu0 %v3214
  %v3216 = vand.u32 %v74, 4294901760
  %v3217 = vsub.f32 %v74, %v3216
  %v3218 = vand.u32 %v3217, 4294901760
  %3219 = vmatpush.msra.mxu0 %v3218
  %v3220 = vand.u32 %v2843, 4294901760
  %3221 = vmatmul.f32.gmra.mxu0 %v3220
  %v3222 = vpop.f32.mrf.mxu0
  %v3223 = vadd.f32 %v3136, %v3222
  %v3224 = vand.u32 %v2845, 4294901760
  %3225 = vmatmul.f32.gmra.mxu0 %v3224
  %v3226 = vpop.f32.mrf.mxu0
  %v3227 = vadd.f32 %v3142, %v3226
  %v3228 = vand.u32 %v2847, 4294901760
  %3229 = vmatmul.f32.gmra.mxu0 %v3228
  %v3230 = vpop.f32.mrf.mxu0
  %v3231 = vadd.f32 %v3148, %v3230
  %v3232 = vand.u32 %v2849, 4294901760
  %3233 = vmatmul.f32.gmra.mxu0 %v3232
  %v3234 = vpop.f32.mrf.mxu0
  %v3235 = vadd.f32 %v3154, %v3234
  %3236 = vdwg.mxu0
  %v3237 = vand.u32 %v89, 4294901760
  %3238 = vmatpush.msra.mxu0 %v3237
  %v3239 = vand.u32 %v88, 4294901760
  %3240 = vmatpush.msra.mxu0 %v3239
  %v3241 = vand.u32 %v87, 4294901760
  %3242 = vmatpush.msra.mxu0 %v3241
  %v3243 = vand.u32 %v86, 4294901760
  %3244 = vmatpush.msra.mxu0 %v3243
  %v3245 = vand.u32 %v85, 4294901760
  %3246 = vmatpush.msra.mxu0 %v3245
  %v3247 = vand.u32 %v84, 4294901760
  %3248 = vmatpush.msra.mxu0 %v3247
  %v3249 = vand.u32 %v83, 4294901760
  %3250 = vmatpush.msra.mxu0 %v3249
  %v3251 = vand.u32 %v82, 4294901760
  %3252 = vmatpush.msra.mxu0 %v3251
  %v3253 = vand.u32 %v81, 4294901760
  %3254 = vmatpush.msra.mxu0 %v3253
  %v3255 = vand.u32 %v80, 4294901760
  %3256 = vmatpush.msra.mxu0 %v3255
  %v3257 = vand.u32 %v79, 4294901760
  %3258 = vmatpush.msra.mxu0 %v3257
  %v3259 = vand.u32 %v78, 4294901760
  %3260 = vmatpush.msra.mxu0 %v3259
  %v3261 = vand.u32 %v77, 4294901760
  %3262 = vmatpush.msra.mxu0 %v3261
  %v3263 = vand.u32 %v76, 4294901760
  %3264 = vmatpush.msra.mxu0 %v3263
  %v3265 = vand.u32 %v75, 4294901760
  %3266 = vmatpush.msra.mxu0 %v3265
  %v3267 = vand.u32 %v74, 4294901760
  %3268 = vmatpush.msra.mxu0 %v3267
  %v3269 = vand.u32 %v2843, 4294901760
  %3270 = vmatmul.f32.gmra.mxu0 %v3269
  %v3271 = vpop.f32.mrf.mxu0
  %v3272 = vadd.f32 %v3223, %v3271
  %v3273 = vand.u32 %v2845, 4294901760
  %3274 = vmatmul.f32.gmra.mxu0 %v3273
  %v3275 = vpop.f32.mrf.mxu0
  %v3276 = vadd.f32 %v3227, %v3275
  %v3277 = vand.u32 %v2847, 4294901760
  %3278 = vmatmul.f32.gmra.mxu0 %v3277
  %v3279 = vpop.f32.mrf.mxu0
  %v3280 = vadd.f32 %v3231, %v3279
  %v3281 = vand.u32 %v2849, 4294901760
  %3282 = vmatmul.f32.gmra.mxu0 %v3281
  %v3283 = vpop.f32.mrf.mxu0
  %v3284 = vadd.f32 %v3235, %v3283
  %3285 = vdwg.mxu0
  %v3286 = vand.u32 %v105, 4294901760
  %3287 = vmatpush.msra.mxu0 %v3286
  %v3288 = vand.u32 %v104, 4294901760
  %3289 = vmatpush.msra.mxu0 %v3288
  %v3290 = vand.u32 %v103, 4294901760
  %3291 = vmatpush.msra.mxu0 %v3290
  %v3292 = vand.u32 %v102, 4294901760
  %3293 = vmatpush.msra.mxu0 %v3292
  %v3294 = vand.u32 %v101, 4294901760
  %3295 = vmatpush.msra.mxu0 %v3294
  %v3296 = vand.u32 %v100, 4294901760
  %3297 = vmatpush.msra.mxu0 %v3296
  %v3298 = vand.u32 %v99, 4294901760
  %3299 = vmatpush.msra.mxu0 %v3298
  %v3300 = vand.u32 %v98, 4294901760
  %3301 = vmatpush.msra.mxu0 %v3300
  %v3302 = vand.u32 %v97, 4294901760
  %3303 = vmatpush.msra.mxu0 %v3302
  %v3304 = vand.u32 %v96, 4294901760
  %3305 = vmatpush.msra.mxu0 %v3304
  %v3306 = vand.u32 %v95, 4294901760
  %3307 = vmatpush.msra.mxu0 %v3306
  %v3308 = vand.u32 %v94, 4294901760
  %3309 = vmatpush.msra.mxu0 %v3308
  %v3310 = vand.u32 %v93, 4294901760
  %3311 = vmatpush.msra.mxu0 %v3310
  %v3312 = vand.u32 %v92, 4294901760
  %3313 = vmatpush.msra.mxu0 %v3312
  %v3314 = vand.u32 %v91, 4294901760
  %3315 = vmatpush.msra.mxu0 %v3314
  %v3316 = vand.u32 %v90, 4294901760
  %3317 = vmatpush.msra.mxu0 %v3316
  %v3318 = vand.u32 %v2844, 4294901760
  %v3319 = vsub.f32 %v2844, %v3318
  %v3320 = vand.u32 %v3319, 4294901760
  %v3321 = vsub.f32 %v3319, %v3320
  %v3322 = vand.u32 %v3321, 4294901760
  %3323 = vmatmul.f32.gmra.mxu0 %v3322
  %v3324 = vpop.f32.mrf.mxu0
  %v3325 = vadd.f32 %v3272, %v3324
  %v3326 = vand.u32 %v2846, 4294901760
  %v3327 = vsub.f32 %v2846, %v3326
  %v3328 = vand.u32 %v3327, 4294901760
  %v3329 = vsub.f32 %v3327, %v3328
  %v3330 = vand.u32 %v3329, 4294901760
  %3331 = vmatmul.f32.gmra.mxu0 %v3330
  %v3332 = vpop.f32.mrf.mxu0
  %v3333 = vadd.f32 %v3276, %v3332
  %v3334 = vand.u32 %v2848, 4294901760
  %v3335 = vsub.f32 %v2848, %v3334
  %v3336 = vand.u32 %v3335, 4294901760
  %v3337 = vsub.f32 %v3335, %v3336
  %v3338 = vand.u32 %v3337, 4294901760
  %3339 = vmatmul.f32.gmra.mxu0 %v3338
  %v3340 = vpop.f32.mrf.mxu0
  %v3341 = vadd.f32 %v3280, %v3340
  %v3342 = vand.u32 %v2850, 4294901760
  %v3343 = vsub.f32 %v2850, %v3342
  %v3344 = vand.u32 %v3343, 4294901760
  %v3345 = vsub.f32 %v3343, %v3344
  %v3346 = vand.u32 %v3345, 4294901760
  %3347 = vmatmul.f32.gmra.mxu0 %v3346
  %v3348 = vpop.f32.mrf.mxu0
  %v3349 = vadd.f32 %v3284, %v3348
  %3350 = vdwg.mxu0
  %v3351 = vand.u32 %v105, 4294901760
  %v3352 = vsub.f32 %v105, %v3351
  %v3353 = vand.u32 %v3352, 4294901760
  %v3354 = vsub.f32 %v3352, %v3353
  %v3355 = vand.u32 %v3354, 4294901760
  %3356 = vmatpush.msra.mxu0 %v3355
  %v3357 = vand.u32 %v104, 4294901760
  %v3358 = vsub.f32 %v104, %v3357
  %v3359 = vand.u32 %v3358, 4294901760
  %v3360 = vsub.f32 %v3358, %v3359
  %v3361 = vand.u32 %v3360, 4294901760
  %3362 = vmatpush.msra.mxu0 %v3361
  %v3363 = vand.u32 %v103, 4294901760
  %v3364 = vsub.f32 %v103, %v3363
  %v3365 = vand.u32 %v3364, 4294901760
  %v3366 = vsub.f32 %v3364, %v3365
  %v3367 = vand.u32 %v3366, 4294901760
  %3368 = vmatpush.msra.mxu0 %v3367
  %v3369 = vand.u32 %v102, 4294901760
  %v3370 = vsub.f32 %v102, %v3369
  %v3371 = vand.u32 %v3370, 4294901760
  %v3372 = vsub.f32 %v3370, %v3371
  %v3373 = vand.u32 %v3372, 4294901760
  %3374 = vmatpush.msra.mxu0 %v3373
  %v3375 = vand.u32 %v101, 4294901760
  %v3376 = vsub.f32 %v101, %v3375
  %v3377 = vand.u32 %v3376, 4294901760
  %v3378 = vsub.f32 %v3376, %v3377
  %v3379 = vand.u32 %v3378, 4294901760
  %3380 = vmatpush.msra.mxu0 %v3379
  %v3381 = vand.u32 %v100, 4294901760
  %v3382 = vsub.f32 %v100, %v3381
  %v3383 = vand.u32 %v3382, 4294901760
  %v3384 = vsub.f32 %v3382, %v3383
  %v3385 = vand.u32 %v3384, 4294901760
  %3386 = vmatpush.msra.mxu0 %v3385
  %v3387 = vand.u32 %v99, 4294901760
  %v3388 = vsub.f32 %v99, %v3387
  %v3389 = vand.u32 %v3388, 4294901760
  %v3390 = vsub.f32 %v3388, %v3389
  %v3391 = vand.u32 %v3390, 4294901760
  %3392 = vmatpush.msra.mxu0 %v3391
  %v3393 = vand.u32 %v98, 4294901760
  %v3394 = vsub.f32 %v98, %v3393
  %v3395 = vand.u32 %v3394, 4294901760
  %v3396 = vsub.f32 %v3394, %v3395
  %v3397 = vand.u32 %v3396, 4294901760
  %3398 = vmatpush.msra.mxu0 %v3397
  %v3399 = vand.u32 %v97, 4294901760
  %v3400 = vsub.f32 %v97, %v3399
  %v3401 = vand.u32 %v3400, 4294901760
  %v3402 = vsub.f32 %v3400, %v3401
  %v3403 = vand.u32 %v3402, 4294901760
  %3404 = vmatpush.msra.mxu0 %v3403
  %v3405 = vand.u32 %v96, 4294901760
  %v3406 = vsub.f32 %v96, %v3405
  %v3407 = vand.u32 %v3406, 4294901760
  %v3408 = vsub.f32 %v3406, %v3407
  %v3409 = vand.u32 %v3408, 4294901760
  %3410 = vmatpush.msra.mxu0 %v3409
  %v3411 = vand.u32 %v95, 4294901760
  %v3412 = vsub.f32 %v95, %v3411
  %v3413 = vand.u32 %v3412, 4294901760
  %v3414 = vsub.f32 %v3412, %v3413
  %v3415 = vand.u32 %v3414, 4294901760
  %3416 = vmatpush.msra.mxu0 %v3415
  %v3417 = vand.u32 %v94, 4294901760
  %v3418 = vsub.f32 %v94, %v3417
  %v3419 = vand.u32 %v3418, 4294901760
  %v3420 = vsub.f32 %v3418, %v3419
  %v3421 = vand.u32 %v3420, 4294901760
  %3422 = vmatpush.msra.mxu0 %v3421
  %v3423 = vand.u32 %v93, 4294901760
  %v3424 = vsub.f32 %v93, %v3423
  %v3425 = vand.u32 %v3424, 4294901760
  %v3426 = vsub.f32 %v3424, %v3425
  %v3427 = vand.u32 %v3426, 4294901760
  %3428 = vmatpush.msra.mxu0 %v3427
  %v3429 = vand.u32 %v92, 4294901760
  %v3430 = vsub.f32 %v92, %v3429
  %v3431 = vand.u32 %v3430, 4294901760
  %v3432 = vsub.f32 %v3430, %v3431
  %v3433 = vand.u32 %v3432, 4294901760
  %3434 = vmatpush.msra.mxu0 %v3433
  %v3435 = vand.u32 %v91, 4294901760
  %v3436 = vsub.f32 %v91, %v3435
  %v3437 = vand.u32 %v3436, 4294901760
  %v3438 = vsub.f32 %v3436, %v3437
  %v3439 = vand.u32 %v3438, 4294901760
  %3440 = vmatpush.msra.mxu0 %v3439
  %v3441 = vand.u32 %v90, 4294901760
  %v3442 = vsub.f32 %v90, %v3441
  %v3443 = vand.u32 %v3442, 4294901760
  %v3444 = vsub.f32 %v3442, %v3443
  %v3445 = vand.u32 %v3444, 4294901760
  %3446 = vmatpush.msra.mxu0 %v3445
  %v3447 = vand.u32 %v2844, 4294901760
  %3448 = vmatmul.f32.gmra.mxu0 %v3447
  %v3449 = vpop.f32.mrf.mxu0
  %v3450 = vadd.f32 %v3325, %v3449
  %v3451 = vand.u32 %v2846, 4294901760
  %3452 = vmatmul.f32.gmra.mxu0 %v3451
  %v3453 = vpop.f32.mrf.mxu0
  %v3454 = vadd.f32 %v3333, %v3453
  %v3455 = vand.u32 %v2848, 4294901760
  %3456 = vmatmul.f32.gmra.mxu0 %v3455
  %v3457 = vpop.f32.mrf.mxu0
  %v3458 = vadd.f32 %v3341, %v3457
  %v3459 = vand.u32 %v2850, 4294901760
  %3460 = vmatmul.f32.gmra.mxu0 %v3459
  %v3461 = vpop.f32.mrf.mxu0
  %v3462 = vadd.f32 %v3349, %v3461
  %3463 = vdwg.mxu0
  %v3464 = vand.u32 %v105, 4294901760
  %v3465 = vsub.f32 %v105, %v3464
  %3466 = vmatpush.msra.mxu0 %v3465
  %v3467 = vand.u32 %v104, 4294901760
  %v3468 = vsub.f32 %v104, %v3467
  %3469 = vmatpush.msra.mxu0 %v3468
  %v3470 = vand.u32 %v103, 4294901760
  %v3471 = vsub.f32 %v103, %v3470
  %3472 = vmatpush.msra.mxu0 %v3471
  %v3473 = vand.u32 %v102, 4294901760
  %v3474 = vsub.f32 %v102, %v3473
  %3475 = vmatpush.msra.mxu0 %v3474
  %v3476 = vand.u32 %v101, 4294901760
  %v3477 = vsub.f32 %v101, %v3476
  %3478 = vmatpush.msra.mxu0 %v3477
  %v3479 = vand.u32 %v100, 4294901760
  %v3480 = vsub.f32 %v100, %v3479
  %3481 = vmatpush.msra.mxu0 %v3480
  %v3482 = vand.u32 %v99, 4294901760
  %v3483 = vsub.f32 %v99, %v3482
  %3484 = vmatpush.msra.mxu0 %v3483
  %v3485 = vand.u32 %v98, 4294901760
  %v3486 = vsub.f32 %v98, %v3485
  %3487 = vmatpush.msra.mxu0 %v3486
  %v3488 = vand.u32 %v97, 4294901760
  %v3489 = vsub.f32 %v97, %v3488
  %3490 = vmatpush.msra.mxu0 %v3489
  %v3491 = vand.u32 %v96, 4294901760
  %v3492 = vsub.f32 %v96, %v3491
  %3493 = vmatpush.msra.mxu0 %v3492
  %v3494 = vand.u32 %v95, 4294901760
  %v3495 = vsub.f32 %v95, %v3494
  %3496 = vmatpush.msra.mxu0 %v3495
  %v3497 = vand.u32 %v94, 4294901760
  %v3498 = vsub.f32 %v94, %v3497
  %3499 = vmatpush.msra.mxu0 %v3498
  %v3500 = vand.u32 %v93, 4294901760
  %v3501 = vsub.f32 %v93, %v3500
  %3502 = vmatpush.msra.mxu0 %v3501
  %v3503 = vand.u32 %v92, 4294901760
  %v3504 = vsub.f32 %v92, %v3503
  %3505 = vmatpush.msra.mxu0 %v3504
  %v3506 = vand.u32 %v91, 4294901760
  %v3507 = vsub.f32 %v91, %v3506
  %3508 = vmatpush.msra.mxu0 %v3507
  %v3509 = vand.u32 %v90, 4294901760
  %v3510 = vsub.f32 %v90, %v3509
  %3511 = vmatpush.msra.mxu0 %v3510
  %v3512 = vand.u32 %v2844, 4294901760
  %v3513 = vsub.f32 %v2844, %v3512
  %3514 = vmatmul.f32.gmra.mxu0 %v3513
  %v3515 = vpop.f32.mrf.mxu0
  %v3516 = vadd.f32 %v3450, %v3515
  %v3517 = vand.u32 %v2846, 4294901760
  %v3518 = vsub.f32 %v2846, %v3517
  %3519 = vmatmul.f32.gmra.mxu0 %v3518
  %v3520 = vpop.f32.mrf.mxu0
  %v3521 = vadd.f32 %v3454, %v3520
  %v3522 = vand.u32 %v2848, 4294901760
  %v3523 = vsub.f32 %v2848, %v3522
  %3524 = vmatmul.f32.gmra.mxu0 %v3523
  %v3525 = vpop.f32.mrf.mxu0
  %v3526 = vadd.f32 %v3458, %v3525
  %v3527 = vand.u32 %v2850, 4294901760
  %v3528 = vsub.f32 %v2850, %v3527
  %3529 = vmatmul.f32.gmra.mxu0 %v3528
  %v3530 = vpop.f32.mrf.mxu0
  %v3531 = vadd.f32 %v3462, %v3530
  %3532 = vdwg.mxu0
  %v3533 = vand.u32 %v105, 4294901760
  %3534 = vmatpush.msra.mxu0 %v3533
  %v3535 = vand.u32 %v104, 4294901760
  %3536 = vmatpush.msra.mxu0 %v3535
  %v3537 = vand.u32 %v103, 4294901760
  %3538 = vmatpush.msra.mxu0 %v3537
  %v3539 = vand.u32 %v102, 4294901760
  %3540 = vmatpush.msra.mxu0 %v3539
  %v3541 = vand.u32 %v101, 4294901760
  %3542 = vmatpush.msra.mxu0 %v3541
  %v3543 = vand.u32 %v100, 4294901760
  %3544 = vmatpush.msra.mxu0 %v3543
  %v3545 = vand.u32 %v99, 4294901760
  %3546 = vmatpush.msra.mxu0 %v3545
  %v3547 = vand.u32 %v98, 4294901760
  %3548 = vmatpush.msra.mxu0 %v3547
  %v3549 = vand.u32 %v97, 4294901760
  %3550 = vmatpush.msra.mxu0 %v3549
  %v3551 = vand.u32 %v96, 4294901760
  %3552 = vmatpush.msra.mxu0 %v3551
  %v3553 = vand.u32 %v95, 4294901760
  %3554 = vmatpush.msra.mxu0 %v3553
  %v3555 = vand.u32 %v94, 4294901760
  %3556 = vmatpush.msra.mxu0 %v3555
  %v3557 = vand.u32 %v93, 4294901760
  %3558 = vmatpush.msra.mxu0 %v3557
  %v3559 = vand.u32 %v92, 4294901760
  %3560 = vmatpush.msra.mxu0 %v3559
  %v3561 = vand.u32 %v91, 4294901760
  %3562 = vmatpush.msra.mxu0 %v3561
  %v3563 = vand.u32 %v90, 4294901760
  %3564 = vmatpush.msra.mxu0 %v3563
  %v3565 = vand.u32 %v2844, 4294901760
  %v3566 = vsub.f32 %v2844, %v3565
  %v3567 = vand.u32 %v3566, 4294901760
  %3568 = vmatmul.f32.gmra.mxu0 %v3567
  %v3569 = vpop.f32.mrf.mxu0
  %v3570 = vadd.f32 %v3516, %v3569
  %v3571 = vand.u32 %v2846, 4294901760
  %v3572 = vsub.f32 %v2846, %v3571
  %v3573 = vand.u32 %v3572, 4294901760
  %3574 = vmatmul.f32.gmra.mxu0 %v3573
  %v3575 = vpop.f32.mrf.mxu0
  %v3576 = vadd.f32 %v3521, %v3575
  %v3577 = vand.u32 %v2848, 4294901760
  %v3578 = vsub.f32 %v2848, %v3577
  %v3579 = vand.u32 %v3578, 4294901760
  %3580 = vmatmul.f32.gmra.mxu0 %v3579
  %v3581 = vpop.f32.mrf.mxu0
  %v3582 = vadd.f32 %v3526, %v3581
  %v3583 = vand.u32 %v2850, 4294901760
  %v3584 = vsub.f32 %v2850, %v3583
  %v3585 = vand.u32 %v3584, 4294901760
  %3586 = vmatmul.f32.gmra.mxu0 %v3585
  %v3587 = vpop.f32.mrf.mxu0
  %v3588 = vadd.f32 %v3531, %v3587
  %3589 = vdwg.mxu0
  %v3590 = vand.u32 %v105, 4294901760
  %v3591 = vsub.f32 %v105, %v3590
  %v3592 = vand.u32 %v3591, 4294901760
  %3593 = vmatpush.msra.mxu0 %v3592
  %v3594 = vand.u32 %v104, 4294901760
  %v3595 = vsub.f32 %v104, %v3594
  %v3596 = vand.u32 %v3595, 4294901760
  %3597 = vmatpush.msra.mxu0 %v3596
  %v3598 = vand.u32 %v103, 4294901760
  %v3599 = vsub.f32 %v103, %v3598
  %v3600 = vand.u32 %v3599, 4294901760
  %3601 = vmatpush.msra.mxu0 %v3600
  %v3602 = vand.u32 %v102, 4294901760
  %v3603 = vsub.f32 %v102, %v3602
  %v3604 = vand.u32 %v3603, 4294901760
  %3605 = vmatpush.msra.mxu0 %v3604
  %v3606 = vand.u32 %v101, 4294901760
  %v3607 = vsub.f32 %v101, %v3606
  %v3608 = vand.u32 %v3607, 4294901760
  %3609 = vmatpush.msra.mxu0 %v3608
  %v3610 = vand.u32 %v100, 4294901760
  %v3611 = vsub.f32 %v100, %v3610
  %v3612 = vand.u32 %v3611, 4294901760
  %3613 = vmatpush.msra.mxu0 %v3612
  %v3614 = vand.u32 %v99, 4294901760
  %v3615 = vsub.f32 %v99, %v3614
  %v3616 = vand.u32 %v3615, 4294901760
  %3617 = vmatpush.msra.mxu0 %v3616
  %v3618 = vand.u32 %v98, 4294901760
  %v3619 = vsub.f32 %v98, %v3618
  %v3620 = vand.u32 %v3619, 4294901760
  %3621 = vmatpush.msra.mxu0 %v3620
  %v3622 = vand.u32 %v97, 4294901760
  %v3623 = vsub.f32 %v97, %v3622
  %v3624 = vand.u32 %v3623, 4294901760
  %3625 = vmatpush.msra.mxu0 %v3624
  %v3626 = vand.u32 %v96, 4294901760
  %v3627 = vsub.f32 %v96, %v3626
  %v3628 = vand.u32 %v3627, 4294901760
  %3629 = vmatpush.msra.mxu0 %v3628
  %v3630 = vand.u32 %v95, 4294901760
  %v3631 = vsub.f32 %v95, %v3630
  %v3632 = vand.u32 %v3631, 4294901760
  %3633 = vmatpush.msra.mxu0 %v3632
  %v3634 = vand.u32 %v94, 4294901760
  %v3635 = vsub.f32 %v94, %v3634
  %v3636 = vand.u32 %v3635, 4294901760
  %3637 = vmatpush.msra.mxu0 %v3636
  %v3638 = vand.u32 %v93, 4294901760
  %v3639 = vsub.f32 %v93, %v3638
  %v3640 = vand.u32 %v3639, 4294901760
  %3641 = vmatpush.msra.mxu0 %v3640
  %v3642 = vand.u32 %v92, 4294901760
  %v3643 = vsub.f32 %v92, %v3642
  %v3644 = vand.u32 %v3643, 4294901760
  %3645 = vmatpush.msra.mxu0 %v3644
  %v3646 = vand.u32 %v91, 4294901760
  %v3647 = vsub.f32 %v91, %v3646
  %v3648 = vand.u32 %v3647, 4294901760
  %3649 = vmatpush.msra.mxu0 %v3648
  %v3650 = vand.u32 %v90, 4294901760
  %v3651 = vsub.f32 %v90, %v3650
  %v3652 = vand.u32 %v3651, 4294901760
  %3653 = vmatpush.msra.mxu0 %v3652
  %v3654 = vand.u32 %v2844, 4294901760
  %3655 = vmatmul.f32.gmra.mxu0 %v3654
  %v3656 = vpop.f32.mrf.mxu0
  %v3657 = vadd.f32 %v3570, %v3656
  %v3658 = vand.u32 %v2846, 4294901760
  %3659 = vmatmul.f32.gmra.mxu0 %v3658
  %v3660 = vpop.f32.mrf.mxu0
  %v3661 = vadd.f32 %v3576, %v3660
  %v3662 = vand.u32 %v2848, 4294901760
  %3663 = vmatmul.f32.gmra.mxu0 %v3662
  %v3664 = vpop.f32.mrf.mxu0
  %v3665 = vadd.f32 %v3582, %v3664
  %v3666 = vand.u32 %v2850, 4294901760
  %3667 = vmatmul.f32.gmra.mxu0 %v3666
  %v3668 = vpop.f32.mrf.mxu0
  %v3669 = vadd.f32 %v3588, %v3668
  %3670 = vdwg.mxu0
  %v3671 = vand.u32 %v105, 4294901760
  %3672 = vmatpush.msra.mxu0 %v3671
  %v3673 = vand.u32 %v104, 4294901760
  %3674 = vmatpush.msra.mxu0 %v3673
  %v3675 = vand.u32 %v103, 4294901760
  %3676 = vmatpush.msra.mxu0 %v3675
  %v3677 = vand.u32 %v102, 4294901760
  %3678 = vmatpush.msra.mxu0 %v3677
  %v3679 = vand.u32 %v101, 4294901760
  %3680 = vmatpush.msra.mxu0 %v3679
  %v3681 = vand.u32 %v100, 4294901760
  %3682 = vmatpush.msra.mxu0 %v3681
  %v3683 = vand.u32 %v99, 4294901760
  %3684 = vmatpush.msra.mxu0 %v3683
  %v3685 = vand.u32 %v98, 4294901760
  %3686 = vmatpush.msra.mxu0 %v3685
  %v3687 = vand.u32 %v97, 4294901760
  %3688 = vmatpush.msra.mxu0 %v3687
  %v3689 = vand.u32 %v96, 4294901760
  %3690 = vmatpush.msra.mxu0 %v3689
  %v3691 = vand.u32 %v95, 4294901760
  %3692 = vmatpush.msra.mxu0 %v3691
  %v3693 = vand.u32 %v94, 4294901760
  %3694 = vmatpush.msra.mxu0 %v3693
  %v3695 = vand.u32 %v93, 4294901760
  %3696 = vmatpush.msra.mxu0 %v3695
  %v3697 = vand.u32 %v92, 4294901760
  %3698 = vmatpush.msra.mxu0 %v3697
  %v3699 = vand.u32 %v91, 4294901760
  %3700 = vmatpush.msra.mxu0 %v3699
  %v3701 = vand.u32 %v90, 4294901760
  %3702 = vmatpush.msra.mxu0 %v3701
  %v3703 = vand.u32 %v2844, 4294901760
  %3704 = vmatmul.f32.gmra.mxu0 %v3703
  %v3705 = vpop.f32.mrf.mxu0
  %v3706 = vadd.f32 %v3657, %v3705
  %v3707 = vand.u32 %v2846, 4294901760
  %3708 = vmatmul.f32.gmra.mxu0 %v3707
  %v3709 = vpop.f32.mrf.mxu0
  %v3710 = vadd.f32 %v3661, %v3709
  %v3711 = vand.u32 %v2848, 4294901760
  %3712 = vmatmul.f32.gmra.mxu0 %v3711
  %v3713 = vpop.f32.mrf.mxu0
  %v3714 = vadd.f32 %v3665, %v3713
  %v3715 = vand.u32 %v2850, 4294901760
  %3716 = vmatmul.f32.gmra.mxu0 %v3715
  %v3717 = vpop.f32.mrf.mxu0
  %v3718 = vadd.f32 %v3669, %v3717
  %3719 = vdwg.mxu0
  %v3720 = vadd.f32 %v3706, %v26
  %v3721 = vadd.f32 %v3710, %v27
  %v3722 = vadd.f32 %v3714, %v28
  %v3723 = vadd.f32 %v3718, %v29
  %3724 = vst [vmem:[%s3] sm:$0xff] %v3720
  %3725 = vst [vmem:[%s3 + $0x8] sm:$0xff] %v3721
  %3726 = vst [vmem:[%s3 + $0x10] sm:$0xff] %v3722
  %3727 = vst [vmem:[%s3 + $0x18] sm:$0xff] %v3723
  // Predicated region
  $region14: #{_lambda_.1} parent=0 // pred_check
    _
  $region15: #{_lambda_.1} parent=0 // pred_check_branch
    %3729 = sbr.rel (0) target = $region17
  $region16: #{_lambda_.1} parent=0 // pred_region
    _
  $region17: #{_lambda_.1} parent=0 // pred_fallthru
    _
  // Predicated region
  $region18: #{_lambda_.1} parent=0 // pred_check
    _
  $region19: #{_lambda_.1} parent=0 // pred_check_branch
    %3731 = sbr.rel (0) target = $region21
  $region20: #{_lambda_.1} parent=0 // pred_region
    _
  $region21: #{_lambda_.1} parent=0 // pred_fallthru
    _

</llo_original>
